<compile_context>
chip_gen: v6e
topology: v6e:2x2x1
jax: 0.10.0
libtpu: 0.0.40
codegen_flags: <defaults>
</compile_context>

<pallas_src>
import jax
import jax.numpy as jnp
from jax.experimental import pallas as pl
from jax.experimental.pallas import tpu as pltpu

LANE = 128


def _tanh_sigmoid(x):
    # sigmoid(x) == 0.5 * tanh(0.5 * x) + 0.5 : one EUP op per gate instead of
    # exp + divide; the extra mul/adds ride the 4-wide VALU for free.
    return 0.5 * jnp.tanh(0.5 * x) + 0.5


# ---------------------------------------------------------------------------
# Fused kernel: per-time-block input projection + serial recurrence.
# ---------------------------------------------------------------------------
def _make_slstm_kernel(unroll):
    def kernel(x_ref, wi_ref, wh_ref, b_ref, h0_ref, c0_ref,
               out_ref, cN_ref, g4_ref, h_sc, c_sc):
        t = pl.program_id(1)                 # time-block index (serial axis)
        n_t = pl.num_programs(1)
        t_blk = x_ref.shape[0]
        Hp = h_sc.shape[1]

        # Initialize persistent recurrent state on the first time block. Time
        # is the fastest grid axis, so this re-fires for every batch block.
        @pl.when(t == 0)
        def _():
            h_sc[...] = h0_ref[...]
            c_sc[...] = c0_ref[...]

        bias = b_ref[...]                    # (1, 4Hp) f32, hoisted
        last_block = t == n_t - 1

        def step(s, carry):
            h, c = carry
            # Fused input projection (bf16 MXU operands, f32 accumulate):
            # no (T*B, 4H) f32 intermediate ever touches HBM.
            xg = jnp.dot(x_ref[s], wi_ref[...],
                         preferred_element_type=jnp.float32) + bias
            g = xg + jnp.dot(h.astype(jnp.bfloat16), wh_ref[...],
                             preferred_element_type=jnp.float32)
            i_g = _tanh_sigmoid(g[:, 0:Hp])
            f_g = _tanh_sigmoid(g[:, Hp:2 * Hp])
            c_g = jnp.tanh(g[:, 2 * Hp:3 * Hp])
            o_g = _tanh_sigmoid(g[:, 3 * Hp:4 * Hp])
            c_new = f_g * c + i_g * c_g
            h_new = o_g * jnp.tanh(c_new)
            out_ref[s] = h_new.astype(out_ref.dtype)

            # Last-step gates written exactly once, in-step: nothing of size
            # (b, 4Hp) is carried across the unrolled loop, and the
            # transcendentals are not recomputed. Hp is a multiple of 128 so
            # every slice store below is lane-dense.
            @pl.when(jnp.logical_and(last_block, s == t_blk - 1))
            def _():
                g4_ref[:, 0:Hp] = i_g
                g4_ref[:, Hp:2 * Hp] = f_g
                g4_ref[:, 2 * Hp:3 * Hp] = c_g
                g4_ref[:, 3 * Hp:4 * Hp] = o_g

            return (h_new, c_new)

        h, c = jax.lax.fori_loop(0, t_blk, step, (h_sc[...], c_sc[...]),
                                 unroll=unroll)

        # Persist state for the next time block of this batch block.
        h_sc[...] = h
        c_sc[...] = c

        @pl.when(last_block)
        def _():
            cN_ref[...] = c

    return kernel


# ---------------------------------------------------------------------------
# VMEM sizing helpers.
# ---------------------------------------------------------------------------
def _vmem_estimate(t_blk, b_blk, in_size, Hp):
    G = 4 * Hp
    db = 2  # BlockSpec blocks are double-buffered by default
    per_iter = (t_blk * b_blk * in_size * 2      # x block (bf16)
                + t_blk * b_blk * Hp * 4         # hy output block (f32)
                + in_size * G * 2                # Wi (bf16)
                + Hp * G * 2                     # Wh (bf16)
                + G * 4                          # bias (f32)
                + 2 * b_blk * Hp * 4             # h0, c0 blocks
                + b_blk * Hp * 4                 # c_T output block
                + b_blk * G * 4)                 # last-gates output block
    scratch = 2 * b_blk * Hp * 4                 # persistent h/c state
    return db * per_iter + scratch


def _pick_blocks(T, B, in_size, Hp, vmem_budget):
    # Batch block: split in two (multiple of 8) when possible so the
    # "parallel" batch grid axis has >= 2 blocks to shard across v7x's two
    # TensorCores; fall back to the full batch otherwise.
    b_blk = B // 2 if (B >= 16 and B % 16 == 0) else B
    while (_vmem_estimate(1, b_blk, in_size, Hp) > vmem_budget
           and b_blk % 16 == 0):
        b_blk //= 2
    # Time block: largest divisor of T (capped at 32) whose working set fits.
    t_blk = 1
    for cand in range(2, min(T, 32) + 1):
        if T % cand == 0 and _vmem_estimate(cand, b_blk, in_size, Hp) <= vmem_budget:
            t_blk = cand
    return t_blk, b_blk


# ---------------------------------------------------------------------------
# Wrapper
# ---------------------------------------------------------------------------
def slstm_forward(x, h0, c0, wi, wh, bi, bh, *, batch_first=True,
                  t_blk=None, b_blk=None, unroll=None,
                  vmem_budget_bytes=40 << 20):
    """x: (B, T, I) if batch_first else (T, B, I). h0, c0: (B, H).
    wi: (I, 4H), wh: (H, 4H), bi/bh: (4H,), gate order (i, f, c, o).

    Returns (output, (h_T, c_T), gates) with the PyTorch module's semantics:
    output is the time-concatenated (T*B, H) hy's, transposed to (H, T*B) only
    when batch_first=True (exactly as the module does)."""
    if batch_first:
        x_tm = jnp.transpose(x, (1, 0, 2))   # module's input.transpose(0, 1)
    else:
        x_tm = x
    T, B, in_size = x_tm.shape
    H = h0.shape[1]
    Hp = max(LANE, ((H + LANE - 1) // LANE) * LANE)   # lane-dense gate width
    Gp = 4 * Hp

    # bf16 matmul operands, f32 everything else.
    x_bf = x_tm.astype(jnp.bfloat16)

    # Pad the per-gate hidden axis H -> Hp with zeros. Zero pads in Wi/Wh/bias
    # mean padded lanes stay exactly zero through the whole recurrence, so the
    # real lanes are unchanged; pads are sliced off below.
    def pad_gates(w):                         # (..., 4H) -> (..., 4Hp)
        parts = []
        for g in range(4):
            blk = w[..., g * H:(g + 1) * H]
            widths = [(0, 0)] * (w.ndim - 1) + [(0, Hp - H)]
            parts.append(jnp.pad(blk, widths))
        return jnp.concatenate(parts, axis=-1)

    wi_p = pad_gates(wi).astype(jnp.bfloat16)                          # (I, 4Hp)
    wh_p = jnp.pad(pad_gates(wh), ((0, Hp - H), (0, 0))).astype(jnp.bfloat16)
    b_p = pad_gates((bi + bh).reshape(1, 4 * H)).astype(jnp.float32)   # (1, 4Hp)
    h0_p = jnp.pad(h0.astype(jnp.float32), ((0, 0), (0, Hp - H)))
    c0_p = jnp.pad(c0.astype(jnp.float32), ((0, 0), (0, Hp - H)))

    auto_t, auto_b = _pick_blocks(T, B, in_size, Hp, vmem_budget_bytes)
    t_blk = auto_t if t_blk is None else t_blk
    b_blk = auto_b if b_blk is None else b_blk
    assert T % t_blk == 0, "T must be divisible by t_blk"
    # (8,128) rule: if b_blk < B it must be a multiple of 8 and divide B.
    assert b_blk == B or (b_blk % 8 == 0 and B % b_blk == 0)
    nb, nt = B // b_blk, T // t_blk
    if unroll is None:
        unroll = True if t_blk <= 8 else 4   # moderate unroll at larger tiles

    est = _vmem_estimate(t_blk, b_blk, in_size, Hp)
    vmem_limit = int(min(112 << 20, max(32 << 20, est + (16 << 20))))

    out_shapes = (
        jax.ShapeDtypeStruct((T, B, Hp), jnp.float32),   # per-step hy (padded)
        jax.ShapeDtypeStruct((B, Hp), jnp.float32),      # c_T (padded)
        jax.ShapeDtypeStruct((B, Gp), jnp.float32),      # last-step gates
    )
    grid_spec = pltpu.PrefetchScalarGridSpec(
        num_scalar_prefetch=0,
        grid=(nb, nt),
        in_specs=[
            pl.BlockSpec((t_blk, b_blk, in_size), lambda b, t: (t, b, 0)),  # x
            pl.BlockSpec((in_size, Gp), lambda b, t: (0, 0)),               # Wi
            pl.BlockSpec((Hp, Gp), lambda b, t: (0, 0)),                    # Wh
            pl.BlockSpec((1, Gp), lambda b, t: (0, 0)),                     # bias
            pl.BlockSpec((b_blk, Hp), lambda b, t: (b, 0)),                 # h0
            pl.BlockSpec((b_blk, Hp), lambda b, t: (b, 0)),                 # c0
        ],
        out_specs=[
            pl.BlockSpec((t_blk, b_blk, Hp), lambda b, t: (t, b, 0)),       # hy
            pl.BlockSpec((b_blk, Hp), lambda b, t: (b, 0)),                 # c_T
            pl.BlockSpec((b_blk, Gp), lambda b, t: (b, 0)),                 # gates
        ],
        scratch_shapes=[
            pltpu.VMEM((b_blk, Hp), jnp.float32),   # persistent h state
            pltpu.VMEM((b_blk, Hp), jnp.float32),   # persistent c state
        ],
    )
    out_seq, cN_p, g4 = pl.pallas_call(
        _make_slstm_kernel(unroll),
        out_shape=out_shapes,
        grid_spec=grid_spec,
        compiler_params=pltpu.CompilerParams(
            dimension_semantics=("parallel", "arbitrary"),
            vmem_limit_bytes=vmem_limit),
    )(x_bf, wi_p, wh_p, b_p, h0_p, c0_p)

    hN = out_seq[T - 1, :, :H]
    cN = cN_p[:, :H]

    # torch.cat(output, 0): (T*B, H); transpose(0, 1) only when batch_first.
    output = out_seq[:, :, :H].reshape(T * B, H)
    if batch_first:
        output = output.T                    # (H, T*B) — matches PyTorch
    gate_names = ('input_gate', 'forget_gate', 'cell_gate', 'output_gate')
    gates = {name: g4[:, k * Hp:k * Hp + H] for k, name in enumerate(gate_names)}
    return output, (hN, cN), gates


# ---------------------------------------------------------------------------
# Pure-JAX reference mirroring the PyTorch forward (optionally with the same
# bf16 matmul operands / f32 accumulation / sigmoid formulation as the kernel).
# ---------------------------------------------------------------------------
def slstm_reference(x, h0, c0, wi, wh, bi, bh, *, batch_first=True,
                    matmul_dtype=jnp.float32, sigmoid_fn=jax.nn.sigmoid):
    if batch_first:
        x = jnp.transpose(x, (1, 0, 2))
    T, B, _ = x.shape
    H = h0.shape[1]
    wi_c = wi.astype(matmul_dtype)
    wh_c = wh.astype(matmul_dtype)
    b = (bi + bh).reshape(1, 4 * H)
    hx = h0.astype(jnp.float32)
    cx = c0.astype(jnp.float32)
    outs = []
    gates = {}
    for t in range(T):
        xg = jnp.dot(x[t].astype(matmul_dtype), wi_c,
                     preferred_element_type=jnp.float32) + b
        g = xg + jnp.dot(hx.astype(matmul_dtype), wh_c,
                         preferred_element_type=jnp.float32)
        i_g = sigmoid_fn(g[:, 0:H])
        f_g = sigmoid_fn(g[:, H:2 * H])
        c_g = jnp.tanh(g[:, 2 * H:3 * H])
        o_g = sigmoid_fn(g[:, 3 * H:4 * H])
        cx = f_g * cx + i_g * c_g
        hx = o_g * jnp.tanh(cx)
        outs.append(hx)
        gates = {'input_gate': i_g, 'forget_gate': f_g,
                 'cell_gate': c_g, 'output_gate': o_g}
    out = jnp.concatenate(outs, axis=0)
    if batch_first:
        out = out.T
    return out, (hx, cx), gates


def init_params(key, input_size, hidden_size):
    """Deterministic init matching nn.Linear shapes (weight (out,in), bias (out,))."""
    keys = jax.random.split(key, 16)
    bnd_i = 1.0 / (input_size ** 0.5)
    bnd_h = 1.0 / (hidden_size ** 0.5)

    def lin(kw, kb, fan_in, bound):
        w = jax.random.uniform(kw, (hidden_size, fan_in), jnp.float32, -bound, bound)
        b = jax.random.uniform(kb, (hidden_size,), jnp.float32, -bound, bound)
        return w, b

    Wii, bii = lin(keys[0], keys[1], input_size, bnd_i)
    Wif, bif = lin(keys[2], keys[3], input_size, bnd_i)
    Wic, bic = lin(keys[4], keys[5], input_size, bnd_i)
    Wio, bio = lin(keys[6], keys[7], input_size, bnd_i)
    Whi, bhi = lin(keys[8], keys[9], hidden_size, bnd_h)
    Whf, bhf = lin(keys[10], keys[11], hidden_size, bnd_h)
    Whc, bhc = lin(keys[12], keys[13], hidden_size, bnd_h)
    Who, bho = lin(keys[14], keys[15], hidden_size, bnd_h)

    # Pre-transpose & concat for the kernel: x @ Wi, h @ Wh, gate order i,f,c,o.
    wi = jnp.concatenate([Wii, Wif, Wic, Wio], axis=0).T   # (I, 4H)
    wh = jnp.concatenate([Whi, Whf, Whc, Who], axis=0).T   # (H, 4H)
    bi = jnp.concatenate([bii, bif, bic, bio], axis=0)     # (4H,)
    bh = jnp.concatenate([bhi, bhf, bhc, bho], axis=0)     # (4H,)
    return wi, wh, bi, bh


if __name__ == "__main__":
    # Small shapes consistent with the module's forward.
    B, T, I, H = 2, 8, 16, 32

    key = jax.random.PRNGKey(0)
    k_x, k_h, k_c, k_p = jax.random.split(key, 4)
    x = jax.random.normal(k_x, (B, T, I), jnp.float32)      # batch_first input
    h0 = jax.random.normal(k_h, (B, H), jnp.float32)
    c0 = jax.random.normal(k_c, (B, H), jnp.float32)
    wi, wh, bi, bh = init_params(k_p, I, H)

    out, (hN, cN), gates = slstm_forward(x, h0, c0, wi, wh, bi, bh)
    jax.block_until_ready((out, hN, cN, gates))

    # Strict check vs. a reference that mirrors the kernel's bf16 matmul
    # operands / f32 accumulation / tanh-form sigmoid exactly.
    ro, (rh, rc), rg = slstm_reference(x, h0, c0, wi, wh, bi, bh,
                                       matmul_dtype=jnp.bfloat16,
                                       sigmoid_fn=_tanh_sigmoid)
    assert out.shape == (H, T * B)
    assert jnp.allclose(out, ro, atol=2e-4)
    assert jnp.allclose(hN, rh, atol=2e-4)
    assert jnp.allclose(cN, rc, atol=2e-4)
    for k in rg:
        assert jnp.allclose(gates[k], rg[k], atol=2e-4)

    # Loose semantic check vs. the all-f32 jax.nn.sigmoid reference of the
    # PyTorch module (bf16 operand rounding only; error can grow with T/H).
    fo, (fh, fc), _ = slstm_reference(x, h0, c0, wi, wh, bi, bh,
                                      matmul_dtype=jnp.float32)
    assert jnp.allclose(out, fo, atol=5e-2, rtol=5e-2)
    assert jnp.allclose(hN, fh, atol=5e-2, rtol=5e-2)
    assert jnp.allclose(cN, fc, atol=5e-2, rtol=5e-2)

    print("KERNEL_OK")
</pallas_src>

<mosaic_0001>
module attributes {stable_mosaic.version = 11 : i64} {
  func.func @kernel(%arg0: i32, %arg1: i32, %arg2: memref<8x2x16xbf16, #tpu.memory_space<vmem>>, %arg3: memref<16x512xbf16, #tpu.memory_space<vmem>>, %arg4: memref<128x512xbf16, #tpu.memory_space<vmem>>, %arg5: memref<1x512xf32, #tpu.memory_space<vmem>>, %arg6: memref<2x128xf32, #tpu.memory_space<vmem>>, %arg7: memref<2x128xf32, #tpu.memory_space<vmem>>, %arg8: memref<8x2x128xf32, #tpu.memory_space<vmem>>, %arg9: memref<2x128xf32, #tpu.memory_space<vmem>>, %arg10: memref<2x512xf32, #tpu.memory_space<vmem>>, %arg11: memref<2x128xf32, #tpu.memory_space<vmem>>, %arg12: memref<2x128xf32, #tpu.memory_space<vmem>>) attributes {dimension_semantics = [#tpu.dimension_semantics<parallel>, #tpu.dimension_semantics<arbitrary>], iteration_bounds = array<i64: 1, 1>, scalar_prefetch = 0 : i64, scratch_operands = 2 : i64, tpu.core_type = #tpu.core_type<tc>, window_params = [{transform_indices = @transform_0, window_bounds = array<i64: 8, 2, 16>}, {pipeline_mode = #tpu.pipeline_mode<synchronous>, transform_indices = @transform_1, window_bounds = array<i64: 16, 512>}, {pipeline_mode = #tpu.pipeline_mode<synchronous>, transform_indices = @transform_2, window_bounds = array<i64: 128, 512>}, {pipeline_mode = #tpu.pipeline_mode<synchronous>, transform_indices = @transform_3, window_bounds = array<i64: 1, 512>}, {transform_indices = @transform_4, window_bounds = array<i64: 2, 128>}, {transform_indices = @transform_5, window_bounds = array<i64: 2, 128>}, {transform_indices = @transform_6, window_bounds = array<i64: 8, 2, 128>}, {transform_indices = @transform_7, window_bounds = array<i64: 2, 128>}, {transform_indices = @transform_8, window_bounds = array<i64: 2, 512>}]} {
    %c0_i32 = arith.constant 0 : i32
    %0 = arith.cmpi eq, %arg1, %c0_i32 : i32
    %1 = arith.extui %0 : i1 to i32
    %c0_i32_0 = arith.constant 0 : i32
    %2 = arith.cmpi ne, %1, %c0_i32_0 : i32
    scf.if %2 {
      %c0_180 = arith.constant 0 : index
      %c0_181 = arith.constant 0 : index
      %411 = vector.load %arg6[%c0_180, %c0_181] : memref<2x128xf32, #tpu.memory_space<vmem>>, vector<2x128xf32>
      %c0_182 = arith.constant 0 : index
      %c0_183 = arith.constant 0 : index
      %412 = vector.load %arg11[%c0_182, %c0_183] : memref<2x128xf32, #tpu.memory_space<vmem>>, vector<2x128xf32>
      tpu.vector_store %arg11[%c0_182, %c0_183], %411 {strides = array<i32>} : memref<2x128xf32, #tpu.memory_space<vmem>>, vector<2x128xf32>,
      %c0_184 = arith.constant 0 : index
      %c0_185 = arith.constant 0 : index
      %413 = vector.load %arg7[%c0_184, %c0_185] : memref<2x128xf32, #tpu.memory_space<vmem>>, vector<2x128xf32>
      %c0_186 = arith.constant 0 : index
      %c0_187 = arith.constant 0 : index
      %414 = vector.load %arg12[%c0_186, %c0_187] : memref<2x128xf32, #tpu.memory_space<vmem>>, vector<2x128xf32>
      tpu.vector_store %arg12[%c0_186, %c0_187], %413 {strides = array<i32>} : memref<2x128xf32, #tpu.memory_space<vmem>>, vector<2x128xf32>,
    } else {
    }
    %c0 = arith.constant 0 : index
    %c0_1 = arith.constant 0 : index
    %3 = vector.load %arg5[%c0, %c0_1] : memref<1x512xf32, #tpu.memory_space<vmem>>, vector<1x512xf32>
    %c0_i32_2 = arith.constant 0 : i32
    %4 = arith.cmpi eq, %arg1, %c0_i32_2 : i32
    %c0_3 = arith.constant 0 : index
    %c0_4 = arith.constant 0 : index
    %5 = vector.load %arg11[%c0_3, %c0_4] : memref<2x128xf32, #tpu.memory_space<vmem>>, vector<2x128xf32>
    %c0_5 = arith.constant 0 : index
    %c0_6 = arith.constant 0 : index
    %6 = vector.load %arg12[%c0_5, %c0_6] : memref<2x128xf32, #tpu.memory_space<vmem>>, vector<2x128xf32>
    %c0_i32_7 = arith.constant 0 : i32
    %7 = arith.index_cast %c0_i32_7 : i32 to index
    %c0_8 = arith.constant 0 : index
    %c0_9 = arith.constant 0 : index
    %8 = vector.load %arg2[%7, %c0_8, %c0_9] : memref<8x2x16xbf16, #tpu.memory_space<vmem>>, vector<1x2x16xbf16>
    %9 = vector.shape_cast %8 : vector<1x2x16xbf16> to vector<2x16xbf16>
    %c0_10 = arith.constant 0 : index
    %c0_11 = arith.constant 0 : index
    %10 = vector.load %arg3[%c0_10, %c0_11] : memref<16x512xbf16, #tpu.memory_space<vmem>>, vector<16x512xbf16>
    %cst = arith.constant dense<0.000000e+00> : vector<2x512xf32>
    %11 = tpu.matmul %9, %10, %cst {dimension_numbers = #tpu.dot_dimension_numbers<[1], [0], [0], [1], [0, 0, 1, 1], [], []>} : vector<2x16xbf16>, vector<16x512xbf16>, vector<2x512xf32> -> vector<2x512xf32>
    %12 = vector.broadcast %3 : vector<1x512xf32> to vector<2x512xf32>
    %13 = arith.addf %11, %12 : vector<2x512xf32>
    %14 = arith.truncf %5 : vector<2x128xf32> to vector<2x128xbf16>
    %c0_12 = arith.constant 0 : index
    %c0_13 = arith.constant 0 : index
    %15 = vector.load %arg4[%c0_12, %c0_13] : memref<128x512xbf16, #tpu.memory_space<vmem>>, vector<128x512xbf16>
    %cst_14 = arith.constant dense<0.000000e+00> : vector<2x512xf32>
    %16 = tpu.matmul %14, %15, %cst_14 {dimension_numbers = #tpu.dot_dimension_numbers<[1], [0], [0], [1], [0, 0, 1, 1], [], []>} : vector<2x128xbf16>, vector<128x512xbf16>, vector<2x512xf32> -> vector<2x512xf32>
    %17 = arith.addf %13, %16 : vector<2x512xf32>
    %18 = vector.extract_strided_slice %17 {offsets = [0, 0], sizes = [2, 128], strides = [1, 1]} : vector<2x512xf32> to vector<2x128xf32>
    %cst_15 = arith.constant 5.000000e-01 : f32
    %19 = vector.broadcast %cst_15 : f32 to vector<2x128xf32>
    %20 = arith.mulf %19, %18 : vector<2x128xf32>
    %21 = math.tanh %20 : vector<2x128xf32>
    %cst_16 = arith.constant 5.000000e-01 : f32
    %22 = vector.broadcast %cst_16 : f32 to vector<2x128xf32>
    %23 = arith.mulf %22, %21 : vector<2x128xf32>
    %cst_17 = arith.constant 5.000000e-01 : f32
    %24 = vector.broadcast %cst_17 : f32 to vector<2x128xf32>
    %25 = arith.addf %23, %24 : vector<2x128xf32>
    %26 = vector.extract_strided_slice %17 {offsets = [0, 128], sizes = [2, 128], strides = [1, 1]} : vector<2x512xf32> to vector<2x128xf32>
    %cst_18 = arith.constant 5.000000e-01 : f32
    %27 = vector.broadcast %cst_18 : f32 to vector<2x128xf32>
    %28 = arith.mulf %27, %26 : vector<2x128xf32>
    %29 = math.tanh %28 : vector<2x128xf32>
    %cst_19 = arith.constant 5.000000e-01 : f32
    %30 = vector.broadcast %cst_19 : f32 to vector<2x128xf32>
    %31 = arith.mulf %30, %29 : vector<2x128xf32>
    %cst_20 = arith.constant 5.000000e-01 : f32
    %32 = vector.broadcast %cst_20 : f32 to vector<2x128xf32>
    %33 = arith.addf %31, %32 : vector<2x128xf32>
    %34 = vector.extract_strided_slice %17 {offsets = [0, 256], sizes = [2, 128], strides = [1, 1]} : vector<2x512xf32> to vector<2x128xf32>
    %35 = math.tanh %34 : vector<2x128xf32>
    %36 = vector.extract_strided_slice %17 {offsets = [0, 384], sizes = [2, 128], strides = [1, 1]} : vector<2x512xf32> to vector<2x128xf32>
    %cst_21 = arith.constant 5.000000e-01 : f32
    %37 = vector.broadcast %cst_21 : f32 to vector<2x128xf32>
    %38 = arith.mulf %37, %36 : vector<2x128xf32>
    %39 = math.tanh %38 : vector<2x128xf32>
    %cst_22 = arith.constant 5.000000e-01 : f32
    %40 = vector.broadcast %cst_22 : f32 to vector<2x128xf32>
    %41 = arith.mulf %40, %39 : vector<2x128xf32>
    %cst_23 = arith.constant 5.000000e-01 : f32
    %42 = vector.broadcast %cst_23 : f32 to vector<2x128xf32>
    %43 = arith.addf %41, %42 : vector<2x128xf32>
    %44 = arith.mulf %33, %6 : vector<2x128xf32>
    %45 = arith.mulf %25, %35 : vector<2x128xf32>
    %46 = arith.addf %44, %45 : vector<2x128xf32>
    %47 = math.tanh %46 : vector<2x128xf32>
    %48 = arith.mulf %43, %47 : vector<2x128xf32>
    %49 = arith.index_cast %c0_i32_7 : i32 to index
    %c0_24 = arith.constant 0 : index
    %c0_25 = arith.constant 0 : index
    %50 = vector.load %arg8[%49, %c0_24, %c0_25] : memref<8x2x128xf32, #tpu.memory_space<vmem>>, vector<1x2x128xf32>
    %51 = vector.shape_cast %50 : vector<1x2x128xf32> to vector<2x128xf32>
    %52 = vector.shape_cast %48 : vector<2x128xf32> to vector<1x2x128xf32>
    tpu.vector_store %arg8[%49, %c0_24, %c0_25], %52 {strides = array<i32>} : memref<8x2x128xf32, #tpu.memory_space<vmem>>, vector<1x2x128xf32>,
    %c7_i32 = arith.constant 7 : i32
    %53 = arith.cmpi eq, %c0_i32_7, %c7_i32 : i32
    %54 = arith.andi %4, %53 : i1
    %55 = arith.extui %54 : i1 to i32
    %c0_i32_26 = arith.constant 0 : i32
    %56 = arith.cmpi ne, %55, %c0_i32_26 : i32
    scf.if %56 {
      %c0_180 = arith.constant 0 : index
      %c0_181 = arith.constant 0 : index
      %411 = vector.load %arg10[%c0_180, %c0_181] : memref<2x512xf32, #tpu.memory_space<vmem>>, vector<2x128xf32>
      tpu.vector_store %arg10[%c0_180, %c0_181], %25 {strides = array<i32>} : memref<2x512xf32, #tpu.memory_space<vmem>>, vector<2x128xf32>,
      %c0_182 = arith.constant 0 : index
      %c128 = arith.constant 128 : index
      %412 = vector.load %arg10[%c0_182, %c128] : memref<2x512xf32, #tpu.memory_space<vmem>>, vector<2x128xf32>
      tpu.vector_store %arg10[%c0_182, %c128], %33 {strides = array<i32>} : memref<2x512xf32, #tpu.memory_space<vmem>>, vector<2x128xf32>,
      %c0_183 = arith.constant 0 : index
      %c256 = arith.constant 256 : index
      %413 = vector.load %arg10[%c0_183, %c256] : memref<2x512xf32, #tpu.memory_space<vmem>>, vector<2x128xf32>
      tpu.vector_store %arg10[%c0_183, %c256], %35 {strides = array<i32>} : memref<2x512xf32, #tpu.memory_space<vmem>>, vector<2x128xf32>,
      %c0_184 = arith.constant 0 : index
      %c384 = arith.constant 384 : index
      %414 = vector.load %arg10[%c0_184, %c384] : memref<2x512xf32, #tpu.memory_space<vmem>>, vector<2x128xf32>
      tpu.vector_store %arg10[%c0_184, %c384], %43 {strides = array<i32>} : memref<2x512xf32, #tpu.memory_space<vmem>>, vector<2x128xf32>,
    } else {
    }
    %c1_i32 = arith.constant 1 : i32
    %57 = arith.index_cast %c1_i32 : i32 to index
    %c0_27 = arith.constant 0 : index
    %c0_28 = arith.constant 0 : index
    %58 = vector.load %arg2[%57, %c0_27, %c0_28] : memref<8x2x16xbf16, #tpu.memory_space<vmem>>, vector<1x2x16xbf16>
    %59 = vector.shape_cast %58 : vector<1x2x16xbf16> to vector<2x16xbf16>
    %c0_29 = arith.constant 0 : index
    %c0_30 = arith.constant 0 : index
    %60 = vector.load %arg3[%c0_29, %c0_30] : memref<16x512xbf16, #tpu.memory_space<vmem>>, vector<16x512xbf16>
    %cst_31 = arith.constant dense<0.000000e+00> : vector<2x512xf32>
    %61 = tpu.matmul %59, %60, %cst_31 {dimension_numbers = #tpu.dot_dimension_numbers<[1], [0], [0], [1], [0, 0, 1, 1], [], []>} : vector<2x16xbf16>, vector<16x512xbf16>, vector<2x512xf32> -> vector<2x512xf32>
    %62 = vector.broadcast %3 : vector<1x512xf32> to vector<2x512xf32>
    %63 = arith.addf %61, %62 : vector<2x512xf32>
    %64 = arith.truncf %48 : vector<2x128xf32> to vector<2x128xbf16>
    %c0_32 = arith.constant 0 : index
    %c0_33 = arith.constant 0 : index
    %65 = vector.load %arg4[%c0_32, %c0_33] : memref<128x512xbf16, #tpu.memory_space<vmem>>, vector<128x512xbf16>
    %cst_34 = arith.constant dense<0.000000e+00> : vector<2x512xf32>
    %66 = tpu.matmul %64, %65, %cst_34 {dimension_numbers = #tpu.dot_dimension_numbers<[1], [0], [0], [1], [0, 0, 1, 1], [], []>} : vector<2x128xbf16>, vector<128x512xbf16>, vector<2x512xf32> -> vector<2x512xf32>
    %67 = arith.addf %63, %66 : vector<2x512xf32>
    %68 = vector.extract_strided_slice %67 {offsets = [0, 0], sizes = [2, 128], strides = [1, 1]} : vector<2x512xf32> to vector<2x128xf32>
    %cst_35 = arith.constant 5.000000e-01 : f32
    %69 = vector.broadcast %cst_35 : f32 to vector<2x128xf32>
    %70 = arith.mulf %69, %68 : vector<2x128xf32>
    %71 = math.tanh %70 : vector<2x128xf32>
    %cst_36 = arith.constant 5.000000e-01 : f32
    %72 = vector.broadcast %cst_36 : f32 to vector<2x128xf32>
    %73 = arith.mulf %72, %71 : vector<2x128xf32>
    %cst_37 = arith.constant 5.000000e-01 : f32
    %74 = vector.broadcast %cst_37 : f32 to vector<2x128xf32>
    %75 = arith.addf %73, %74 : vector<2x128xf32>
    %76 = vector.extract_strided_slice %67 {offsets = [0, 128], sizes = [2, 128], strides = [1, 1]} : vector<2x512xf32> to vector<2x128xf32>
    %cst_38 = arith.constant 5.000000e-01 : f32
    %77 = vector.broadcast %cst_38 : f32 to vector<2x128xf32>
    %78 = arith.mulf %77, %76 : vector<2x128xf32>
    %79 = math.tanh %78 : vector<2x128xf32>
    %cst_39 = arith.constant 5.000000e-01 : f32
    %80 = vector.broadcast %cst_39 : f32 to vector<2x128xf32>
    %81 = arith.mulf %80, %79 : vector<2x128xf32>
    %cst_40 = arith.constant 5.000000e-01 : f32
    %82 = vector.broadcast %cst_40 : f32 to vector<2x128xf32>
    %83 = arith.addf %81, %82 : vector<2x128xf32>
    %84 = vector.extract_strided_slice %67 {offsets = [0, 256], sizes = [2, 128], strides = [1, 1]} : vector<2x512xf32> to vector<2x128xf32>
    %85 = math.tanh %84 : vector<2x128xf32>
    %86 = vector.extract_strided_slice %67 {offsets = [0, 384], sizes = [2, 128], strides = [1, 1]} : vector<2x512xf32> to vector<2x128xf32>
    %cst_41 = arith.constant 5.000000e-01 : f32
    %87 = vector.broadcast %cst_41 : f32 to vector<2x128xf32>
    %88 = arith.mulf %87, %86 : vector<2x128xf32>
    %89 = math.tanh %88 : vector<2x128xf32>
    %cst_42 = arith.constant 5.000000e-01 : f32
    %90 = vector.broadcast %cst_42 : f32 to vector<2x128xf32>
    %91 = arith.mulf %90, %89 : vector<2x128xf32>
    %cst_43 = arith.constant 5.000000e-01 : f32
    %92 = vector.broadcast %cst_43 : f32 to vector<2x128xf32>
    %93 = arith.addf %91, %92 : vector<2x128xf32>
    %94 = arith.mulf %83, %46 : vector<2x128xf32>
    %95 = arith.mulf %75, %85 : vector<2x128xf32>
    %96 = arith.addf %94, %95 : vector<2x128xf32>
    %97 = math.tanh %96 : vector<2x128xf32>
    %98 = arith.mulf %93, %97 : vector<2x128xf32>
    %99 = arith.index_cast %c1_i32 : i32 to index
    %c0_44 = arith.constant 0 : index
    %c0_45 = arith.constant 0 : index
    %100 = vector.load %arg8[%99, %c0_44, %c0_45] : memref<8x2x128xf32, #tpu.memory_space<vmem>>, vector<1x2x128xf32>
    %101 = vector.shape_cast %100 : vector<1x2x128xf32> to vector<2x128xf32>
    %102 = vector.shape_cast %98 : vector<2x128xf32> to vector<1x2x128xf32>
    tpu.vector_store %arg8[%99, %c0_44, %c0_45], %102 {strides = array<i32>} : memref<8x2x128xf32, #tpu.memory_space<vmem>>, vector<1x2x128xf32>,
    %c7_i32_46 = arith.constant 7 : i32
    %103 = arith.cmpi eq, %c1_i32, %c7_i32_46 : i32
    %104 = arith.andi %4, %103 : i1
    %105 = arith.extui %104 : i1 to i32
    %c0_i32_47 = arith.constant 0 : i32
    %106 = arith.cmpi ne, %105, %c0_i32_47 : i32
    scf.if %106 {
      %c0_180 = arith.constant 0 : index
      %c0_181 = arith.constant 0 : index
      %411 = vector.load %arg10[%c0_180, %c0_181] : memref<2x512xf32, #tpu.memory_space<vmem>>, vector<2x128xf32>
      tpu.vector_store %arg10[%c0_180, %c0_181], %75 {strides = array<i32>} : memref<2x512xf32, #tpu.memory_space<vmem>>, vector<2x128xf32>,
      %c0_182 = arith.constant 0 : index
      %c128 = arith.constant 128 : index
      %412 = vector.load %arg10[%c0_182, %c128] : memref<2x512xf32, #tpu.memory_space<vmem>>, vector<2x128xf32>
      tpu.vector_store %arg10[%c0_182, %c128], %83 {strides = array<i32>} : memref<2x512xf32, #tpu.memory_space<vmem>>, vector<2x128xf32>,
      %c0_183 = arith.constant 0 : index
      %c256 = arith.constant 256 : index
      %413 = vector.load %arg10[%c0_183, %c256] : memref<2x512xf32, #tpu.memory_space<vmem>>, vector<2x128xf32>
      tpu.vector_store %arg10[%c0_183, %c256], %85 {strides = array<i32>} : memref<2x512xf32, #tpu.memory_space<vmem>>, vector<2x128xf32>,
      %c0_184 = arith.constant 0 : index
      %c384 = arith.constant 384 : index
      %414 = vector.load %arg10[%c0_184, %c384] : memref<2x512xf32, #tpu.memory_space<vmem>>, vector<2x128xf32>
      tpu.vector_store %arg10[%c0_184, %c384], %93 {strides = array<i32>} : memref<2x512xf32, #tpu.memory_space<vmem>>, vector<2x128xf32>,
    } else {
    }
    %c2_i32 = arith.constant 2 : i32
    %107 = arith.index_cast %c2_i32 : i32 to index
    %c0_48 = arith.constant 0 : index
    %c0_49 = arith.constant 0 : index
    %108 = vector.load %arg2[%107, %c0_48, %c0_49] : memref<8x2x16xbf16, #tpu.memory_space<vmem>>, vector<1x2x16xbf16>
    %109 = vector.shape_cast %108 : vector<1x2x16xbf16> to vector<2x16xbf16>
    %c0_50 = arith.constant 0 : index
    %c0_51 = arith.constant 0 : index
    %110 = vector.load %arg3[%c0_50, %c0_51] : memref<16x512xbf16, #tpu.memory_space<vmem>>, vector<16x512xbf16>
    %cst_52 = arith.constant dense<0.000000e+00> : vector<2x512xf32>
    %111 = tpu.matmul %109, %110, %cst_52 {dimension_numbers = #tpu.dot_dimension_numbers<[1], [0], [0], [1], [0, 0, 1, 1], [], []>} : vector<2x16xbf16>, vector<16x512xbf16>, vector<2x512xf32> -> vector<2x512xf32>
    %112 = vector.broadcast %3 : vector<1x512xf32> to vector<2x512xf32>
    %113 = arith.addf %111, %112 : vector<2x512xf32>
    %114 = arith.truncf %98 : vector<2x128xf32> to vector<2x128xbf16>
    %c0_53 = arith.constant 0 : index
    %c0_54 = arith.constant 0 : index
    %115 = vector.load %arg4[%c0_53, %c0_54] : memref<128x512xbf16, #tpu.memory_space<vmem>>, vector<128x512xbf16>
    %cst_55 = arith.constant dense<0.000000e+00> : vector<2x512xf32>
    %116 = tpu.matmul %114, %115, %cst_55 {dimension_numbers = #tpu.dot_dimension_numbers<[1], [0], [0], [1], [0, 0, 1, 1], [], []>} : vector<2x128xbf16>, vector<128x512xbf16>, vector<2x512xf32> -> vector<2x512xf32>
    %117 = arith.addf %113, %116 : vector<2x512xf32>
    %118 = vector.extract_strided_slice %117 {offsets = [0, 0], sizes = [2, 128], strides = [1, 1]} : vector<2x512xf32> to vector<2x128xf32>
    %cst_56 = arith.constant 5.000000e-01 : f32
    %119 = vector.broadcast %cst_56 : f32 to vector<2x128xf32>
    %120 = arith.mulf %119, %118 : vector<2x128xf32>
    %121 = math.tanh %120 : vector<2x128xf32>
    %cst_57 = arith.constant 5.000000e-01 : f32
    %122 = vector.broadcast %cst_57 : f32 to vector<2x128xf32>
    %123 = arith.mulf %122, %121 : vector<2x128xf32>
    %cst_58 = arith.constant 5.000000e-01 : f32
    %124 = vector.broadcast %cst_58 : f32 to vector<2x128xf32>
    %125 = arith.addf %123, %124 : vector<2x128xf32>
    %126 = vector.extract_strided_slice %117 {offsets = [0, 128], sizes = [2, 128], strides = [1, 1]} : vector<2x512xf32> to vector<2x128xf32>
    %cst_59 = arith.constant 5.000000e-01 : f32
    %127 = vector.broadcast %cst_59 : f32 to vector<2x128xf32>
    %128 = arith.mulf %127, %126 : vector<2x128xf32>
    %129 = math.tanh %128 : vector<2x128xf32>
    %cst_60 = arith.constant 5.000000e-01 : f32
    %130 = vector.broadcast %cst_60 : f32 to vector<2x128xf32>
    %131 = arith.mulf %130, %129 : vector<2x128xf32>
    %cst_61 = arith.constant 5.000000e-01 : f32
    %132 = vector.broadcast %cst_61 : f32 to vector<2x128xf32>
    %133 = arith.addf %131, %132 : vector<2x128xf32>
    %134 = vector.extract_strided_slice %117 {offsets = [0, 256], sizes = [2, 128], strides = [1, 1]} : vector<2x512xf32> to vector<2x128xf32>
    %135 = math.tanh %134 : vector<2x128xf32>
    %136 = vector.extract_strided_slice %117 {offsets = [0, 384], sizes = [2, 128], strides = [1, 1]} : vector<2x512xf32> to vector<2x128xf32>
    %cst_62 = arith.constant 5.000000e-01 : f32
    %137 = vector.broadcast %cst_62 : f32 to vector<2x128xf32>
    %138 = arith.mulf %137, %136 : vector<2x128xf32>
    %139 = math.tanh %138 : vector<2x128xf32>
    %cst_63 = arith.constant 5.000000e-01 : f32
    %140 = vector.broadcast %cst_63 : f32 to vector<2x128xf32>
    %141 = arith.mulf %140, %139 : vector<2x128xf32>
    %cst_64 = arith.constant 5.000000e-01 : f32
    %142 = vector.broadcast %cst_64 : f32 to vector<2x128xf32>
    %143 = arith.addf %141, %142 : vector<2x128xf32>
    %144 = arith.mulf %133, %96 : vector<2x128xf32>
    %145 = arith.mulf %125, %135 : vector<2x128xf32>
    %146 = arith.addf %144, %145 : vector<2x128xf32>
    %147 = math.tanh %146 : vector<2x128xf32>
    %148 = arith.mulf %143, %147 : vector<2x128xf32>
    %149 = arith.index_cast %c2_i32 : i32 to index
    %c0_65 = arith.constant 0 : index
    %c0_66 = arith.constant 0 : index
    %150 = vector.load %arg8[%149, %c0_65, %c0_66] : memref<8x2x128xf32, #tpu.memory_space<vmem>>, vector<1x2x128xf32>
    %151 = vector.shape_cast %150 : vector<1x2x128xf32> to vector<2x128xf32>
    %152 = vector.shape_cast %148 : vector<2x128xf32> to vector<1x2x128xf32>
    tpu.vector_store %arg8[%149, %c0_65, %c0_66], %152 {strides = array<i32>} : memref<8x2x128xf32, #tpu.memory_space<vmem>>, vector<1x2x128xf32>,
    %c7_i32_67 = arith.constant 7 : i32
    %153 = arith.cmpi eq, %c2_i32, %c7_i32_67 : i32
    %154 = arith.andi %4, %153 : i1
    %155 = arith.extui %154 : i1 to i32
    %c0_i32_68 = arith.constant 0 : i32
    %156 = arith.cmpi ne, %155, %c0_i32_68 : i32
    scf.if %156 {
      %c0_180 = arith.constant 0 : index
      %c0_181 = arith.constant 0 : index
      %411 = vector.load %arg10[%c0_180, %c0_181] : memref<2x512xf32, #tpu.memory_space<vmem>>, vector<2x128xf32>
      tpu.vector_store %arg10[%c0_180, %c0_181], %125 {strides = array<i32>} : memref<2x512xf32, #tpu.memory_space<vmem>>, vector<2x128xf32>,
      %c0_182 = arith.constant 0 : index
      %c128 = arith.constant 128 : index
      %412 = vector.load %arg10[%c0_182, %c128] : memref<2x512xf32, #tpu.memory_space<vmem>>, vector<2x128xf32>
      tpu.vector_store %arg10[%c0_182, %c128], %133 {strides = array<i32>} : memref<2x512xf32, #tpu.memory_space<vmem>>, vector<2x128xf32>,
      %c0_183 = arith.constant 0 : index
      %c256 = arith.constant 256 : index
      %413 = vector.load %arg10[%c0_183, %c256] : memref<2x512xf32, #tpu.memory_space<vmem>>, vector<2x128xf32>
      tpu.vector_store %arg10[%c0_183, %c256], %135 {strides = array<i32>} : memref<2x512xf32, #tpu.memory_space<vmem>>, vector<2x128xf32>,
      %c0_184 = arith.constant 0 : index
      %c384 = arith.constant 384 : index
      %414 = vector.load %arg10[%c0_184, %c384] : memref<2x512xf32, #tpu.memory_space<vmem>>, vector<2x128xf32>
      tpu.vector_store %arg10[%c0_184, %c384], %143 {strides = array<i32>} : memref<2x512xf32, #tpu.memory_space<vmem>>, vector<2x128xf32>,
    } else {
    }
    %c3_i32 = arith.constant 3 : i32
    %157 = arith.index_cast %c3_i32 : i32 to index
    %c0_69 = arith.constant 0 : index
    %c0_70 = arith.constant 0 : index
    %158 = vector.load %arg2[%157, %c0_69, %c0_70] : memref<8x2x16xbf16, #tpu.memory_space<vmem>>, vector<1x2x16xbf16>
    %159 = vector.shape_cast %158 : vector<1x2x16xbf16> to vector<2x16xbf16>
    %c0_71 = arith.constant 0 : index
    %c0_72 = arith.constant 0 : index
    %160 = vector.load %arg3[%c0_71, %c0_72] : memref<16x512xbf16, #tpu.memory_space<vmem>>, vector<16x512xbf16>
    %cst_73 = arith.constant dense<0.000000e+00> : vector<2x512xf32>
    %161 = tpu.matmul %159, %160, %cst_73 {dimension_numbers = #tpu.dot_dimension_numbers<[1], [0], [0], [1], [0, 0, 1, 1], [], []>} : vector<2x16xbf16>, vector<16x512xbf16>, vector<2x512xf32> -> vector<2x512xf32>
    %162 = vector.broadcast %3 : vector<1x512xf32> to vector<2x512xf32>
    %163 = arith.addf %161, %162 : vector<2x512xf32>
    %164 = arith.truncf %148 : vector<2x128xf32> to vector<2x128xbf16>
    %c0_74 = arith.constant 0 : index
    %c0_75 = arith.constant 0 : index
    %165 = vector.load %arg4[%c0_74, %c0_75] : memref<128x512xbf16, #tpu.memory_space<vmem>>, vector<128x512xbf16>
    %cst_76 = arith.constant dense<0.000000e+00> : vector<2x512xf32>
    %166 = tpu.matmul %164, %165, %cst_76 {dimension_numbers = #tpu.dot_dimension_numbers<[1], [0], [0], [1], [0, 0, 1, 1], [], []>} : vector<2x128xbf16>, vector<128x512xbf16>, vector<2x512xf32> -> vector<2x512xf32>
    %167 = arith.addf %163, %166 : vector<2x512xf32>
    %168 = vector.extract_strided_slice %167 {offsets = [0, 0], sizes = [2, 128], strides = [1, 1]} : vector<2x512xf32> to vector<2x128xf32>
    %cst_77 = arith.constant 5.000000e-01 : f32
    %169 = vector.broadcast %cst_77 : f32 to vector<2x128xf32>
    %170 = arith.mulf %169, %168 : vector<2x128xf32>
    %171 = math.tanh %170 : vector<2x128xf32>
    %cst_78 = arith.constant 5.000000e-01 : f32
    %172 = vector.broadcast %cst_78 : f32 to vector<2x128xf32>
    %173 = arith.mulf %172, %171 : vector<2x128xf32>
    %cst_79 = arith.constant 5.000000e-01 : f32
    %174 = vector.broadcast %cst_79 : f32 to vector<2x128xf32>
    %175 = arith.addf %173, %174 : vector<2x128xf32>
    %176 = vector.extract_strided_slice %167 {offsets = [0, 128], sizes = [2, 128], strides = [1, 1]} : vector<2x512xf32> to vector<2x128xf32>
    %cst_80 = arith.constant 5.000000e-01 : f32
    %177 = vector.broadcast %cst_80 : f32 to vector<2x128xf32>
    %178 = arith.mulf %177, %176 : vector<2x128xf32>
    %179 = math.tanh %178 : vector<2x128xf32>
    %cst_81 = arith.constant 5.000000e-01 : f32
    %180 = vector.broadcast %cst_81 : f32 to vector<2x128xf32>
    %181 = arith.mulf %180, %179 : vector<2x128xf32>
    %cst_82 = arith.constant 5.000000e-01 : f32
    %182 = vector.broadcast %cst_82 : f32 to vector<2x128xf32>
    %183 = arith.addf %181, %182 : vector<2x128xf32>
    %184 = vector.extract_strided_slice %167 {offsets = [0, 256], sizes = [2, 128], strides = [1, 1]} : vector<2x512xf32> to vector<2x128xf32>
    %185 = math.tanh %184 : vector<2x128xf32>
    %186 = vector.extract_strided_slice %167 {offsets = [0, 384], sizes = [2, 128], strides = [1, 1]} : vector<2x512xf32> to vector<2x128xf32>
    %cst_83 = arith.constant 5.000000e-01 : f32
    %187 = vector.broadcast %cst_83 : f32 to vector<2x128xf32>
    %188 = arith.mulf %187, %186 : vector<2x128xf32>
    %189 = math.tanh %188 : vector<2x128xf32>
    %cst_84 = arith.constant 5.000000e-01 : f32
    %190 = vector.broadcast %cst_84 : f32 to vector<2x128xf32>
    %191 = arith.mulf %190, %189 : vector<2x128xf32>
    %cst_85 = arith.constant 5.000000e-01 : f32
    %192 = vector.broadcast %cst_85 : f32 to vector<2x128xf32>
    %193 = arith.addf %191, %192 : vector<2x128xf32>
    %194 = arith.mulf %183, %146 : vector<2x128xf32>
    %195 = arith.mulf %175, %185 : vector<2x128xf32>
    %196 = arith.addf %194, %195 : vector<2x128xf32>
    %197 = math.tanh %196 : vector<2x128xf32>
    %198 = arith.mulf %193, %197 : vector<2x128xf32>
    %199 = arith.index_cast %c3_i32 : i32 to index
    %c0_86 = arith.constant 0 : index
    %c0_87 = arith.constant 0 : index
    %200 = vector.load %arg8[%199, %c0_86, %c0_87] : memref<8x2x128xf32, #tpu.memory_space<vmem>>, vector<1x2x128xf32>
    %201 = vector.shape_cast %200 : vector<1x2x128xf32> to vector<2x128xf32>
    %202 = vector.shape_cast %198 : vector<2x128xf32> to vector<1x2x128xf32>
    tpu.vector_store %arg8[%199, %c0_86, %c0_87], %202 {strides = array<i32>} : memref<8x2x128xf32, #tpu.memory_space<vmem>>, vector<1x2x128xf32>,
    %c7_i32_88 = arith.constant 7 : i32
    %203 = arith.cmpi eq, %c3_i32, %c7_i32_88 : i32
    %204 = arith.andi %4, %203 : i1
    %205 = arith.extui %204 : i1 to i32
    %c0_i32_89 = arith.constant 0 : i32
    %206 = arith.cmpi ne, %205, %c0_i32_89 : i32
    scf.if %206 {
      %c0_180 = arith.constant 0 : index
      %c0_181 = arith.constant 0 : index
      %411 = vector.load %arg10[%c0_180, %c0_181] : memref<2x512xf32, #tpu.memory_space<vmem>>, vector<2x128xf32>
      tpu.vector_store %arg10[%c0_180, %c0_181], %175 {strides = array<i32>} : memref<2x512xf32, #tpu.memory_space<vmem>>, vector<2x128xf32>,
      %c0_182 = arith.constant 0 : index
      %c128 = arith.constant 128 : index
      %412 = vector.load %arg10[%c0_182, %c128] : memref<2x512xf32, #tpu.memory_space<vmem>>, vector<2x128xf32>
      tpu.vector_store %arg10[%c0_182, %c128], %183 {strides = array<i32>} : memref<2x512xf32, #tpu.memory_space<vmem>>, vector<2x128xf32>,
      %c0_183 = arith.constant 0 : index
      %c256 = arith.constant 256 : index
      %413 = vector.load %arg10[%c0_183, %c256] : memref<2x512xf32, #tpu.memory_space<vmem>>, vector<2x128xf32>
      tpu.vector_store %arg10[%c0_183, %c256], %185 {strides = array<i32>} : memref<2x512xf32, #tpu.memory_space<vmem>>, vector<2x128xf32>,
      %c0_184 = arith.constant 0 : index
      %c384 = arith.constant 384 : index
      %414 = vector.load %arg10[%c0_184, %c384] : memref<2x512xf32, #tpu.memory_space<vmem>>, vector<2x128xf32>
      tpu.vector_store %arg10[%c0_184, %c384], %193 {strides = array<i32>} : memref<2x512xf32, #tpu.memory_space<vmem>>, vector<2x128xf32>,
    } else {
    }
    %c4_i32 = arith.constant 4 : i32
    %207 = arith.index_cast %c4_i32 : i32 to index
    %c0_90 = arith.constant 0 : index
    %c0_91 = arith.constant 0 : index
    %208 = vector.load %arg2[%207, %c0_90, %c0_91] : memref<8x2x16xbf16, #tpu.memory_space<vmem>>, vector<1x2x16xbf16>
    %209 = vector.shape_cast %208 : vector<1x2x16xbf16> to vector<2x16xbf16>
    %c0_92 = arith.constant 0 : index
    %c0_93 = arith.constant 0 : index
    %210 = vector.load %arg3[%c0_92, %c0_93] : memref<16x512xbf16, #tpu.memory_space<vmem>>, vector<16x512xbf16>
    %cst_94 = arith.constant dense<0.000000e+00> : vector<2x512xf32>
    %211 = tpu.matmul %209, %210, %cst_94 {dimension_numbers = #tpu.dot_dimension_numbers<[1], [0], [0], [1], [0, 0, 1, 1], [], []>} : vector<2x16xbf16>, vector<16x512xbf16>, vector<2x512xf32> -> vector<2x512xf32>
    %212 = vector.broadcast %3 : vector<1x512xf32> to vector<2x512xf32>
    %213 = arith.addf %211, %212 : vector<2x512xf32>
    %214 = arith.truncf %198 : vector<2x128xf32> to vector<2x128xbf16>
    %c0_95 = arith.constant 0 : index
    %c0_96 = arith.constant 0 : index
    %215 = vector.load %arg4[%c0_95, %c0_96] : memref<128x512xbf16, #tpu.memory_space<vmem>>, vector<128x512xbf16>
    %cst_97 = arith.constant dense<0.000000e+00> : vector<2x512xf32>
    %216 = tpu.matmul %214, %215, %cst_97 {dimension_numbers = #tpu.dot_dimension_numbers<[1], [0], [0], [1], [0, 0, 1, 1], [], []>} : vector<2x128xbf16>, vector<128x512xbf16>, vector<2x512xf32> -> vector<2x512xf32>
    %217 = arith.addf %213, %216 : vector<2x512xf32>
    %218 = vector.extract_strided_slice %217 {offsets = [0, 0], sizes = [2, 128], strides = [1, 1]} : vector<2x512xf32> to vector<2x128xf32>
    %cst_98 = arith.constant 5.000000e-01 : f32
    %219 = vector.broadcast %cst_98 : f32 to vector<2x128xf32>
    %220 = arith.mulf %219, %218 : vector<2x128xf32>
    %221 = math.tanh %220 : vector<2x128xf32>
    %cst_99 = arith.constant 5.000000e-01 : f32
    %222 = vector.broadcast %cst_99 : f32 to vector<2x128xf32>
    %223 = arith.mulf %222, %221 : vector<2x128xf32>
    %cst_100 = arith.constant 5.000000e-01 : f32
    %224 = vector.broadcast %cst_100 : f32 to vector<2x128xf32>
    %225 = arith.addf %223, %224 : vector<2x128xf32>
    %226 = vector.extract_strided_slice %217 {offsets = [0, 128], sizes = [2, 128], strides = [1, 1]} : vector<2x512xf32> to vector<2x128xf32>
    %cst_101 = arith.constant 5.000000e-01 : f32
    %227 = vector.broadcast %cst_101 : f32 to vector<2x128xf32>
    %228 = arith.mulf %227, %226 : vector<2x128xf32>
    %229 = math.tanh %228 : vector<2x128xf32>
    %cst_102 = arith.constant 5.000000e-01 : f32
    %230 = vector.broadcast %cst_102 : f32 to vector<2x128xf32>
    %231 = arith.mulf %230, %229 : vector<2x128xf32>
    %cst_103 = arith.constant 5.000000e-01 : f32
    %232 = vector.broadcast %cst_103 : f32 to vector<2x128xf32>
    %233 = arith.addf %231, %232 : vector<2x128xf32>
    %234 = vector.extract_strided_slice %217 {offsets = [0, 256], sizes = [2, 128], strides = [1, 1]} : vector<2x512xf32> to vector<2x128xf32>
    %235 = math.tanh %234 : vector<2x128xf32>
    %236 = vector.extract_strided_slice %217 {offsets = [0, 384], sizes = [2, 128], strides = [1, 1]} : vector<2x512xf32> to vector<2x128xf32>
    %cst_104 = arith.constant 5.000000e-01 : f32
    %237 = vector.broadcast %cst_104 : f32 to vector<2x128xf32>
    %238 = arith.mulf %237, %236 : vector<2x128xf32>
    %239 = math.tanh %238 : vector<2x128xf32>
    %cst_105 = arith.constant 5.000000e-01 : f32
    %240 = vector.broadcast %cst_105 : f32 to vector<2x128xf32>
    %241 = arith.mulf %240, %239 : vector<2x128xf32>
    %cst_106 = arith.constant 5.000000e-01 : f32
    %242 = vector.broadcast %cst_106 : f32 to vector<2x128xf32>
    %243 = arith.addf %241, %242 : vector<2x128xf32>
    %244 = arith.mulf %233, %196 : vector<2x128xf32>
    %245 = arith.mulf %225, %235 : vector<2x128xf32>
    %246 = arith.addf %244, %245 : vector<2x128xf32>
    %247 = math.tanh %246 : vector<2x128xf32>
    %248 = arith.mulf %243, %247 : vector<2x128xf32>
    %249 = arith.index_cast %c4_i32 : i32 to index
    %c0_107 = arith.constant 0 : index
    %c0_108 = arith.constant 0 : index
    %250 = vector.load %arg8[%249, %c0_107, %c0_108] : memref<8x2x128xf32, #tpu.memory_space<vmem>>, vector<1x2x128xf32>
    %251 = vector.shape_cast %250 : vector<1x2x128xf32> to vector<2x128xf32>
    %252 = vector.shape_cast %248 : vector<2x128xf32> to vector<1x2x128xf32>
    tpu.vector_store %arg8[%249, %c0_107, %c0_108], %252 {strides = array<i32>} : memref<8x2x128xf32, #tpu.memory_space<vmem>>, vector<1x2x128xf32>,
    %c7_i32_109 = arith.constant 7 : i32
    %253 = arith.cmpi eq, %c4_i32, %c7_i32_109 : i32
    %254 = arith.andi %4, %253 : i1
    %255 = arith.extui %254 : i1 to i32
    %c0_i32_110 = arith.constant 0 : i32
    %256 = arith.cmpi ne, %255, %c0_i32_110 : i32
    scf.if %256 {
      %c0_180 = arith.constant 0 : index
      %c0_181 = arith.constant 0 : index
      %411 = vector.load %arg10[%c0_180, %c0_181] : memref<2x512xf32, #tpu.memory_space<vmem>>, vector<2x128xf32>
      tpu.vector_store %arg10[%c0_180, %c0_181], %225 {strides = array<i32>} : memref<2x512xf32, #tpu.memory_space<vmem>>, vector<2x128xf32>,
      %c0_182 = arith.constant 0 : index
      %c128 = arith.constant 128 : index
      %412 = vector.load %arg10[%c0_182, %c128] : memref<2x512xf32, #tpu.memory_space<vmem>>, vector<2x128xf32>
      tpu.vector_store %arg10[%c0_182, %c128], %233 {strides = array<i32>} : memref<2x512xf32, #tpu.memory_space<vmem>>, vector<2x128xf32>,
      %c0_183 = arith.constant 0 : index
      %c256 = arith.constant 256 : index
      %413 = vector.load %arg10[%c0_183, %c256] : memref<2x512xf32, #tpu.memory_space<vmem>>, vector<2x128xf32>
      tpu.vector_store %arg10[%c0_183, %c256], %235 {strides = array<i32>} : memref<2x512xf32, #tpu.memory_space<vmem>>, vector<2x128xf32>,
      %c0_184 = arith.constant 0 : index
      %c384 = arith.constant 384 : index
      %414 = vector.load %arg10[%c0_184, %c384] : memref<2x512xf32, #tpu.memory_space<vmem>>, vector<2x128xf32>
      tpu.vector_store %arg10[%c0_184, %c384], %243 {strides = array<i32>} : memref<2x512xf32, #tpu.memory_space<vmem>>, vector<2x128xf32>,
    } else {
    }
    %c5_i32 = arith.constant 5 : i32
    %257 = arith.index_cast %c5_i32 : i32 to index
    %c0_111 = arith.constant 0 : index
    %c0_112 = arith.constant 0 : index
    %258 = vector.load %arg2[%257, %c0_111, %c0_112] : memref<8x2x16xbf16, #tpu.memory_space<vmem>>, vector<1x2x16xbf16>
    %259 = vector.shape_cast %258 : vector<1x2x16xbf16> to vector<2x16xbf16>
    %c0_113 = arith.constant 0 : index
    %c0_114 = arith.constant 0 : index
    %260 = vector.load %arg3[%c0_113, %c0_114] : memref<16x512xbf16, #tpu.memory_space<vmem>>, vector<16x512xbf16>
    %cst_115 = arith.constant dense<0.000000e+00> : vector<2x512xf32>
    %261 = tpu.matmul %259, %260, %cst_115 {dimension_numbers = #tpu.dot_dimension_numbers<[1], [0], [0], [1], [0, 0, 1, 1], [], []>} : vector<2x16xbf16>, vector<16x512xbf16>, vector<2x512xf32> -> vector<2x512xf32>
    %262 = vector.broadcast %3 : vector<1x512xf32> to vector<2x512xf32>
    %263 = arith.addf %261, %262 : vector<2x512xf32>
    %264 = arith.truncf %248 : vector<2x128xf32> to vector<2x128xbf16>
    %c0_116 = arith.constant 0 : index
    %c0_117 = arith.constant 0 : index
    %265 = vector.load %arg4[%c0_116, %c0_117] : memref<128x512xbf16, #tpu.memory_space<vmem>>, vector<128x512xbf16>
    %cst_118 = arith.constant dense<0.000000e+00> : vector<2x512xf32>
    %266 = tpu.matmul %264, %265, %cst_118 {dimension_numbers = #tpu.dot_dimension_numbers<[1], [0], [0], [1], [0, 0, 1, 1], [], []>} : vector<2x128xbf16>, vector<128x512xbf16>, vector<2x512xf32> -> vector<2x512xf32>
    %267 = arith.addf %263, %266 : vector<2x512xf32>
    %268 = vector.extract_strided_slice %267 {offsets = [0, 0], sizes = [2, 128], strides = [1, 1]} : vector<2x512xf32> to vector<2x128xf32>
    %cst_119 = arith.constant 5.000000e-01 : f32
    %269 = vector.broadcast %cst_119 : f32 to vector<2x128xf32>
    %270 = arith.mulf %269, %268 : vector<2x128xf32>
    %271 = math.tanh %270 : vector<2x128xf32>
    %cst_120 = arith.constant 5.000000e-01 : f32
    %272 = vector.broadcast %cst_120 : f32 to vector<2x128xf32>
    %273 = arith.mulf %272, %271 : vector<2x128xf32>
    %cst_121 = arith.constant 5.000000e-01 : f32
    %274 = vector.broadcast %cst_121 : f32 to vector<2x128xf32>
    %275 = arith.addf %273, %274 : vector<2x128xf32>
    %276 = vector.extract_strided_slice %267 {offsets = [0, 128], sizes = [2, 128], strides = [1, 1]} : vector<2x512xf32> to vector<2x128xf32>
    %cst_122 = arith.constant 5.000000e-01 : f32
    %277 = vector.broadcast %cst_122 : f32 to vector<2x128xf32>
    %278 = arith.mulf %277, %276 : vector<2x128xf32>
    %279 = math.tanh %278 : vector<2x128xf32>
    %cst_123 = arith.constant 5.000000e-01 : f32
    %280 = vector.broadcast %cst_123 : f32 to vector<2x128xf32>
    %281 = arith.mulf %280, %279 : vector<2x128xf32>
    %cst_124 = arith.constant 5.000000e-01 : f32
    %282 = vector.broadcast %cst_124 : f32 to vector<2x128xf32>
    %283 = arith.addf %281, %282 : vector<2x128xf32>
    %284 = vector.extract_strided_slice %267 {offsets = [0, 256], sizes = [2, 128], strides = [1, 1]} : vector<2x512xf32> to vector<2x128xf32>
    %285 = math.tanh %284 : vector<2x128xf32>
    %286 = vector.extract_strided_slice %267 {offsets = [0, 384], sizes = [2, 128], strides = [1, 1]} : vector<2x512xf32> to vector<2x128xf32>
    %cst_125 = arith.constant 5.000000e-01 : f32
    %287 = vector.broadcast %cst_125 : f32 to vector<2x128xf32>
    %288 = arith.mulf %287, %286 : vector<2x128xf32>
    %289 = math.tanh %288 : vector<2x128xf32>
    %cst_126 = arith.constant 5.000000e-01 : f32
    %290 = vector.broadcast %cst_126 : f32 to vector<2x128xf32>
    %291 = arith.mulf %290, %289 : vector<2x128xf32>
    %cst_127 = arith.constant 5.000000e-01 : f32
    %292 = vector.broadcast %cst_127 : f32 to vector<2x128xf32>
    %293 = arith.addf %291, %292 : vector<2x128xf32>
    %294 = arith.mulf %283, %246 : vector<2x128xf32>
    %295 = arith.mulf %275, %285 : vector<2x128xf32>
    %296 = arith.addf %294, %295 : vector<2x128xf32>
    %297 = math.tanh %296 : vector<2x128xf32>
    %298 = arith.mulf %293, %297 : vector<2x128xf32>
    %299 = arith.index_cast %c5_i32 : i32 to index
    %c0_128 = arith.constant 0 : index
    %c0_129 = arith.constant 0 : index
    %300 = vector.load %arg8[%299, %c0_128, %c0_129] : memref<8x2x128xf32, #tpu.memory_space<vmem>>, vector<1x2x128xf32>
    %301 = vector.shape_cast %300 : vector<1x2x128xf32> to vector<2x128xf32>
    %302 = vector.shape_cast %298 : vector<2x128xf32> to vector<1x2x128xf32>
    tpu.vector_store %arg8[%299, %c0_128, %c0_129], %302 {strides = array<i32>} : memref<8x2x128xf32, #tpu.memory_space<vmem>>, vector<1x2x128xf32>,
    %c7_i32_130 = arith.constant 7 : i32
    %303 = arith.cmpi eq, %c5_i32, %c7_i32_130 : i32
    %304 = arith.andi %4, %303 : i1
    %305 = arith.extui %304 : i1 to i32
    %c0_i32_131 = arith.constant 0 : i32
    %306 = arith.cmpi ne, %305, %c0_i32_131 : i32
    scf.if %306 {
      %c0_180 = arith.constant 0 : index
      %c0_181 = arith.constant 0 : index
      %411 = vector.load %arg10[%c0_180, %c0_181] : memref<2x512xf32, #tpu.memory_space<vmem>>, vector<2x128xf32>
      tpu.vector_store %arg10[%c0_180, %c0_181], %275 {strides = array<i32>} : memref<2x512xf32, #tpu.memory_space<vmem>>, vector<2x128xf32>,
      %c0_182 = arith.constant 0 : index
      %c128 = arith.constant 128 : index
      %412 = vector.load %arg10[%c0_182, %c128] : memref<2x512xf32, #tpu.memory_space<vmem>>, vector<2x128xf32>
      tpu.vector_store %arg10[%c0_182, %c128], %283 {strides = array<i32>} : memref<2x512xf32, #tpu.memory_space<vmem>>, vector<2x128xf32>,
      %c0_183 = arith.constant 0 : index
      %c256 = arith.constant 256 : index
      %413 = vector.load %arg10[%c0_183, %c256] : memref<2x512xf32, #tpu.memory_space<vmem>>, vector<2x128xf32>
      tpu.vector_store %arg10[%c0_183, %c256], %285 {strides = array<i32>} : memref<2x512xf32, #tpu.memory_space<vmem>>, vector<2x128xf32>,
      %c0_184 = arith.constant 0 : index
      %c384 = arith.constant 384 : index
      %414 = vector.load %arg10[%c0_184, %c384] : memref<2x512xf32, #tpu.memory_space<vmem>>, vector<2x128xf32>
      tpu.vector_store %arg10[%c0_184, %c384], %293 {strides = array<i32>} : memref<2x512xf32, #tpu.memory_space<vmem>>, vector<2x128xf32>,
    } else {
    }
    %c6_i32 = arith.constant 6 : i32
    %307 = arith.index_cast %c6_i32 : i32 to index
    %c0_132 = arith.constant 0 : index
    %c0_133 = arith.constant 0 : index
    %308 = vector.load %arg2[%307, %c0_132, %c0_133] : memref<8x2x16xbf16, #tpu.memory_space<vmem>>, vector<1x2x16xbf16>
    %309 = vector.shape_cast %308 : vector<1x2x16xbf16> to vector<2x16xbf16>
    %c0_134 = arith.constant 0 : index
    %c0_135 = arith.constant 0 : index
    %310 = vector.load %arg3[%c0_134, %c0_135] : memref<16x512xbf16, #tpu.memory_space<vmem>>, vector<16x512xbf16>
    %cst_136 = arith.constant dense<0.000000e+00> : vector<2x512xf32>
    %311 = tpu.matmul %309, %310, %cst_136 {dimension_numbers = #tpu.dot_dimension_numbers<[1], [0], [0], [1], [0, 0, 1, 1], [], []>} : vector<2x16xbf16>, vector<16x512xbf16>, vector<2x512xf32> -> vector<2x512xf32>
    %312 = vector.broadcast %3 : vector<1x512xf32> to vector<2x512xf32>
    %313 = arith.addf %311, %312 : vector<2x512xf32>
    %314 = arith.truncf %298 : vector<2x128xf32> to vector<2x128xbf16>
    %c0_137 = arith.constant 0 : index
    %c0_138 = arith.constant 0 : index
    %315 = vector.load %arg4[%c0_137, %c0_138] : memref<128x512xbf16, #tpu.memory_space<vmem>>, vector<128x512xbf16>
    %cst_139 = arith.constant dense<0.000000e+00> : vector<2x512xf32>
    %316 = tpu.matmul %314, %315, %cst_139 {dimension_numbers = #tpu.dot_dimension_numbers<[1], [0], [0], [1], [0, 0, 1, 1], [], []>} : vector<2x128xbf16>, vector<128x512xbf16>, vector<2x512xf32> -> vector<2x512xf32>
    %317 = arith.addf %313, %316 : vector<2x512xf32>
    %318 = vector.extract_strided_slice %317 {offsets = [0, 0], sizes = [2, 128], strides = [1, 1]} : vector<2x512xf32> to vector<2x128xf32>
    %cst_140 = arith.constant 5.000000e-01 : f32
    %319 = vector.broadcast %cst_140 : f32 to vector<2x128xf32>
    %320 = arith.mulf %319, %318 : vector<2x128xf32>
    %321 = math.tanh %320 : vector<2x128xf32>
    %cst_141 = arith.constant 5.000000e-01 : f32
    %322 = vector.broadcast %cst_141 : f32 to vector<2x128xf32>
    %323 = arith.mulf %322, %321 : vector<2x128xf32>
    %cst_142 = arith.constant 5.000000e-01 : f32
    %324 = vector.broadcast %cst_142 : f32 to vector<2x128xf32>
    %325 = arith.addf %323, %324 : vector<2x128xf32>
    %326 = vector.extract_strided_slice %317 {offsets = [0, 128], sizes = [2, 128], strides = [1, 1]} : vector<2x512xf32> to vector<2x128xf32>
    %cst_143 = arith.constant 5.000000e-01 : f32
    %327 = vector.broadcast %cst_143 : f32 to vector<2x128xf32>
    %328 = arith.mulf %327, %326 : vector<2x128xf32>
    %329 = math.tanh %328 : vector<2x128xf32>
    %cst_144 = arith.constant 5.000000e-01 : f32
    %330 = vector.broadcast %cst_144 : f32 to vector<2x128xf32>
    %331 = arith.mulf %330, %329 : vector<2x128xf32>
    %cst_145 = arith.constant 5.000000e-01 : f32
    %332 = vector.broadcast %cst_145 : f32 to vector<2x128xf32>
    %333 = arith.addf %331, %332 : vector<2x128xf32>
    %334 = vector.extract_strided_slice %317 {offsets = [0, 256], sizes = [2, 128], strides = [1, 1]} : vector<2x512xf32> to vector<2x128xf32>
    %335 = math.tanh %334 : vector<2x128xf32>
    %336 = vector.extract_strided_slice %317 {offsets = [0, 384], sizes = [2, 128], strides = [1, 1]} : vector<2x512xf32> to vector<2x128xf32>
    %cst_146 = arith.constant 5.000000e-01 : f32
    %337 = vector.broadcast %cst_146 : f32 to vector<2x128xf32>
    %338 = arith.mulf %337, %336 : vector<2x128xf32>
    %339 = math.tanh %338 : vector<2x128xf32>
    %cst_147 = arith.constant 5.000000e-01 : f32
    %340 = vector.broadcast %cst_147 : f32 to vector<2x128xf32>
    %341 = arith.mulf %340, %339 : vector<2x128xf32>
    %cst_148 = arith.constant 5.000000e-01 : f32
    %342 = vector.broadcast %cst_148 : f32 to vector<2x128xf32>
    %343 = arith.addf %341, %342 : vector<2x128xf32>
    %344 = arith.mulf %333, %296 : vector<2x128xf32>
    %345 = arith.mulf %325, %335 : vector<2x128xf32>
    %346 = arith.addf %344, %345 : vector<2x128xf32>
    %347 = math.tanh %346 : vector<2x128xf32>
    %348 = arith.mulf %343, %347 : vector<2x128xf32>
    %349 = arith.index_cast %c6_i32 : i32 to index
    %c0_149 = arith.constant 0 : index
    %c0_150 = arith.constant 0 : index
    %350 = vector.load %arg8[%349, %c0_149, %c0_150] : memref<8x2x128xf32, #tpu.memory_space<vmem>>, vector<1x2x128xf32>
    %351 = vector.shape_cast %350 : vector<1x2x128xf32> to vector<2x128xf32>
    %352 = vector.shape_cast %348 : vector<2x128xf32> to vector<1x2x128xf32>
    tpu.vector_store %arg8[%349, %c0_149, %c0_150], %352 {strides = array<i32>} : memref<8x2x128xf32, #tpu.memory_space<vmem>>, vector<1x2x128xf32>,
    %c7_i32_151 = arith.constant 7 : i32
    %353 = arith.cmpi eq, %c6_i32, %c7_i32_151 : i32
    %354 = arith.andi %4, %353 : i1
    %355 = arith.extui %354 : i1 to i32
    %c0_i32_152 = arith.constant 0 : i32
    %356 = arith.cmpi ne, %355, %c0_i32_152 : i32
    scf.if %356 {
      %c0_180 = arith.constant 0 : index
      %c0_181 = arith.constant 0 : index
      %411 = vector.load %arg10[%c0_180, %c0_181] : memref<2x512xf32, #tpu.memory_space<vmem>>, vector<2x128xf32>
      tpu.vector_store %arg10[%c0_180, %c0_181], %325 {strides = array<i32>} : memref<2x512xf32, #tpu.memory_space<vmem>>, vector<2x128xf32>,
      %c0_182 = arith.constant 0 : index
      %c128 = arith.constant 128 : index
      %412 = vector.load %arg10[%c0_182, %c128] : memref<2x512xf32, #tpu.memory_space<vmem>>, vector<2x128xf32>
      tpu.vector_store %arg10[%c0_182, %c128], %333 {strides = array<i32>} : memref<2x512xf32, #tpu.memory_space<vmem>>, vector<2x128xf32>,
      %c0_183 = arith.constant 0 : index
      %c256 = arith.constant 256 : index
      %413 = vector.load %arg10[%c0_183, %c256] : memref<2x512xf32, #tpu.memory_space<vmem>>, vector<2x128xf32>
      tpu.vector_store %arg10[%c0_183, %c256], %335 {strides = array<i32>} : memref<2x512xf32, #tpu.memory_space<vmem>>, vector<2x128xf32>,
      %c0_184 = arith.constant 0 : index
      %c384 = arith.constant 384 : index
      %414 = vector.load %arg10[%c0_184, %c384] : memref<2x512xf32, #tpu.memory_space<vmem>>, vector<2x128xf32>
      tpu.vector_store %arg10[%c0_184, %c384], %343 {strides = array<i32>} : memref<2x512xf32, #tpu.memory_space<vmem>>, vector<2x128xf32>,
    } else {
    }
    %c7_i32_153 = arith.constant 7 : i32
    %357 = arith.index_cast %c7_i32_153 : i32 to index
    %c0_154 = arith.constant 0 : index
    %c0_155 = arith.constant 0 : index
    %358 = vector.load %arg2[%357, %c0_154, %c0_155] : memref<8x2x16xbf16, #tpu.memory_space<vmem>>, vector<1x2x16xbf16>
    %359 = vector.shape_cast %358 : vector<1x2x16xbf16> to vector<2x16xbf16>
    %c0_156 = arith.constant 0 : index
    %c0_157 = arith.constant 0 : index
    %360 = vector.load %arg3[%c0_156, %c0_157] : memref<16x512xbf16, #tpu.memory_space<vmem>>, vector<16x512xbf16>
    %cst_158 = arith.constant dense<0.000000e+00> : vector<2x512xf32>
    %361 = tpu.matmul %359, %360, %cst_158 {dimension_numbers = #tpu.dot_dimension_numbers<[1], [0], [0], [1], [0, 0, 1, 1], [], []>} : vector<2x16xbf16>, vector<16x512xbf16>, vector<2x512xf32> -> vector<2x512xf32>
    %362 = vector.broadcast %3 : vector<1x512xf32> to vector<2x512xf32>
    %363 = arith.addf %361, %362 : vector<2x512xf32>
    %364 = arith.truncf %348 : vector<2x128xf32> to vector<2x128xbf16>
    %c0_159 = arith.constant 0 : index
    %c0_160 = arith.constant 0 : index
    %365 = vector.load %arg4[%c0_159, %c0_160] : memref<128x512xbf16, #tpu.memory_space<vmem>>, vector<128x512xbf16>
    %cst_161 = arith.constant dense<0.000000e+00> : vector<2x512xf32>
    %366 = tpu.matmul %364, %365, %cst_161 {dimension_numbers = #tpu.dot_dimension_numbers<[1], [0], [0], [1], [0, 0, 1, 1], [], []>} : vector<2x128xbf16>, vector<128x512xbf16>, vector<2x512xf32> -> vector<2x512xf32>
    %367 = arith.addf %363, %366 : vector<2x512xf32>
    %368 = vector.extract_strided_slice %367 {offsets = [0, 0], sizes = [2, 128], strides = [1, 1]} : vector<2x512xf32> to vector<2x128xf32>
    %cst_162 = arith.constant 5.000000e-01 : f32
    %369 = vector.broadcast %cst_162 : f32 to vector<2x128xf32>
    %370 = arith.mulf %369, %368 : vector<2x128xf32>
    %371 = math.tanh %370 : vector<2x128xf32>
    %cst_163 = arith.constant 5.000000e-01 : f32
    %372 = vector.broadcast %cst_163 : f32 to vector<2x128xf32>
    %373 = arith.mulf %372, %371 : vector<2x128xf32>
    %cst_164 = arith.constant 5.000000e-01 : f32
    %374 = vector.broadcast %cst_164 : f32 to vector<2x128xf32>
    %375 = arith.addf %373, %374 : vector<2x128xf32>
    %376 = vector.extract_strided_slice %367 {offsets = [0, 128], sizes = [2, 128], strides = [1, 1]} : vector<2x512xf32> to vector<2x128xf32>
    %cst_165 = arith.constant 5.000000e-01 : f32
    %377 = vector.broadcast %cst_165 : f32 to vector<2x128xf32>
    %378 = arith.mulf %377, %376 : vector<2x128xf32>
    %379 = math.tanh %378 : vector<2x128xf32>
    %cst_166 = arith.constant 5.000000e-01 : f32
    %380 = vector.broadcast %cst_166 : f32 to vector<2x128xf32>
    %381 = arith.mulf %380, %379 : vector<2x128xf32>
    %cst_167 = arith.constant 5.000000e-01 : f32
    %382 = vector.broadcast %cst_167 : f32 to vector<2x128xf32>
    %383 = arith.addf %381, %382 : vector<2x128xf32>
    %384 = vector.extract_strided_slice %367 {offsets = [0, 256], sizes = [2, 128], strides = [1, 1]} : vector<2x512xf32> to vector<2x128xf32>
    %385 = math.tanh %384 : vector<2x128xf32>
    %386 = vector.extract_strided_slice %367 {offsets = [0, 384], sizes = [2, 128], strides = [1, 1]} : vector<2x512xf32> to vector<2x128xf32>
    %cst_168 = arith.constant 5.000000e-01 : f32
    %387 = vector.broadcast %cst_168 : f32 to vector<2x128xf32>
    %388 = arith.mulf %387, %386 : vector<2x128xf32>
    %389 = math.tanh %388 : vector<2x128xf32>
    %cst_169 = arith.constant 5.000000e-01 : f32
    %390 = vector.broadcast %cst_169 : f32 to vector<2x128xf32>
    %391 = arith.mulf %390, %389 : vector<2x128xf32>
    %cst_170 = arith.constant 5.000000e-01 : f32
    %392 = vector.broadcast %cst_170 : f32 to vector<2x128xf32>
    %393 = arith.addf %391, %392 : vector<2x128xf32>
    %394 = arith.mulf %383, %346 : vector<2x128xf32>
    %395 = arith.mulf %375, %385 : vector<2x128xf32>
    %396 = arith.addf %394, %395 : vector<2x128xf32>
    %397 = math.tanh %396 : vector<2x128xf32>
    %398 = arith.mulf %393, %397 : vector<2x128xf32>
    %399 = arith.index_cast %c7_i32_153 : i32 to index
    %c0_171 = arith.constant 0 : index
    %c0_172 = arith.constant 0 : index
    %400 = vector.load %arg8[%399, %c0_171, %c0_172] : memref<8x2x128xf32, #tpu.memory_space<vmem>>, vector<1x2x128xf32>
    %401 = vector.shape_cast %400 : vector<1x2x128xf32> to vector<2x128xf32>
    %402 = vector.shape_cast %398 : vector<2x128xf32> to vector<1x2x128xf32>
    tpu.vector_store %arg8[%399, %c0_171, %c0_172], %402 {strides = array<i32>} : memref<8x2x128xf32, #tpu.memory_space<vmem>>, vector<1x2x128xf32>,
    %c7_i32_173 = arith.constant 7 : i32
    %403 = arith.cmpi eq, %c7_i32_153, %c7_i32_173 : i32
    %404 = arith.andi %4, %403 : i1
    %405 = arith.extui %404 : i1 to i32
    %c0_i32_174 = arith.constant 0 : i32
    %406 = arith.cmpi ne, %405, %c0_i32_174 : i32
    scf.if %406 {
      %c0_180 = arith.constant 0 : index
      %c0_181 = arith.constant 0 : index
      %411 = vector.load %arg10[%c0_180, %c0_181] : memref<2x512xf32, #tpu.memory_space<vmem>>, vector<2x128xf32>
      tpu.vector_store %arg10[%c0_180, %c0_181], %375 {strides = array<i32>} : memref<2x512xf32, #tpu.memory_space<vmem>>, vector<2x128xf32>,
      %c0_182 = arith.constant 0 : index
      %c128 = arith.constant 128 : index
      %412 = vector.load %arg10[%c0_182, %c128] : memref<2x512xf32, #tpu.memory_space<vmem>>, vector<2x128xf32>
      tpu.vector_store %arg10[%c0_182, %c128], %383 {strides = array<i32>} : memref<2x512xf32, #tpu.memory_space<vmem>>, vector<2x128xf32>,
      %c0_183 = arith.constant 0 : index
      %c256 = arith.constant 256 : index
      %413 = vector.load %arg10[%c0_183, %c256] : memref<2x512xf32, #tpu.memory_space<vmem>>, vector<2x128xf32>
      tpu.vector_store %arg10[%c0_183, %c256], %385 {strides = array<i32>} : memref<2x512xf32, #tpu.memory_space<vmem>>, vector<2x128xf32>,
      %c0_184 = arith.constant 0 : index
      %c384 = arith.constant 384 : index
      %414 = vector.load %arg10[%c0_184, %c384] : memref<2x512xf32, #tpu.memory_space<vmem>>, vector<2x128xf32>
      tpu.vector_store %arg10[%c0_184, %c384], %393 {strides = array<i32>} : memref<2x512xf32, #tpu.memory_space<vmem>>, vector<2x128xf32>,
    } else {
    }
    %c8_i32 = arith.constant 8 : i32
    %c0_175 = arith.constant 0 : index
    %c0_176 = arith.constant 0 : index
    %407 = vector.load %arg11[%c0_175, %c0_176] : memref<2x128xf32, #tpu.memory_space<vmem>>, vector<2x128xf32>
    tpu.vector_store %arg11[%c0_175, %c0_176], %398 {strides = array<i32>} : memref<2x128xf32, #tpu.memory_space<vmem>>, vector<2x128xf32>,
    %c0_177 = arith.constant 0 : index
    %c0_178 = arith.constant 0 : index
    %408 = vector.load %arg12[%c0_177, %c0_178] : memref<2x128xf32, #tpu.memory_space<vmem>>, vector<2x128xf32>
    tpu.vector_store %arg12[%c0_177, %c0_178], %396 {strides = array<i32>} : memref<2x128xf32, #tpu.memory_space<vmem>>, vector<2x128xf32>,
    %409 = arith.extui %4 : i1 to i32
    %c0_i32_179 = arith.constant 0 : i32
    %410 = arith.cmpi ne, %409, %c0_i32_179 : i32
    scf.if %410 {
      %c0_180 = arith.constant 0 : index
      %c0_181 = arith.constant 0 : index
      %411 = vector.load %arg9[%c0_180, %c0_181] : memref<2x128xf32, #tpu.memory_space<vmem>>, vector<2x128xf32>
      tpu.vector_store %arg9[%c0_180, %c0_181], %396 {strides = array<i32>} : memref<2x128xf32, #tpu.memory_space<vmem>>, vector<2x128xf32>,
    } else {
    }
    return
  }
  func.func @transform_0(%arg0: i32, %arg1: i32) -> (i32, i32, i32) {
    %c0_i32 = arith.constant 0 : i32
    %c0_i32_0 = arith.constant 0 : i32
    return %arg1, %arg0, %c0_i32 : i32, i32, i32
  }
  func.func @transform_1(%arg0: i32, %arg1: i32) -> (i32, i32) {
    %c0_i32 = arith.constant 0 : i32
    %c0_i32_0 = arith.constant 0 : i32
    %c0_i32_1 = arith.constant 0 : i32
    return %c0_i32, %c0_i32_0 : i32, i32
  }
  func.func @transform_2(%arg0: i32, %arg1: i32) -> (i32, i32) {
    %c0_i32 = arith.constant 0 : i32
    %c0_i32_0 = arith.constant 0 : i32
    %c0_i32_1 = arith.constant 0 : i32
    return %c0_i32, %c0_i32_0 : i32, i32
  }
  func.func @transform_3(%arg0: i32, %arg1: i32) -> (i32, i32) {
    %c0_i32 = arith.constant 0 : i32
    %c0_i32_0 = arith.constant 0 : i32
    %c0_i32_1 = arith.constant 0 : i32
    return %c0_i32, %c0_i32_0 : i32, i32
  }
  func.func @transform_4(%arg0: i32, %arg1: i32) -> (i32, i32) {
    %c0_i32 = arith.constant 0 : i32
    %c0_i32_0 = arith.constant 0 : i32
    return %arg0, %c0_i32 : i32, i32
  }
  func.func @transform_5(%arg0: i32, %arg1: i32) -> (i32, i32) {
    %c0_i32 = arith.constant 0 : i32
    %c0_i32_0 = arith.constant 0 : i32
    return %arg0, %c0_i32 : i32, i32
  }
  func.func @transform_6(%arg0: i32, %arg1: i32) -> (i32, i32, i32) {
    %c0_i32 = arith.constant 0 : i32
    %c0_i32_0 = arith.constant 0 : i32
    return %arg1, %arg0, %c0_i32 : i32, i32, i32
  }
  func.func @transform_7(%arg0: i32, %arg1: i32) -> (i32, i32) {
    %c0_i32 = arith.constant 0 : i32
    %c0_i32_0 = arith.constant 0 : i32
    return %arg0, %c0_i32 : i32, i32
  }
  func.func @transform_8(%arg0: i32, %arg1: i32) -> (i32, i32) {
    %c0_i32 = arith.constant 0 : i32
    %c0_i32_0 = arith.constant 0 : i32
    return %arg0, %c0_i32 : i32, i32
  }
}

</mosaic_0001>

<llo_original>
// kernel: tpu_custom_call.1
$region0: #{tpu_custom_call.1}
  #allocation0 [shape = 'u32[]', space=smem, size = 0x4, offset = 0x4, fixed_abs, tag = 'smem constant byte address 0x4 - core index']
  #allocation1 [shape = 'u32[144,128]{1,0:T(1,128)}', space=vmem, size = 0x12000, scoped, tag = 'internal scratch']
  #allocation2 [shape = 'f32[2,128]{1,0:T(2,128)}', space=vmem, size = 0x400, scoped, tag = 'scratch operand']
  #allocation3 [shape = 'f32[2,128]{1,0:T(2,128)}', space=vmem, size = 0x400, scoped, tag = 'scratch operand']
  %s0 = inlined_call_operand.hbm [shape: bf16[8,2,16], index: 0, kind: input, shape index: {}]
  %s1 = inlined_call_operand.hbm [shape: bf16[16,512], index: 1, kind: input, shape index: {}]
  %s2 = inlined_call_operand.hbm [shape: bf16[128,512], index: 2, kind: input, shape index: {}]
  %s3 = inlined_call_operand.vmem [shape: f32[1,512], index: 3, kind: input, shape index: {}]
  %s4 = inlined_call_operand.vmem [shape: f32[2,128], index: 4, kind: input, shape index: {}]
  %s5 = inlined_call_operand.vmem [shape: f32[2,128], index: 5, kind: input, shape index: {}]
  %s6 = inlined_call_operand.hbm [shape: f32[8,2,128], index: 6, kind: output, shape index: {0}]
  %s7 = inlined_call_operand.hbm [shape: f32[2,128], index: 7, kind: output, shape index: {1}]
  %s8 = inlined_call_operand.hbm [shape: f32[2,512], index: 8, kind: output, shape index: {2}]
  %9 = xla_tuple %s6, %s7, %s8
  %s10 = sld [smem:[#allocation0]]
  $region74: #{tpu_custom_call.1} parent=0
    _
  %s12 = ssub.s32 1, %s10
  %s13 = scalar_select 0, %s12, %s10
  $region1: #{tpu_custom_call.1} parent=0
    #allocation4 [shape = 'u8[4096]{0}', space=vmem, size = 0x1000, scoped, tag = 'input window, operand 0, single buffered']
    #allocation5 [shape = 's32[1]{0}', space=sflag, size = 0x4, scoped, tag = 'scoped memory for tpu_custom_call.1']
    #allocation6 [shape = 's32[1]{0}', space=sflag, size = 0x4, scoped, tag = 'scoped memory for tpu_custom_call.1']
    #allocation7 [shape = 'u8[16384]{0}', space=vmem, size = 0x4000, scoped, tag = 'input window, operand 1, single buffered']
    #allocation8 [shape = 's32[1]{0}', space=sflag, size = 0x4, scoped, tag = 'scoped memory for tpu_custom_call.1']
    #allocation9 [shape = 'u8[131072]{0}', space=vmem, size = 0x20000, scoped, tag = 'input window, operand 2, single buffered']
    #allocation10 [shape = 'u8[8192]{0}', space=vmem, size = 0x2000, scoped, tag = 'output window, operand 0, single buffered']
    #allocation11 [shape = 'u8[1024]{0}', space=vmem, size = 0x400, scoped, tag = 'output window, operand 1, single buffered']
    #allocation12 [shape = 's32[1]{0}', space=sflag, size = 0x4, scoped, tag = 'scoped memory for tpu_custom_call.1']
    #allocation13 [shape = 'u8[4096]{0}', space=vmem, size = 0x1000, scoped, tag = 'output window, operand 2, single buffered']
    %14 = vsyncpa [#allocation5], 0
    %15 = vsyncpa [#allocation8], 0
    %16 = vsyncpa [#allocation6], 0
    %17 = vsyncpa [#allocation12], 0
    // Predicated region
    $region2: #{tpu_custom_call.1} parent=1 // pred_check
      _
    $region3: #{tpu_custom_call.1} parent=1 // pred_check_branch
      %19 = sbr.rel (0) target = $region5
    $region4: #{tpu_custom_call.1} parent=1 // pred_region
      %s21 = ssub.s32 128, 128
      %22 = vsyncadd [#allocation5], %s21
      %s23 = sshll.u32 [#allocation4], 4
      %s24 = int_to_ptr.vmem [resolvable:$true] %s23
      %29 = dma.hbm_to_vmem [thread:$0]  %s0, 128, %s24, [#allocation5], 16, 16, 1
    $region5: #{tpu_custom_call.1} parent=1 // pred_fallthru
      _
    // Predicated region
    $region6: #{tpu_custom_call.1} parent=1 // pred_check
      _
    $region7: #{tpu_custom_call.1} parent=1 // pred_check_branch
      %31 = sbr.rel (0) target = $region9
    $region8: #{tpu_custom_call.1} parent=1 // pred_region
      %s33 = ssub.s32 512, 512
      %34 = vsyncadd [#allocation8], %s33
      %s35 = sshll.u32 [#allocation7], 4
      %s36 = int_to_ptr.vmem [resolvable:$true] %s35
      %41 = dma.hbm_to_vmem [thread:$0]  %s1, 512, %s36, [#allocation8], 256, 256, 16
    $region9: #{tpu_custom_call.1} parent=1 // pred_fallthru
      _
    // Predicated region
    $region10: #{tpu_custom_call.1} parent=1 // pred_check
      _
    $region11: #{tpu_custom_call.1} parent=1 // pred_check_branch
      %43 = sbr.rel (0) target = $region13
    $region12: #{tpu_custom_call.1} parent=1 // pred_region
      %s45 = ssub.s32 4096, 4096
      %46 = vsyncadd [#allocation8], %s45
      %s47 = sshll.u32 [#allocation9], 4
      %s48 = int_to_ptr.vmem [resolvable:$true] %s47
      %53 = dma.hbm_to_vmem [thread:$0]  %s2, 4096, %s48, [#allocation8], 256, 256, 16
    $region13: #{tpu_custom_call.1} parent=1 // pred_fallthru
      _
    // Predicated region
    $region14: #{tpu_custom_call.1} parent=1 // pred_check
      _
    $region15: #{tpu_custom_call.1} parent=1 // pred_check_branch
      %55 = sbr.rel (0) target = $region17
    $region16: #{tpu_custom_call.1} parent=1 // pred_region
      _
    $region17: #{tpu_custom_call.1} parent=1 // pred_fallthru
      _
    // Predicated region
    $region18: #{tpu_custom_call.1} parent=1 // pred_check
      _
    $region19: #{tpu_custom_call.1} parent=1 // pred_check_branch
      %57 = sbr.rel (0) target = $region21
    $region20: #{tpu_custom_call.1} parent=1 // pred_region
      _
    $region21: #{tpu_custom_call.1} parent=1 // pred_fallthru
      _
    // Predicated region
    $region22: #{tpu_custom_call.1} parent=1 // pred_check
      _
    $region23: #{tpu_custom_call.1} parent=1 // pred_check_branch
      %59 = sbr.rel (0) target = $region25
    $region24: #{tpu_custom_call.1} parent=1 // pred_region
      _
    $region25: #{tpu_custom_call.1} parent=1 // pred_fallthru
      _
    // Predicated region
    $region26: #{tpu_custom_call.1} parent=1 // pred_check
      _
    $region27: #{tpu_custom_call.1} parent=1 // pred_check_branch
      %61 = sbr.rel (0) target = $region29
    $region28: #{tpu_custom_call.1} parent=1 // pred_region
      %62 = dma.done [#allocation5], 128
    $region29: #{tpu_custom_call.1} parent=1 // pred_fallthru
      _
    // Predicated region
    $region30: #{tpu_custom_call.1} parent=1 // pred_check
      _
    $region31: #{tpu_custom_call.1} parent=1 // pred_check_branch
      %64 = sbr.rel (0) target = $region33
    $region32: #{tpu_custom_call.1} parent=1 // pred_region
      %65 = dma.done [#allocation8], 512
    $region33: #{tpu_custom_call.1} parent=1 // pred_fallthru
      _
    // Predicated region
    $region34: #{tpu_custom_call.1} parent=1 // pred_check
      _
    $region35: #{tpu_custom_call.1} parent=1 // pred_check_branch
      %67 = sbr.rel (0) target = $region37
    $region36: #{tpu_custom_call.1} parent=1 // pred_region
      %68 = dma.done [#allocation8], 4096
    $region37: #{tpu_custom_call.1} parent=1 // pred_fallthru
      _
    %p70 = scmp.eq.s32.totalorder 0, 0
    // Predicated region
    $region38: #{tpu_custom_call.1} parent=1 // pred_check
      %p71 = pneg %p70
    $region39: #{tpu_custom_call.1} parent=1 // pred_check_branch
      %73 = sbr.rel (%p71) target = $region41
    $region40: #{tpu_custom_call.1} parent=1 // pred_region
      %v74 = vld [vmem:[%s4] sm:$0x3]
      %75 = vst [vmem:[#allocation2] sm:$0x3] %v74
      %v76 = vld [vmem:[%s5] sm:$0x3]
      %77 = vst [vmem:[#allocation3] sm:$0x3] %v76
    $region41: #{tpu_custom_call.1} parent=1 // pred_fallthru
      _
    %v78 = vld [vmem:[%s3] sm:$0xf]
    %v79 = vld [vmem:[#allocation2] sm:$0x3]
    %v80 = vld [vmem:[#allocation3] sm:$0x3]
    %v81 = vld [vmem:[#allocation4] sm:$0x1]
    %v82 = vld [vmem:[#allocation7] sm:$0xff]
    %v83 = vld [vmem:[#allocation7 + $0x8] sm:$0xff]
    %v84 = vld [vmem:[#allocation7 + $0x10] sm:$0xff]
    %v85 = vld [vmem:[#allocation7 + $0x18] sm:$0xff]
    %v87 = vlaneseq
    %v88 = vshrl.u32 %v87, 7
    %v89 = vsub.s32 0, %v88
    %v90 = vrot.slane %v78, %v89
    %v91 = vlaneseq
    %v92 = vshrl.u32 %v91, 7
    %v93 = vsub.s32 1, %v92
    %v94 = vrot.slane %v78, %v93
    %v95 = vlaneseq
    %v96 = vshrl.u32 %v95, 7
    %v97 = vsub.s32 2, %v96
    %v98 = vrot.slane %v78, %v97
    %v99 = vlaneseq
    %v100 = vshrl.u32 %v99, 7
    %v101 = vsub.s32 3, %v100
    %v102 = vrot.slane %v78, %v101
    %v111 = vunpack.c.l.b16 %v82
    %v112 = vunpack.c.h.b16 %v82
    %v113 = vunpack.c.l.b16 %v83
    %v114 = vunpack.c.h.b16 %v83
    %v115 = vunpack.c.l.b16 %v84
    %v116 = vunpack.c.h.b16 %v84
    %v117 = vunpack.c.l.b16 %v85
    %v118 = vunpack.c.h.b16 %v85
    %v119 = vpack.c.b16 %v115, %v111
    %v120 = vpack.c.b16 %v116, %v112
    %v121 = vpack.c.b16 %v117, %v113
    %v122 = vpack.c.b16 %v118, %v114
    %vm127 = vcmask 130048
    %v129 = vsel %vm127, %v81, 0
    %131 = vmatprep.subr.bf16.mxu0 0
    %132 = vmatpush1.bf16.msra.mxu0 0
    %133 = vmatprep.subr.bf16.mxu0 0
    %134 = vmatpush1.bf16.msra.mxu0 0
    %135 = vmatprep.subr.bf16.mxu0 0
    %136 = vmatpush1.bf16.msra.mxu0 0
    %137 = vmatprep.subr.bf16.mxu0 0
    %138 = vmatpush1.bf16.msra.mxu0 0
    %139 = vmatprep.subr.bf16.mxu0 0
    %140 = vmatpush1.bf16.msra.mxu0 0
    %141 = vmatprep.subr.bf16.mxu0 0
    %142 = vmatpush1.bf16.msra.mxu0 0
    %143 = vmatprep.subr.bf16.mxu0 0
    %144 = vmatpush1.bf16.msra.mxu0 0
    %145 = vmatprep.subr.bf16.mxu0 %v120
    %146 = vmatpush1.bf16.msra.mxu0 %v119
    %147 = vmatprep.subr.bf16.mxu0 0
    %148 = vmatpush2.bf16.msra.mxu0 0
    %149 = vmatprep.subr.bf16.mxu0 0
    %150 = vmatpush2.bf16.msra.mxu0 0
    %151 = vmatprep.subr.bf16.mxu0 0
    %152 = vmatpush2.bf16.msra.mxu0 0
    %153 = vmatprep.subr.bf16.mxu0 0
    %154 = vmatpush2.bf16.msra.mxu0 0
    %155 = vmatprep.subr.bf16.mxu0 0
    %156 = vmatpush2.bf16.msra.mxu0 0
    %157 = vmatprep.subr.bf16.mxu0 0
    %158 = vmatpush2.bf16.msra.mxu0 0
    %159 = vmatprep.subr.bf16.mxu0 0
    %160 = vmatpush2.bf16.msra.mxu0 0
    %161 = vmatprep.subr.bf16.mxu0 0
    %162 = vmatpush2.bf16.msra.mxu0 0
    %163 = vmatprep.mubr.bf16.mxu0 0
    %164 = vmatmul.mubr.bf16.gmra.mxu0 %v129
    %v165 = vpop.f32.mrf.mxu0
    %v166 = vadd.f32 %v90, %v165
    %v167 = vpop.f32.mrf.mxu0
    %v168 = vadd.f32 %v94, %v167
    %v169 = vpop.f32.mrf.mxu0
    %v170 = vpop.f32.mrf.mxu0
    %171 = vdwg.mxu0
    %172 = vmatprep.subr.bf16.mxu0 0
    %173 = vmatpush1.bf16.msra.mxu0 0
    %174 = vmatprep.subr.bf16.mxu0 0
    %175 = vmatpush1.bf16.msra.mxu0 0
    %176 = vmatprep.subr.bf16.mxu0 0
    %177 = vmatpush1.bf16.msra.mxu0 0
    %178 = vmatprep.subr.bf16.mxu0 0
    %179 = vmatpush1.bf16.msra.mxu0 0
    %180 = vmatprep.subr.bf16.mxu0 0
    %181 = vmatpush1.bf16.msra.mxu0 0
    %182 = vmatprep.subr.bf16.mxu0 0
    %183 = vmatpush1.bf16.msra.mxu0 0
    %184 = vmatprep.subr.bf16.mxu0 0
    %185 = vmatpush1.bf16.msra.mxu0 0
    %186 = vmatprep.subr.bf16.mxu0 %v122
    %187 = vmatpush1.bf16.msra.mxu0 %v121
    %188 = vmatprep.subr.bf16.mxu0 0
    %189 = vmatpush2.bf16.msra.mxu0 0
    %190 = vmatprep.subr.bf16.mxu0 0
    %191 = vmatpush2.bf16.msra.mxu0 0
    %192 = vmatprep.subr.bf16.mxu0 0
    %193 = vmatpush2.bf16.msra.mxu0 0
    %194 = vmatprep.subr.bf16.mxu0 0
    %195 = vmatpush2.bf16.msra.mxu0 0
    %196 = vmatprep.subr.bf16.mxu0 0
    %197 = vmatpush2.bf16.msra.mxu0 0
    %198 = vmatprep.subr.bf16.mxu0 0
    %199 = vmatpush2.bf16.msra.mxu0 0
    %200 = vmatprep.subr.bf16.mxu0 0
    %201 = vmatpush2.bf16.msra.mxu0 0
    %202 = vmatprep.subr.bf16.mxu0 0
    %203 = vmatpush2.bf16.msra.mxu0 0
    %204 = vmatprep.mubr.bf16.mxu0 0
    %205 = vmatmul.mubr.bf16.gmra.mxu0 %v129
    %v206 = vpop.f32.mrf.mxu0
    %v207 = vadd.f32 %v98, %v206
    %v208 = vpop.f32.mrf.mxu0
    %v209 = vadd.f32 %v102, %v208
    %v210 = vpop.f32.mrf.mxu0
    %v211 = vpop.f32.mrf.mxu0
    %212 = vdwg.mxu0
    %v213 = vpack.c.bf16 %v79, %v79
    %v214 = vld [vmem:[#allocation9] sm:$0xff]
    %v215 = vld [vmem:[#allocation9 + $0x8] sm:$0xff]
    %v216 = vld [vmem:[#allocation9 + $0x10] sm:$0xff]
    %v217 = vld [vmem:[#allocation9 + $0x18] sm:$0xff]
    %v218 = vld [vmem:[#allocation9 + $0x20] sm:$0xff]
    %v219 = vld [vmem:[#allocation9 + $0x28] sm:$0xff]
    %v220 = vld [vmem:[#allocation9 + $0x30] sm:$0xff]
    %v221 = vld [vmem:[#allocation9 + $0x38] sm:$0xff]
    %v222 = vld [vmem:[#allocation9 + $0x40] sm:$0xff]
    %v223 = vld [vmem:[#allocation9 + $0x48] sm:$0xff]
    %v224 = vld [vmem:[#allocation9 + $0x50] sm:$0xff]
    %v225 = vld [vmem:[#allocation9 + $0x58] sm:$0xff]
    %v226 = vld [vmem:[#allocation9 + $0x60] sm:$0xff]
    %v227 = vld [vmem:[#allocation9 + $0x68] sm:$0xff]
    %v228 = vld [vmem:[#allocation9 + $0x70] sm:$0xff]
    %v229 = vld [vmem:[#allocation9 + $0x78] sm:$0xff]
    %v230 = vld [vmem:[#allocation9 + $0x80] sm:$0xff]
    %v231 = vld [vmem:[#allocation9 + $0x88] sm:$0xff]
    %v232 = vld [vmem:[#allocation9 + $0x90] sm:$0xff]
    %v233 = vld [vmem:[#allocation9 + $0x98] sm:$0xff]
    %v234 = vld [vmem:[#allocation9 + $0xa0] sm:$0xff]
    %v235 = vld [vmem:[#allocation9 + $0xa8] sm:$0xff]
    %v236 = vld [vmem:[#allocation9 + $0xb0] sm:$0xff]
    %v237 = vld [vmem:[#allocation9 + $0xb8] sm:$0xff]
    %v238 = vld [vmem:[#allocation9 + $0xc0] sm:$0xff]
    %v239 = vld [vmem:[#allocation9 + $0xc8] sm:$0xff]
    %v240 = vld [vmem:[#allocation9 + $0xd0] sm:$0xff]
    %v241 = vld [vmem:[#allocation9 + $0xd8] sm:$0xff]
    %v242 = vld [vmem:[#allocation9 + $0xe0] sm:$0xff]
    %v243 = vld [vmem:[#allocation9 + $0xe8] sm:$0xff]
    %v244 = vld [vmem:[#allocation9 + $0xf0] sm:$0xff]
    %v245 = vld [vmem:[#allocation9 + $0xf8] sm:$0xff]
    %v278 = vunpack.c.l.b16 %v214
    %v279 = vunpack.c.h.b16 %v214
    %v280 = vunpack.c.l.b16 %v215
    %v281 = vunpack.c.h.b16 %v215
    %v282 = vunpack.c.l.b16 %v216
    %v283 = vunpack.c.h.b16 %v216
    %v284 = vunpack.c.l.b16 %v217
    %v285 = vunpack.c.h.b16 %v217
    %v286 = vunpack.c.l.b16 %v218
    %v287 = vunpack.c.h.b16 %v218
    %v288 = vunpack.c.l.b16 %v219
    %v289 = vunpack.c.h.b16 %v219
    %v290 = vunpack.c.l.b16 %v220
    %v291 = vunpack.c.h.b16 %v220
    %v292 = vunpack.c.l.b16 %v221
    %v293 = vunpack.c.h.b16 %v221
    %v294 = vunpack.c.l.b16 %v222
    %v295 = vunpack.c.h.b16 %v222
    %v296 = vunpack.c.l.b16 %v223
    %v297 = vunpack.c.h.b16 %v223
    %v298 = vunpack.c.l.b16 %v224
    %v299 = vunpack.c.h.b16 %v224
    %v300 = vunpack.c.l.b16 %v225
    %v301 = vunpack.c.h.b16 %v225
    %v302 = vunpack.c.l.b16 %v226
    %v303 = vunpack.c.h.b16 %v226
    %v304 = vunpack.c.l.b16 %v227
    %v305 = vunpack.c.h.b16 %v227
    %v306 = vunpack.c.l.b16 %v228
    %v307 = vunpack.c.h.b16 %v228
    %v308 = vunpack.c.l.b16 %v229
    %v309 = vunpack.c.h.b16 %v229
    %v310 = vunpack.c.l.b16 %v230
    %v311 = vunpack.c.h.b16 %v230
    %v312 = vunpack.c.l.b16 %v231
    %v313 = vunpack.c.h.b16 %v231
    %v314 = vunpack.c.l.b16 %v232
    %v315 = vunpack.c.h.b16 %v232
    %v316 = vunpack.c.l.b16 %v233
    %v317 = vunpack.c.h.b16 %v233
    %v318 = vunpack.c.l.b16 %v234
    %v319 = vunpack.c.h.b16 %v234
    %v320 = vunpack.c.l.b16 %v235
    %v321 = vunpack.c.h.b16 %v235
    %v322 = vunpack.c.l.b16 %v236
    %v323 = vunpack.c.h.b16 %v236
    %v324 = vunpack.c.l.b16 %v237
    %v325 = vunpack.c.h.b16 %v237
    %v326 = vunpack.c.l.b16 %v238
    %v327 = vunpack.c.h.b16 %v238
    %v328 = vunpack.c.l.b16 %v239
    %v329 = vunpack.c.h.b16 %v239
    %v330 = vunpack.c.l.b16 %v240
    %v331 = vunpack.c.h.b16 %v240
    %v332 = vunpack.c.l.b16 %v241
    %v333 = vunpack.c.h.b16 %v241
    %v334 = vunpack.c.l.b16 %v242
    %v335 = vunpack.c.h.b16 %v242
    %v336 = vunpack.c.l.b16 %v243
    %v337 = vunpack.c.h.b16 %v243
    %v338 = vunpack.c.l.b16 %v244
    %v339 = vunpack.c.h.b16 %v244
    %v340 = vunpack.c.l.b16 %v245
    %v341 = vunpack.c.h.b16 %v245
    %v342 = vpack.c.b16 %v282, %v278
    %v343 = vpack.c.b16 %v283, %v279
    %v344 = vpack.c.b16 %v284, %v280
    %v345 = vpack.c.b16 %v285, %v281
    %v346 = vpack.c.b16 %v290, %v286
    %v347 = vpack.c.b16 %v291, %v287
    %v348 = vpack.c.b16 %v292, %v288
    %v349 = vpack.c.b16 %v293, %v289
    %v350 = vpack.c.b16 %v298, %v294
    %v351 = vpack.c.b16 %v299, %v295
    %v352 = vpack.c.b16 %v300, %v296
    %v353 = vpack.c.b16 %v301, %v297
    %v354 = vpack.c.b16 %v306, %v302
    %v355 = vpack.c.b16 %v307, %v303
    %v356 = vpack.c.b16 %v308, %v304
    %v357 = vpack.c.b16 %v309, %v305
    %v358 = vpack.c.b16 %v314, %v310
    %v359 = vpack.c.b16 %v315, %v311
    %v360 = vpack.c.b16 %v316, %v312
    %v361 = vpack.c.b16 %v317, %v313
    %v362 = vpack.c.b16 %v322, %v318
    %v363 = vpack.c.b16 %v323, %v319
    %v364 = vpack.c.b16 %v324, %v320
    %v365 = vpack.c.b16 %v325, %v321
    %v366 = vpack.c.b16 %v330, %v326
    %v367 = vpack.c.b16 %v331, %v327
    %v368 = vpack.c.b16 %v332, %v328
    %v369 = vpack.c.b16 %v333, %v329
    %v370 = vpack.c.b16 %v338, %v334
    %v371 = vpack.c.b16 %v339, %v335
    %v372 = vpack.c.b16 %v340, %v336
    %v373 = vpack.c.b16 %v341, %v337
    %406 = vmatprep.subr.bf16.mxu0 %v371
    %407 = vmatpush1.bf16.msra.mxu0 %v370
    %408 = vmatprep.subr.bf16.mxu0 %v367
    %409 = vmatpush1.bf16.msra.mxu0 %v366
    %410 = vmatprep.subr.bf16.mxu0 %v363
    %411 = vmatpush1.bf16.msra.mxu0 %v362
    %412 = vmatprep.subr.bf16.mxu0 %v359
    %413 = vmatpush1.bf16.msra.mxu0 %v358
    %414 = vmatprep.subr.bf16.mxu0 %v355
    %415 = vmatpush1.bf16.msra.mxu0 %v354
    %416 = vmatprep.subr.bf16.mxu0 %v351
    %417 = vmatpush1.bf16.msra.mxu0 %v350
    %418 = vmatprep.subr.bf16.mxu0 %v347
    %419 = vmatpush1.bf16.msra.mxu0 %v346
    %420 = vmatprep.subr.bf16.mxu0 %v343
    %421 = vmatpush1.bf16.msra.mxu0 %v342
    %422 = vmatprep.subr.bf16.mxu0 0
    %423 = vmatpush2.bf16.msra.mxu0 0
    %424 = vmatprep.subr.bf16.mxu0 0
    %425 = vmatpush2.bf16.msra.mxu0 0
    %426 = vmatprep.subr.bf16.mxu0 0
    %427 = vmatpush2.bf16.msra.mxu0 0
    %428 = vmatprep.subr.bf16.mxu0 0
    %429 = vmatpush2.bf16.msra.mxu0 0
    %430 = vmatprep.subr.bf16.mxu0 0
    %431 = vmatpush2.bf16.msra.mxu0 0
    %432 = vmatprep.subr.bf16.mxu0 0
    %433 = vmatpush2.bf16.msra.mxu0 0
    %434 = vmatprep.subr.bf16.mxu0 0
    %435 = vmatpush2.bf16.msra.mxu0 0
    %436 = vmatprep.subr.bf16.mxu0 0
    %437 = vmatpush2.bf16.msra.mxu0 0
    %438 = vmatprep.mubr.bf16.mxu0 0
    %439 = vmatmul.mubr.bf16.gmra.mxu0 %v213
    %v440 = vpop.f32.mrf.mxu0
    %v441 = vadd.f32 0.0, %v440
    %v442 = vpop.f32.mrf.mxu0
    %v443 = vadd.f32 0.0, %v442
    %v444 = vpop.f32.mrf.mxu0
    %v445 = vpop.f32.mrf.mxu0
    %446 = vdwg.mxu0
    %447 = vmatprep.subr.bf16.mxu0 %v373
    %448 = vmatpush1.bf16.msra.mxu0 %v372
    %449 = vmatprep.subr.bf16.mxu0 %v369
    %450 = vmatpush1.bf16.msra.mxu0 %v368
    %451 = vmatprep.subr.bf16.mxu0 %v365
    %452 = vmatpush1.bf16.msra.mxu0 %v364
    %453 = vmatprep.subr.bf16.mxu0 %v361
    %454 = vmatpush1.bf16.msra.mxu0 %v360
    %455 = vmatprep.subr.bf16.mxu0 %v357
    %456 = vmatpush1.bf16.msra.mxu0 %v356
    %457 = vmatprep.subr.bf16.mxu0 %v353
    %458 = vmatpush1.bf16.msra.mxu0 %v352
    %459 = vmatprep.subr.bf16.mxu0 %v349
    %460 = vmatpush1.bf16.msra.mxu0 %v348
    %461 = vmatprep.subr.bf16.mxu0 %v345
    %462 = vmatpush1.bf16.msra.mxu0 %v344
    %463 = vmatprep.subr.bf16.mxu0 0
    %464 = vmatpush2.bf16.msra.mxu0 0
    %465 = vmatprep.subr.bf16.mxu0 0
    %466 = vmatpush2.bf16.msra.mxu0 0
    %467 = vmatprep.subr.bf16.mxu0 0
    %468 = vmatpush2.bf16.msra.mxu0 0
    %469 = vmatprep.subr.bf16.mxu0 0
    %470 = vmatpush2.bf16.msra.mxu0 0
    %471 = vmatprep.subr.bf16.mxu0 0
    %472 = vmatpush2.bf16.msra.mxu0 0
    %473 = vmatprep.subr.bf16.mxu0 0
    %474 = vmatpush2.bf16.msra.mxu0 0
    %475 = vmatprep.subr.bf16.mxu0 0
    %476 = vmatpush2.bf16.msra.mxu0 0
    %477 = vmatprep.subr.bf16.mxu0 0
    %478 = vmatpush2.bf16.msra.mxu0 0
    %479 = vmatprep.mubr.bf16.mxu0 0
    %480 = vmatmul.mubr.bf16.gmra.mxu0 %v213
    %v481 = vpop.f32.mrf.mxu0
    %v482 = vadd.f32 0.0, %v481
    %v483 = vpop.f32.mrf.mxu0
    %v484 = vadd.f32 0.0, %v483
    %v485 = vpop.f32.mrf.mxu0
    %v486 = vpop.f32.mrf.mxu0
    %487 = vdwg.mxu0
    %v488 = vadd.f32 %v166, %v441
    %v489 = vadd.f32 %v168, %v443
    %v490 = vadd.f32 %v207, %v482
    %v491 = vadd.f32 %v209, %v484
    %v492 = vmul.f32 %v488, 0.5
    %v493 = vtanh.pop %v492
    %v494 = vmul.f32 %v493, 0.5
    %v495 = vadd.f32 %v494, 0.5
    %v496 = vmul.f32 %v489, 0.5
    %v497 = vtanh.pop %v496
    %v498 = vmul.f32 %v497, 0.5
    %v499 = vadd.f32 %v498, 0.5
    %v500 = vtanh.pop %v490
    %v501 = vmul.f32 %v491, 0.5
    %v502 = vtanh.pop %v501
    %v503 = vmul.f32 %v502, 0.5
    %v504 = vadd.f32 %v503, 0.5
    %v505 = vmul.f32 %v499, %v80
    %v506 = vmul.f32 %v495, %v500
    %v507 = vadd.f32 %v505, %v506
    %v508 = vtanh.pop %v507
    %v509 = vmul.f32 %v504, %v508
    %510 = vst [vmem:[#allocation10] sm:$0x3] %v509
    %s511 = scalar_lea.vmem [#allocation4], 1
    %v512 = vld [vmem:[%s511] sm:$0x1]
    %v513 = vld [vmem:[#allocation7] sm:$0xff]
    %v514 = vld [vmem:[#allocation7 + $0x8] sm:$0xff]
    %v515 = vld [vmem:[#allocation7 + $0x10] sm:$0xff]
    %v516 = vld [vmem:[#allocation7 + $0x18] sm:$0xff]
    %v521 = vunpack.c.l.b16 %v513
    %v522 = vunpack.c.h.b16 %v513
    %v523 = vunpack.c.l.b16 %v514
    %v524 = vunpack.c.h.b16 %v514
    %v525 = vunpack.c.l.b16 %v515
    %v526 = vunpack.c.h.b16 %v515
    %v527 = vunpack.c.l.b16 %v516
    %v528 = vunpack.c.h.b16 %v516
    %v529 = vpack.c.b16 %v525, %v521
    %v530 = vpack.c.b16 %v526, %v522
    %v531 = vpack.c.b16 %v527, %v523
    %v532 = vpack.c.b16 %v528, %v524
    %v538 = vsel %vm127, %v512, 0
    %540 = vmatprep.subr.bf16.mxu0 0
    %541 = vmatpush1.bf16.msra.mxu0 0
    %542 = vmatprep.subr.bf16.mxu0 0
    %543 = vmatpush1.bf16.msra.mxu0 0
    %544 = vmatprep.subr.bf16.mxu0 0
    %545 = vmatpush1.bf16.msra.mxu0 0
    %546 = vmatprep.subr.bf16.mxu0 0
    %547 = vmatpush1.bf16.msra.mxu0 0
    %548 = vmatprep.subr.bf16.mxu0 0
    %549 = vmatpush1.bf16.msra.mxu0 0
    %550 = vmatprep.subr.bf16.mxu0 0
    %551 = vmatpush1.bf16.msra.mxu0 0
    %552 = vmatprep.subr.bf16.mxu0 0
    %553 = vmatpush1.bf16.msra.mxu0 0
    %554 = vmatprep.subr.bf16.mxu0 %v530
    %555 = vmatpush1.bf16.msra.mxu0 %v529
    %556 = vmatprep.subr.bf16.mxu0 0
    %557 = vmatpush2.bf16.msra.mxu0 0
    %558 = vmatprep.subr.bf16.mxu0 0
    %559 = vmatpush2.bf16.msra.mxu0 0
    %560 = vmatprep.subr.bf16.mxu0 0
    %561 = vmatpush2.bf16.msra.mxu0 0
    %562 = vmatprep.subr.bf16.mxu0 0
    %563 = vmatpush2.bf16.msra.mxu0 0
    %564 = vmatprep.subr.bf16.mxu0 0
    %565 = vmatpush2.bf16.msra.mxu0 0
    %566 = vmatprep.subr.bf16.mxu0 0
    %567 = vmatpush2.bf16.msra.mxu0 0
    %568 = vmatprep.subr.bf16.mxu0 0
    %569 = vmatpush2.bf16.msra.mxu0 0
    %570 = vmatprep.subr.bf16.mxu0 0
    %571 = vmatpush2.bf16.msra.mxu0 0
    %572 = vmatprep.mubr.bf16.mxu0 0
    %573 = vmatmul.mubr.bf16.gmra.mxu0 %v538
    %v574 = vpop.f32.mrf.mxu0
    %v575 = vadd.f32 %v90, %v574
    %v576 = vpop.f32.mrf.mxu0
    %v577 = vadd.f32 %v94, %v576
    %v578 = vpop.f32.mrf.mxu0
    %v579 = vpop.f32.mrf.mxu0
    %580 = vdwg.mxu0
    %581 = vmatprep.subr.bf16.mxu0 0
    %582 = vmatpush1.bf16.msra.mxu0 0
    %583 = vmatprep.subr.bf16.mxu0 0
    %584 = vmatpush1.bf16.msra.mxu0 0
    %585 = vmatprep.subr.bf16.mxu0 0
    %586 = vmatpush1.bf16.msra.mxu0 0
    %587 = vmatprep.subr.bf16.mxu0 0
    %588 = vmatpush1.bf16.msra.mxu0 0
    %589 = vmatprep.subr.bf16.mxu0 0
    %590 = vmatpush1.bf16.msra.mxu0 0
    %591 = vmatprep.subr.bf16.mxu0 0
    %592 = vmatpush1.bf16.msra.mxu0 0
    %593 = vmatprep.subr.bf16.mxu0 0
    %594 = vmatpush1.bf16.msra.mxu0 0
    %595 = vmatprep.subr.bf16.mxu0 %v532
    %596 = vmatpush1.bf16.msra.mxu0 %v531
    %597 = vmatprep.subr.bf16.mxu0 0
    %598 = vmatpush2.bf16.msra.mxu0 0
    %599 = vmatprep.subr.bf16.mxu0 0
    %600 = vmatpush2.bf16.msra.mxu0 0
    %601 = vmatprep.subr.bf16.mxu0 0
    %602 = vmatpush2.bf16.msra.mxu0 0
    %603 = vmatprep.subr.bf16.mxu0 0
    %604 = vmatpush2.bf16.msra.mxu0 0
    %605 = vmatprep.subr.bf16.mxu0 0
    %606 = vmatpush2.bf16.msra.mxu0 0
    %607 = vmatprep.subr.bf16.mxu0 0
    %608 = vmatpush2.bf16.msra.mxu0 0
    %609 = vmatprep.subr.bf16.mxu0 0
    %610 = vmatpush2.bf16.msra.mxu0 0
    %611 = vmatprep.subr.bf16.mxu0 0
    %612 = vmatpush2.bf16.msra.mxu0 0
    %613 = vmatprep.mubr.bf16.mxu0 0
    %614 = vmatmul.mubr.bf16.gmra.mxu0 %v538
    %v615 = vpop.f32.mrf.mxu0
    %v616 = vadd.f32 %v98, %v615
    %v617 = vpop.f32.mrf.mxu0
    %v618 = vadd.f32 %v102, %v617
    %v619 = vpop.f32.mrf.mxu0
    %v620 = vpop.f32.mrf.mxu0
    %621 = vdwg.mxu0
    %v622 = vpack.c.bf16 %v509, %v509
    %v623 = vld [vmem:[#allocation9] sm:$0xff]
    %v624 = vld [vmem:[#allocation9 + $0x8] sm:$0xff]
    %v625 = vld [vmem:[#allocation9 + $0x10] sm:$0xff]
    %v626 = vld [vmem:[#allocation9 + $0x18] sm:$0xff]
    %v627 = vld [vmem:[#allocation9 + $0x20] sm:$0xff]
    %v628 = vld [vmem:[#allocation9 + $0x28] sm:$0xff]
    %v629 = vld [vmem:[#allocation9 + $0x30] sm:$0xff]
    %v630 = vld [vmem:[#allocation9 + $0x38] sm:$0xff]
    %v631 = vld [vmem:[#allocation9 + $0x40] sm:$0xff]
    %v632 = vld [vmem:[#allocation9 + $0x48] sm:$0xff]
    %v633 = vld [vmem:[#allocation9 + $0x50] sm:$0xff]
    %v634 = vld [vmem:[#allocation9 + $0x58] sm:$0xff]
    %v635 = vld [vmem:[#allocation9 + $0x60] sm:$0xff]
    %v636 = vld [vmem:[#allocation9 + $0x68] sm:$0xff]
    %v637 = vld [vmem:[#allocation9 + $0x70] sm:$0xff]
    %v638 = vld [vmem:[#allocation9 + $0x78] sm:$0xff]
    %v639 = vld [vmem:[#allocation9 + $0x80] sm:$0xff]
    %v640 = vld [vmem:[#allocation9 + $0x88] sm:$0xff]
    %v641 = vld [vmem:[#allocation9 + $0x90] sm:$0xff]
    %v642 = vld [vmem:[#allocation9 + $0x98] sm:$0xff]
    %v643 = vld [vmem:[#allocation9 + $0xa0] sm:$0xff]
    %v644 = vld [vmem:[#allocation9 + $0xa8] sm:$0xff]
    %v645 = vld [vmem:[#allocation9 + $0xb0] sm:$0xff]
    %v646 = vld [vmem:[#allocation9 + $0xb8] sm:$0xff]
    %v647 = vld [vmem:[#allocation9 + $0xc0] sm:$0xff]
    %v648 = vld [vmem:[#allocation9 + $0xc8] sm:$0xff]
    %v649 = vld [vmem:[#allocation9 + $0xd0] sm:$0xff]
    %v650 = vld [vmem:[#allocation9 + $0xd8] sm:$0xff]
    %v651 = vld [vmem:[#allocation9 + $0xe0] sm:$0xff]
    %v652 = vld [vmem:[#allocation9 + $0xe8] sm:$0xff]
    %v653 = vld [vmem:[#allocation9 + $0xf0] sm:$0xff]
    %v654 = vld [vmem:[#allocation9 + $0xf8] sm:$0xff]
    %v687 = vunpack.c.l.b16 %v623
    %v688 = vunpack.c.h.b16 %v623
    %v689 = vunpack.c.l.b16 %v624
    %v690 = vunpack.c.h.b16 %v624
    %v691 = vunpack.c.l.b16 %v625
    %v692 = vunpack.c.h.b16 %v625
    %v693 = vunpack.c.l.b16 %v626
    %v694 = vunpack.c.h.b16 %v626
    %v695 = vunpack.c.l.b16 %v627
    %v696 = vunpack.c.h.b16 %v627
    %v697 = vunpack.c.l.b16 %v628
    %v698 = vunpack.c.h.b16 %v628
    %v699 = vunpack.c.l.b16 %v629
    %v700 = vunpack.c.h.b16 %v629
    %v701 = vunpack.c.l.b16 %v630
    %v702 = vunpack.c.h.b16 %v630
    %v703 = vunpack.c.l.b16 %v631
    %v704 = vunpack.c.h.b16 %v631
    %v705 = vunpack.c.l.b16 %v632
    %v706 = vunpack.c.h.b16 %v632
    %v707 = vunpack.c.l.b16 %v633
    %v708 = vunpack.c.h.b16 %v633
    %v709 = vunpack.c.l.b16 %v634
    %v710 = vunpack.c.h.b16 %v634
    %v711 = vunpack.c.l.b16 %v635
    %v712 = vunpack.c.h.b16 %v635
    %v713 = vunpack.c.l.b16 %v636
    %v714 = vunpack.c.h.b16 %v636
    %v715 = vunpack.c.l.b16 %v637
    %v716 = vunpack.c.h.b16 %v637
    %v717 = vunpack.c.l.b16 %v638
    %v718 = vunpack.c.h.b16 %v638
    %v719 = vunpack.c.l.b16 %v639
    %v720 = vunpack.c.h.b16 %v639
    %v721 = vunpack.c.l.b16 %v640
    %v722 = vunpack.c.h.b16 %v640
    %v723 = vunpack.c.l.b16 %v641
    %v724 = vunpack.c.h.b16 %v641
    %v725 = vunpack.c.l.b16 %v642
    %v726 = vunpack.c.h.b16 %v642
    %v727 = vunpack.c.l.b16 %v643
    %v728 = vunpack.c.h.b16 %v643
    %v729 = vunpack.c.l.b16 %v644
    %v730 = vunpack.c.h.b16 %v644
    %v731 = vunpack.c.l.b16 %v645
    %v732 = vunpack.c.h.b16 %v645
    %v733 = vunpack.c.l.b16 %v646
    %v734 = vunpack.c.h.b16 %v646
    %v735 = vunpack.c.l.b16 %v647
    %v736 = vunpack.c.h.b16 %v647
    %v737 = vunpack.c.l.b16 %v648
    %v738 = vunpack.c.h.b16 %v648
    %v739 = vunpack.c.l.b16 %v649
    %v740 = vunpack.c.h.b16 %v649
    %v741 = vunpack.c.l.b16 %v650
    %v742 = vunpack.c.h.b16 %v650
    %v743 = vunpack.c.l.b16 %v651
    %v744 = vunpack.c.h.b16 %v651
    %v745 = vunpack.c.l.b16 %v652
    %v746 = vunpack.c.h.b16 %v652
    %v747 = vunpack.c.l.b16 %v653
    %v748 = vunpack.c.h.b16 %v653
    %v749 = vunpack.c.l.b16 %v654
    %v750 = vunpack.c.h.b16 %v654
    %v751 = vpack.c.b16 %v691, %v687
    %v752 = vpack.c.b16 %v692, %v688
    %v753 = vpack.c.b16 %v693, %v689
    %v754 = vpack.c.b16 %v694, %v690
    %v755 = vpack.c.b16 %v699, %v695
    %v756 = vpack.c.b16 %v700, %v696
    %v757 = vpack.c.b16 %v701, %v697
    %v758 = vpack.c.b16 %v702, %v698
    %v759 = vpack.c.b16 %v707, %v703
    %v760 = vpack.c.b16 %v708, %v704
    %v761 = vpack.c.b16 %v709, %v705
    %v762 = vpack.c.b16 %v710, %v706
    %v763 = vpack.c.b16 %v715, %v711
    %v764 = vpack.c.b16 %v716, %v712
    %v765 = vpack.c.b16 %v717, %v713
    %v766 = vpack.c.b16 %v718, %v714
    %v767 = vpack.c.b16 %v723, %v719
    %v768 = vpack.c.b16 %v724, %v720
    %v769 = vpack.c.b16 %v725, %v721
    %v770 = vpack.c.b16 %v726, %v722
    %v771 = vpack.c.b16 %v731, %v727
    %v772 = vpack.c.b16 %v732, %v728
    %v773 = vpack.c.b16 %v733, %v729
    %v774 = vpack.c.b16 %v734, %v730
    %v775 = vpack.c.b16 %v739, %v735
    %v776 = vpack.c.b16 %v740, %v736
    %v777 = vpack.c.b16 %v741, %v737
    %v778 = vpack.c.b16 %v742, %v738
    %v779 = vpack.c.b16 %v747, %v743
    %v780 = vpack.c.b16 %v748, %v744
    %v781 = vpack.c.b16 %v749, %v745
    %v782 = vpack.c.b16 %v750, %v746
    %815 = vmatprep.subr.bf16.mxu0 %v780
    %816 = vmatpush1.bf16.msra.mxu0 %v779
    %817 = vmatprep.subr.bf16.mxu0 %v776
    %818 = vmatpush1.bf16.msra.mxu0 %v775
    %819 = vmatprep.subr.bf16.mxu0 %v772
    %820 = vmatpush1.bf16.msra.mxu0 %v771
    %821 = vmatprep.subr.bf16.mxu0 %v768
    %822 = vmatpush1.bf16.msra.mxu0 %v767
    %823 = vmatprep.subr.bf16.mxu0 %v764
    %824 = vmatpush1.bf16.msra.mxu0 %v763
    %825 = vmatprep.subr.bf16.mxu0 %v760
    %826 = vmatpush1.bf16.msra.mxu0 %v759
    %827 = vmatprep.subr.bf16.mxu0 %v756
    %828 = vmatpush1.bf16.msra.mxu0 %v755
    %829 = vmatprep.subr.bf16.mxu0 %v752
    %830 = vmatpush1.bf16.msra.mxu0 %v751
    %831 = vmatprep.subr.bf16.mxu0 0
    %832 = vmatpush2.bf16.msra.mxu0 0
    %833 = vmatprep.subr.bf16.mxu0 0
    %834 = vmatpush2.bf16.msra.mxu0 0
    %835 = vmatprep.subr.bf16.mxu0 0
    %836 = vmatpush2.bf16.msra.mxu0 0
    %837 = vmatprep.subr.bf16.mxu0 0
    %838 = vmatpush2.bf16.msra.mxu0 0
    %839 = vmatprep.subr.bf16.mxu0 0
    %840 = vmatpush2.bf16.msra.mxu0 0
    %841 = vmatprep.subr.bf16.mxu0 0
    %842 = vmatpush2.bf16.msra.mxu0 0
    %843 = vmatprep.subr.bf16.mxu0 0
    %844 = vmatpush2.bf16.msra.mxu0 0
    %845 = vmatprep.subr.bf16.mxu0 0
    %846 = vmatpush2.bf16.msra.mxu0 0
    %847 = vmatprep.mubr.bf16.mxu0 0
    %848 = vmatmul.mubr.bf16.gmra.mxu0 %v622
    %v849 = vpop.f32.mrf.mxu0
    %v850 = vadd.f32 0.0, %v849
    %v851 = vpop.f32.mrf.mxu0
    %v852 = vadd.f32 0.0, %v851
    %v853 = vpop.f32.mrf.mxu0
    %v854 = vpop.f32.mrf.mxu0
    %855 = vdwg.mxu0
    %856 = vmatprep.subr.bf16.mxu0 %v782
    %857 = vmatpush1.bf16.msra.mxu0 %v781
    %858 = vmatprep.subr.bf16.mxu0 %v778
    %859 = vmatpush1.bf16.msra.mxu0 %v777
    %860 = vmatprep.subr.bf16.mxu0 %v774
    %861 = vmatpush1.bf16.msra.mxu0 %v773
    %862 = vmatprep.subr.bf16.mxu0 %v770
    %863 = vmatpush1.bf16.msra.mxu0 %v769
    %864 = vmatprep.subr.bf16.mxu0 %v766
    %865 = vmatpush1.bf16.msra.mxu0 %v765
    %866 = vmatprep.subr.bf16.mxu0 %v762
    %867 = vmatpush1.bf16.msra.mxu0 %v761
    %868 = vmatprep.subr.bf16.mxu0 %v758
    %869 = vmatpush1.bf16.msra.mxu0 %v757
    %870 = vmatprep.subr.bf16.mxu0 %v754
    %871 = vmatpush1.bf16.msra.mxu0 %v753
    %872 = vmatprep.subr.bf16.mxu0 0
    %873 = vmatpush2.bf16.msra.mxu0 0
    %874 = vmatprep.subr.bf16.mxu0 0
    %875 = vmatpush2.bf16.msra.mxu0 0
    %876 = vmatprep.subr.bf16.mxu0 0
    %877 = vmatpush2.bf16.msra.mxu0 0
    %878 = vmatprep.subr.bf16.mxu0 0
    %879 = vmatpush2.bf16.msra.mxu0 0
    %880 = vmatprep.subr.bf16.mxu0 0
    %881 = vmatpush2.bf16.msra.mxu0 0
    %882 = vmatprep.subr.bf16.mxu0 0
    %883 = vmatpush2.bf16.msra.mxu0 0
    %884 = vmatprep.subr.bf16.mxu0 0
    %885 = vmatpush2.bf16.msra.mxu0 0
    %886 = vmatprep.subr.bf16.mxu0 0
    %887 = vmatpush2.bf16.msra.mxu0 0
    %888 = vmatprep.mubr.bf16.mxu0 0
    %889 = vmatmul.mubr.bf16.gmra.mxu0 %v622
    %v890 = vpop.f32.mrf.mxu0
    %v891 = vadd.f32 0.0, %v890
    %v892 = vpop.f32.mrf.mxu0
    %v893 = vadd.f32 0.0, %v892
    %v894 = vpop.f32.mrf.mxu0
    %v895 = vpop.f32.mrf.mxu0
    %896 = vdwg.mxu0
    %v897 = vadd.f32 %v575, %v850
    %v898 = vadd.f32 %v577, %v852
    %v899 = vadd.f32 %v616, %v891
    %v900 = vadd.f32 %v618, %v893
    %v901 = vmul.f32 %v897, 0.5
    %v902 = vtanh.pop %v901
    %v903 = vmul.f32 %v902, 0.5
    %v904 = vadd.f32 %v903, 0.5
    %v905 = vmul.f32 %v898, 0.5
    %v906 = vtanh.pop %v905
    %v907 = vmul.f32 %v906, 0.5
    %v908 = vadd.f32 %v907, 0.5
    %v909 = vtanh.pop %v899
    %v910 = vmul.f32 %v900, 0.5
    %v911 = vtanh.pop %v910
    %v912 = vmul.f32 %v911, 0.5
    %v913 = vadd.f32 %v912, 0.5
    %v914 = vmul.f32 %v908, %v507
    %v915 = vmul.f32 %v904, %v909
    %v916 = vadd.f32 %v914, %v915
    %v917 = vtanh.pop %v916
    %v918 = vmul.f32 %v913, %v917
    %s919 = scalar_lea.vmem [#allocation10], 2
    %920 = vst [vmem:[%s919] sm:$0x3] %v918
    %s921 = scalar_lea.vmem [#allocation4], 2
    %v922 = vld [vmem:[%s921] sm:$0x1]
    %v923 = vld [vmem:[#allocation7] sm:$0xff]
    %v924 = vld [vmem:[#allocation7 + $0x8] sm:$0xff]
    %v925 = vld [vmem:[#allocation7 + $0x10] sm:$0xff]
    %v926 = vld [vmem:[#allocation7 + $0x18] sm:$0xff]
    %v931 = vunpack.c.l.b16 %v923
    %v932 = vunpack.c.h.b16 %v923
    %v933 = vunpack.c.l.b16 %v924
    %v934 = vunpack.c.h.b16 %v924
    %v935 = vunpack.c.l.b16 %v925
    %v936 = vunpack.c.h.b16 %v925
    %v937 = vunpack.c.l.b16 %v926
    %v938 = vunpack.c.h.b16 %v926
    %v939 = vpack.c.b16 %v935, %v931
    %v940 = vpack.c.b16 %v936, %v932
    %v941 = vpack.c.b16 %v937, %v933
    %v942 = vpack.c.b16 %v938, %v934
    %v948 = vsel %vm127, %v922, 0
    %950 = vmatprep.subr.bf16.mxu0 0
    %951 = vmatpush1.bf16.msra.mxu0 0
    %952 = vmatprep.subr.bf16.mxu0 0
    %953 = vmatpush1.bf16.msra.mxu0 0
    %954 = vmatprep.subr.bf16.mxu0 0
    %955 = vmatpush1.bf16.msra.mxu0 0
    %956 = vmatprep.subr.bf16.mxu0 0
    %957 = vmatpush1.bf16.msra.mxu0 0
    %958 = vmatprep.subr.bf16.mxu0 0
    %959 = vmatpush1.bf16.msra.mxu0 0
    %960 = vmatprep.subr.bf16.mxu0 0
    %961 = vmatpush1.bf16.msra.mxu0 0
    %962 = vmatprep.subr.bf16.mxu0 0
    %963 = vmatpush1.bf16.msra.mxu0 0
    %964 = vmatprep.subr.bf16.mxu0 %v940
    %965 = vmatpush1.bf16.msra.mxu0 %v939
    %966 = vmatprep.subr.bf16.mxu0 0
    %967 = vmatpush2.bf16.msra.mxu0 0
    %968 = vmatprep.subr.bf16.mxu0 0
    %969 = vmatpush2.bf16.msra.mxu0 0
    %970 = vmatprep.subr.bf16.mxu0 0
    %971 = vmatpush2.bf16.msra.mxu0 0
    %972 = vmatprep.subr.bf16.mxu0 0
    %973 = vmatpush2.bf16.msra.mxu0 0
    %974 = vmatprep.subr.bf16.mxu0 0
    %975 = vmatpush2.bf16.msra.mxu0 0
    %976 = vmatprep.subr.bf16.mxu0 0
    %977 = vmatpush2.bf16.msra.mxu0 0
    %978 = vmatprep.subr.bf16.mxu0 0
    %979 = vmatpush2.bf16.msra.mxu0 0
    %980 = vmatprep.subr.bf16.mxu0 0
    %981 = vmatpush2.bf16.msra.mxu0 0
    %982 = vmatprep.mubr.bf16.mxu0 0
    %983 = vmatmul.mubr.bf16.gmra.mxu0 %v948
    %v984 = vpop.f32.mrf.mxu0
    %v985 = vadd.f32 %v90, %v984
    %v986 = vpop.f32.mrf.mxu0
    %v987 = vadd.f32 %v94, %v986
    %v988 = vpop.f32.mrf.mxu0
    %v989 = vpop.f32.mrf.mxu0
    %990 = vdwg.mxu0
    %991 = vmatprep.subr.bf16.mxu0 0
    %992 = vmatpush1.bf16.msra.mxu0 0
    %993 = vmatprep.subr.bf16.mxu0 0
    %994 = vmatpush1.bf16.msra.mxu0 0
    %995 = vmatprep.subr.bf16.mxu0 0
    %996 = vmatpush1.bf16.msra.mxu0 0
    %997 = vmatprep.subr.bf16.mxu0 0
    %998 = vmatpush1.bf16.msra.mxu0 0
    %999 = vmatprep.subr.bf16.mxu0 0
    %1000 = vmatpush1.bf16.msra.mxu0 0
    %1001 = vmatprep.subr.bf16.mxu0 0
    %1002 = vmatpush1.bf16.msra.mxu0 0
    %1003 = vmatprep.subr.bf16.mxu0 0
    %1004 = vmatpush1.bf16.msra.mxu0 0
    %1005 = vmatprep.subr.bf16.mxu0 %v942
    %1006 = vmatpush1.bf16.msra.mxu0 %v941
    %1007 = vmatprep.subr.bf16.mxu0 0
    %1008 = vmatpush2.bf16.msra.mxu0 0
    %1009 = vmatprep.subr.bf16.mxu0 0
    %1010 = vmatpush2.bf16.msra.mxu0 0
    %1011 = vmatprep.subr.bf16.mxu0 0
    %1012 = vmatpush2.bf16.msra.mxu0 0
    %1013 = vmatprep.subr.bf16.mxu0 0
    %1014 = vmatpush2.bf16.msra.mxu0 0
    %1015 = vmatprep.subr.bf16.mxu0 0
    %1016 = vmatpush2.bf16.msra.mxu0 0
    %1017 = vmatprep.subr.bf16.mxu0 0
    %1018 = vmatpush2.bf16.msra.mxu0 0
    %1019 = vmatprep.subr.bf16.mxu0 0
    %1020 = vmatpush2.bf16.msra.mxu0 0
    %1021 = vmatprep.subr.bf16.mxu0 0
    %1022 = vmatpush2.bf16.msra.mxu0 0
    %1023 = vmatprep.mubr.bf16.mxu0 0
    %1024 = vmatmul.mubr.bf16.gmra.mxu0 %v948
    %v1025 = vpop.f32.mrf.mxu0
    %v1026 = vadd.f32 %v98, %v1025
    %v1027 = vpop.f32.mrf.mxu0
    %v1028 = vadd.f32 %v102, %v1027
    %v1029 = vpop.f32.mrf.mxu0
    %v1030 = vpop.f32.mrf.mxu0
    %1031 = vdwg.mxu0
    %v1032 = vpack.c.bf16 %v918, %v918
    %v1033 = vld [vmem:[#allocation9] sm:$0xff]
    %v1034 = vld [vmem:[#allocation9 + $0x8] sm:$0xff]
    %v1035 = vld [vmem:[#allocation9 + $0x10] sm:$0xff]
    %v1036 = vld [vmem:[#allocation9 + $0x18] sm:$0xff]
    %v1037 = vld [vmem:[#allocation9 + $0x20] sm:$0xff]
    %v1038 = vld [vmem:[#allocation9 + $0x28] sm:$0xff]
    %v1039 = vld [vmem:[#allocation9 + $0x30] sm:$0xff]
    %v1040 = vld [vmem:[#allocation9 + $0x38] sm:$0xff]
    %v1041 = vld [vmem:[#allocation9 + $0x40] sm:$0xff]
    %v1042 = vld [vmem:[#allocation9 + $0x48] sm:$0xff]
    %v1043 = vld [vmem:[#allocation9 + $0x50] sm:$0xff]
    %v1044 = vld [vmem:[#allocation9 + $0x58] sm:$0xff]
    %v1045 = vld [vmem:[#allocation9 + $0x60] sm:$0xff]
    %v1046 = vld [vmem:[#allocation9 + $0x68] sm:$0xff]
    %v1047 = vld [vmem:[#allocation9 + $0x70] sm:$0xff]
    %v1048 = vld [vmem:[#allocation9 + $0x78] sm:$0xff]
    %v1049 = vld [vmem:[#allocation9 + $0x80] sm:$0xff]
    %v1050 = vld [vmem:[#allocation9 + $0x88] sm:$0xff]
    %v1051 = vld [vmem:[#allocation9 + $0x90] sm:$0xff]
    %v1052 = vld [vmem:[#allocation9 + $0x98] sm:$0xff]
    %v1053 = vld [vmem:[#allocation9 + $0xa0] sm:$0xff]
    %v1054 = vld [vmem:[#allocation9 + $0xa8] sm:$0xff]
    %v1055 = vld [vmem:[#allocation9 + $0xb0] sm:$0xff]
    %v1056 = vld [vmem:[#allocation9 + $0xb8] sm:$0xff]
    %v1057 = vld [vmem:[#allocation9 + $0xc0] sm:$0xff]
    %v1058 = vld [vmem:[#allocation9 + $0xc8] sm:$0xff]
    %v1059 = vld [vmem:[#allocation9 + $0xd0] sm:$0xff]
    %v1060 = vld [vmem:[#allocation9 + $0xd8] sm:$0xff]
    %v1061 = vld [vmem:[#allocation9 + $0xe0] sm:$0xff]
    %v1062 = vld [vmem:[#allocation9 + $0xe8] sm:$0xff]
    %v1063 = vld [vmem:[#allocation9 + $0xf0] sm:$0xff]
    %v1064 = vld [vmem:[#allocation9 + $0xf8] sm:$0xff]
    %v1097 = vunpack.c.l.b16 %v1033
    %v1098 = vunpack.c.h.b16 %v1033
    %v1099 = vunpack.c.l.b16 %v1034
    %v1100 = vunpack.c.h.b16 %v1034
    %v1101 = vunpack.c.l.b16 %v1035
    %v1102 = vunpack.c.h.b16 %v1035
    %v1103 = vunpack.c.l.b16 %v1036
    %v1104 = vunpack.c.h.b16 %v1036
    %v1105 = vunpack.c.l.b16 %v1037
    %v1106 = vunpack.c.h.b16 %v1037
    %v1107 = vunpack.c.l.b16 %v1038
    %v1108 = vunpack.c.h.b16 %v1038
    %v1109 = vunpack.c.l.b16 %v1039
    %v1110 = vunpack.c.h.b16 %v1039
    %v1111 = vunpack.c.l.b16 %v1040
    %v1112 = vunpack.c.h.b16 %v1040
    %v1113 = vunpack.c.l.b16 %v1041
    %v1114 = vunpack.c.h.b16 %v1041
    %v1115 = vunpack.c.l.b16 %v1042
    %v1116 = vunpack.c.h.b16 %v1042
    %v1117 = vunpack.c.l.b16 %v1043
    %v1118 = vunpack.c.h.b16 %v1043
    %v1119 = vunpack.c.l.b16 %v1044
    %v1120 = vunpack.c.h.b16 %v1044
    %v1121 = vunpack.c.l.b16 %v1045
    %v1122 = vunpack.c.h.b16 %v1045
    %v1123 = vunpack.c.l.b16 %v1046
    %v1124 = vunpack.c.h.b16 %v1046
    %v1125 = vunpack.c.l.b16 %v1047
    %v1126 = vunpack.c.h.b16 %v1047
    %v1127 = vunpack.c.l.b16 %v1048
    %v1128 = vunpack.c.h.b16 %v1048
    %v1129 = vunpack.c.l.b16 %v1049
    %v1130 = vunpack.c.h.b16 %v1049
    %v1131 = vunpack.c.l.b16 %v1050
    %v1132 = vunpack.c.h.b16 %v1050
    %v1133 = vunpack.c.l.b16 %v1051
    %v1134 = vunpack.c.h.b16 %v1051
    %v1135 = vunpack.c.l.b16 %v1052
    %v1136 = vunpack.c.h.b16 %v1052
    %v1137 = vunpack.c.l.b16 %v1053
    %v1138 = vunpack.c.h.b16 %v1053
    %v1139 = vunpack.c.l.b16 %v1054
    %v1140 = vunpack.c.h.b16 %v1054
    %v1141 = vunpack.c.l.b16 %v1055
    %v1142 = vunpack.c.h.b16 %v1055
    %v1143 = vunpack.c.l.b16 %v1056
    %v1144 = vunpack.c.h.b16 %v1056
    %v1145 = vunpack.c.l.b16 %v1057
    %v1146 = vunpack.c.h.b16 %v1057
    %v1147 = vunpack.c.l.b16 %v1058
    %v1148 = vunpack.c.h.b16 %v1058
    %v1149 = vunpack.c.l.b16 %v1059
    %v1150 = vunpack.c.h.b16 %v1059
    %v1151 = vunpack.c.l.b16 %v1060
    %v1152 = vunpack.c.h.b16 %v1060
    %v1153 = vunpack.c.l.b16 %v1061
    %v1154 = vunpack.c.h.b16 %v1061
    %v1155 = vunpack.c.l.b16 %v1062
    %v1156 = vunpack.c.h.b16 %v1062
    %v1157 = vunpack.c.l.b16 %v1063
    %v1158 = vunpack.c.h.b16 %v1063
    %v1159 = vunpack.c.l.b16 %v1064
    %v1160 = vunpack.c.h.b16 %v1064
    %v1161 = vpack.c.b16 %v1101, %v1097
    %v1162 = vpack.c.b16 %v1102, %v1098
    %v1163 = vpack.c.b16 %v1103, %v1099
    %v1164 = vpack.c.b16 %v1104, %v1100
    %v1165 = vpack.c.b16 %v1109, %v1105
    %v1166 = vpack.c.b16 %v1110, %v1106
    %v1167 = vpack.c.b16 %v1111, %v1107
    %v1168 = vpack.c.b16 %v1112, %v1108
    %v1169 = vpack.c.b16 %v1117, %v1113
    %v1170 = vpack.c.b16 %v1118, %v1114
    %v1171 = vpack.c.b16 %v1119, %v1115
    %v1172 = vpack.c.b16 %v1120, %v1116
    %v1173 = vpack.c.b16 %v1125, %v1121
    %v1174 = vpack.c.b16 %v1126, %v1122
    %v1175 = vpack.c.b16 %v1127, %v1123
    %v1176 = vpack.c.b16 %v1128, %v1124
    %v1177 = vpack.c.b16 %v1133, %v1129
    %v1178 = vpack.c.b16 %v1134, %v1130
    %v1179 = vpack.c.b16 %v1135, %v1131
    %v1180 = vpack.c.b16 %v1136, %v1132
    %v1181 = vpack.c.b16 %v1141, %v1137
    %v1182 = vpack.c.b16 %v1142, %v1138
    %v1183 = vpack.c.b16 %v1143, %v1139
    %v1184 = vpack.c.b16 %v1144, %v1140
    %v1185 = vpack.c.b16 %v1149, %v1145
    %v1186 = vpack.c.b16 %v1150, %v1146
    %v1187 = vpack.c.b16 %v1151, %v1147
    %v1188 = vpack.c.b16 %v1152, %v1148
    %v1189 = vpack.c.b16 %v1157, %v1153
    %v1190 = vpack.c.b16 %v1158, %v1154
    %v1191 = vpack.c.b16 %v1159, %v1155
    %v1192 = vpack.c.b16 %v1160, %v1156
    %1225 = vmatprep.subr.bf16.mxu0 %v1190
    %1226 = vmatpush1.bf16.msra.mxu0 %v1189
    %1227 = vmatprep.subr.bf16.mxu0 %v1186
    %1228 = vmatpush1.bf16.msra.mxu0 %v1185
    %1229 = vmatprep.subr.bf16.mxu0 %v1182
    %1230 = vmatpush1.bf16.msra.mxu0 %v1181
    %1231 = vmatprep.subr.bf16.mxu0 %v1178
    %1232 = vmatpush1.bf16.msra.mxu0 %v1177
    %1233 = vmatprep.subr.bf16.mxu0 %v1174
    %1234 = vmatpush1.bf16.msra.mxu0 %v1173
    %1235 = vmatprep.subr.bf16.mxu0 %v1170
    %1236 = vmatpush1.bf16.msra.mxu0 %v1169
    %1237 = vmatprep.subr.bf16.mxu0 %v1166
    %1238 = vmatpush1.bf16.msra.mxu0 %v1165
    %1239 = vmatprep.subr.bf16.mxu0 %v1162
    %1240 = vmatpush1.bf16.msra.mxu0 %v1161
    %1241 = vmatprep.subr.bf16.mxu0 0
    %1242 = vmatpush2.bf16.msra.mxu0 0
    %1243 = vmatprep.subr.bf16.mxu0 0
    %1244 = vmatpush2.bf16.msra.mxu0 0
    %1245 = vmatprep.subr.bf16.mxu0 0
    %1246 = vmatpush2.bf16.msra.mxu0 0
    %1247 = vmatprep.subr.bf16.mxu0 0
    %1248 = vmatpush2.bf16.msra.mxu0 0
    %1249 = vmatprep.subr.bf16.mxu0 0
    %1250 = vmatpush2.bf16.msra.mxu0 0
    %1251 = vmatprep.subr.bf16.mxu0 0
    %1252 = vmatpush2.bf16.msra.mxu0 0
    %1253 = vmatprep.subr.bf16.mxu0 0
    %1254 = vmatpush2.bf16.msra.mxu0 0
    %1255 = vmatprep.subr.bf16.mxu0 0
    %1256 = vmatpush2.bf16.msra.mxu0 0
    %1257 = vmatprep.mubr.bf16.mxu0 0
    %1258 = vmatmul.mubr.bf16.gmra.mxu0 %v1032
    %v1259 = vpop.f32.mrf.mxu0
    %v1260 = vadd.f32 0.0, %v1259
    %v1261 = vpop.f32.mrf.mxu0
    %v1262 = vadd.f32 0.0, %v1261
    %v1263 = vpop.f32.mrf.mxu0
    %v1264 = vpop.f32.mrf.mxu0
    %1265 = vdwg.mxu0
    %1266 = vmatprep.subr.bf16.mxu0 %v1192
    %1267 = vmatpush1.bf16.msra.mxu0 %v1191
    %1268 = vmatprep.subr.bf16.mxu0 %v1188
    %1269 = vmatpush1.bf16.msra.mxu0 %v1187
    %1270 = vmatprep.subr.bf16.mxu0 %v1184
    %1271 = vmatpush1.bf16.msra.mxu0 %v1183
    %1272 = vmatprep.subr.bf16.mxu0 %v1180
    %1273 = vmatpush1.bf16.msra.mxu0 %v1179
    %1274 = vmatprep.subr.bf16.mxu0 %v1176
    %1275 = vmatpush1.bf16.msra.mxu0 %v1175
    %1276 = vmatprep.subr.bf16.mxu0 %v1172
    %1277 = vmatpush1.bf16.msra.mxu0 %v1171
    %1278 = vmatprep.subr.bf16.mxu0 %v1168
    %1279 = vmatpush1.bf16.msra.mxu0 %v1167
    %1280 = vmatprep.subr.bf16.mxu0 %v1164
    %1281 = vmatpush1.bf16.msra.mxu0 %v1163
    %1282 = vmatprep.subr.bf16.mxu0 0
    %1283 = vmatpush2.bf16.msra.mxu0 0
    %1284 = vmatprep.subr.bf16.mxu0 0
    %1285 = vmatpush2.bf16.msra.mxu0 0
    %1286 = vmatprep.subr.bf16.mxu0 0
    %1287 = vmatpush2.bf16.msra.mxu0 0
    %1288 = vmatprep.subr.bf16.mxu0 0
    %1289 = vmatpush2.bf16.msra.mxu0 0
    %1290 = vmatprep.subr.bf16.mxu0 0
    %1291 = vmatpush2.bf16.msra.mxu0 0
    %1292 = vmatprep.subr.bf16.mxu0 0
    %1293 = vmatpush2.bf16.msra.mxu0 0
    %1294 = vmatprep.subr.bf16.mxu0 0
    %1295 = vmatpush2.bf16.msra.mxu0 0
    %1296 = vmatprep.subr.bf16.mxu0 0
    %1297 = vmatpush2.bf16.msra.mxu0 0
    %1298 = vmatprep.mubr.bf16.mxu0 0
    %1299 = vmatmul.mubr.bf16.gmra.mxu0 %v1032
    %v1300 = vpop.f32.mrf.mxu0
    %v1301 = vadd.f32 0.0, %v1300
    %v1302 = vpop.f32.mrf.mxu0
    %v1303 = vadd.f32 0.0, %v1302
    %v1304 = vpop.f32.mrf.mxu0
    %v1305 = vpop.f32.mrf.mxu0
    %1306 = vdwg.mxu0
    %v1307 = vadd.f32 %v985, %v1260
    %v1308 = vadd.f32 %v987, %v1262
    %v1309 = vadd.f32 %v1026, %v1301
    %v1310 = vadd.f32 %v1028, %v1303
    %v1311 = vmul.f32 %v1307, 0.5
    %v1312 = vtanh.pop %v1311
    %v1313 = vmul.f32 %v1312, 0.5
    %v1314 = vadd.f32 %v1313, 0.5
    %v1315 = vmul.f32 %v1308, 0.5
    %v1316 = vtanh.pop %v1315
    %v1317 = vmul.f32 %v1316, 0.5
    %v1318 = vadd.f32 %v1317, 0.5
    %v1319 = vtanh.pop %v1309
    %v1320 = vmul.f32 %v1310, 0.5
    %v1321 = vtanh.pop %v1320
    %v1322 = vmul.f32 %v1321, 0.5
    %v1323 = vadd.f32 %v1322, 0.5
    %v1324 = vmul.f32 %v1318, %v916
    %v1325 = vmul.f32 %v1314, %v1319
    %v1326 = vadd.f32 %v1324, %v1325
    %v1327 = vtanh.pop %v1326
    %v1328 = vmul.f32 %v1323, %v1327
    %s1329 = scalar_lea.vmem [#allocation10], 4
    %1330 = vst [vmem:[%s1329] sm:$0x3] %v1328
    %s1331 = scalar_lea.vmem [#allocation4], 3
    %v1332 = vld [vmem:[%s1331] sm:$0x1]
    %v1333 = vld [vmem:[#allocation7] sm:$0xff]
    %v1334 = vld [vmem:[#allocation7 + $0x8] sm:$0xff]
    %v1335 = vld [vmem:[#allocation7 + $0x10] sm:$0xff]
    %v1336 = vld [vmem:[#allocation7 + $0x18] sm:$0xff]
    %v1341 = vunpack.c.l.b16 %v1333
    %v1342 = vunpack.c.h.b16 %v1333
    %v1343 = vunpack.c.l.b16 %v1334
    %v1344 = vunpack.c.h.b16 %v1334
    %v1345 = vunpack.c.l.b16 %v1335
    %v1346 = vunpack.c.h.b16 %v1335
    %v1347 = vunpack.c.l.b16 %v1336
    %v1348 = vunpack.c.h.b16 %v1336
    %v1349 = vpack.c.b16 %v1345, %v1341
    %v1350 = vpack.c.b16 %v1346, %v1342
    %v1351 = vpack.c.b16 %v1347, %v1343
    %v1352 = vpack.c.b16 %v1348, %v1344
    %v1358 = vsel %vm127, %v1332, 0
    %1360 = vmatprep.subr.bf16.mxu0 0
    %1361 = vmatpush1.bf16.msra.mxu0 0
    %1362 = vmatprep.subr.bf16.mxu0 0
    %1363 = vmatpush1.bf16.msra.mxu0 0
    %1364 = vmatprep.subr.bf16.mxu0 0
    %1365 = vmatpush1.bf16.msra.mxu0 0
    %1366 = vmatprep.subr.bf16.mxu0 0
    %1367 = vmatpush1.bf16.msra.mxu0 0
    %1368 = vmatprep.subr.bf16.mxu0 0
    %1369 = vmatpush1.bf16.msra.mxu0 0
    %1370 = vmatprep.subr.bf16.mxu0 0
    %1371 = vmatpush1.bf16.msra.mxu0 0
    %1372 = vmatprep.subr.bf16.mxu0 0
    %1373 = vmatpush1.bf16.msra.mxu0 0
    %1374 = vmatprep.subr.bf16.mxu0 %v1350
    %1375 = vmatpush1.bf16.msra.mxu0 %v1349
    %1376 = vmatprep.subr.bf16.mxu0 0
    %1377 = vmatpush2.bf16.msra.mxu0 0
    %1378 = vmatprep.subr.bf16.mxu0 0
    %1379 = vmatpush2.bf16.msra.mxu0 0
    %1380 = vmatprep.subr.bf16.mxu0 0
    %1381 = vmatpush2.bf16.msra.mxu0 0
    %1382 = vmatprep.subr.bf16.mxu0 0
    %1383 = vmatpush2.bf16.msra.mxu0 0
    %1384 = vmatprep.subr.bf16.mxu0 0
    %1385 = vmatpush2.bf16.msra.mxu0 0
    %1386 = vmatprep.subr.bf16.mxu0 0
    %1387 = vmatpush2.bf16.msra.mxu0 0
    %1388 = vmatprep.subr.bf16.mxu0 0
    %1389 = vmatpush2.bf16.msra.mxu0 0
    %1390 = vmatprep.subr.bf16.mxu0 0
    %1391 = vmatpush2.bf16.msra.mxu0 0
    %1392 = vmatprep.mubr.bf16.mxu0 0
    %1393 = vmatmul.mubr.bf16.gmra.mxu0 %v1358
    %v1394 = vpop.f32.mrf.mxu0
    %v1395 = vadd.f32 %v90, %v1394
    %v1396 = vpop.f32.mrf.mxu0
    %v1397 = vadd.f32 %v94, %v1396
    %v1398 = vpop.f32.mrf.mxu0
    %v1399 = vpop.f32.mrf.mxu0
    %1400 = vdwg.mxu0
    %1401 = vmatprep.subr.bf16.mxu0 0
    %1402 = vmatpush1.bf16.msra.mxu0 0
    %1403 = vmatprep.subr.bf16.mxu0 0
    %1404 = vmatpush1.bf16.msra.mxu0 0
    %1405 = vmatprep.subr.bf16.mxu0 0
    %1406 = vmatpush1.bf16.msra.mxu0 0
    %1407 = vmatprep.subr.bf16.mxu0 0
    %1408 = vmatpush1.bf16.msra.mxu0 0
    %1409 = vmatprep.subr.bf16.mxu0 0
    %1410 = vmatpush1.bf16.msra.mxu0 0
    %1411 = vmatprep.subr.bf16.mxu0 0
    %1412 = vmatpush1.bf16.msra.mxu0 0
    %1413 = vmatprep.subr.bf16.mxu0 0
    %1414 = vmatpush1.bf16.msra.mxu0 0
    %1415 = vmatprep.subr.bf16.mxu0 %v1352
    %1416 = vmatpush1.bf16.msra.mxu0 %v1351
    %1417 = vmatprep.subr.bf16.mxu0 0
    %1418 = vmatpush2.bf16.msra.mxu0 0
    %1419 = vmatprep.subr.bf16.mxu0 0
    %1420 = vmatpush2.bf16.msra.mxu0 0
    %1421 = vmatprep.subr.bf16.mxu0 0
    %1422 = vmatpush2.bf16.msra.mxu0 0
    %1423 = vmatprep.subr.bf16.mxu0 0
    %1424 = vmatpush2.bf16.msra.mxu0 0
    %1425 = vmatprep.subr.bf16.mxu0 0
    %1426 = vmatpush2.bf16.msra.mxu0 0
    %1427 = vmatprep.subr.bf16.mxu0 0
    %1428 = vmatpush2.bf16.msra.mxu0 0
    %1429 = vmatprep.subr.bf16.mxu0 0
    %1430 = vmatpush2.bf16.msra.mxu0 0
    %1431 = vmatprep.subr.bf16.mxu0 0
    %1432 = vmatpush2.bf16.msra.mxu0 0
    %1433 = vmatprep.mubr.bf16.mxu0 0
    %1434 = vmatmul.mubr.bf16.gmra.mxu0 %v1358
    %v1435 = vpop.f32.mrf.mxu0
    %v1436 = vadd.f32 %v98, %v1435
    %v1437 = vpop.f32.mrf.mxu0
    %v1438 = vadd.f32 %v102, %v1437
    %v1439 = vpop.f32.mrf.mxu0
    %v1440 = vpop.f32.mrf.mxu0
    %1441 = vdwg.mxu0
    %v1442 = vpack.c.bf16 %v1328, %v1328
    %v1443 = vld [vmem:[#allocation9] sm:$0xff]
    %v1444 = vld [vmem:[#allocation9 + $0x8] sm:$0xff]
    %v1445 = vld [vmem:[#allocation9 + $0x10] sm:$0xff]
    %v1446 = vld [vmem:[#allocation9 + $0x18] sm:$0xff]
    %v1447 = vld [vmem:[#allocation9 + $0x20] sm:$0xff]
    %v1448 = vld [vmem:[#allocation9 + $0x28] sm:$0xff]
    %v1449 = vld [vmem:[#allocation9 + $0x30] sm:$0xff]
    %v1450 = vld [vmem:[#allocation9 + $0x38] sm:$0xff]
    %v1451 = vld [vmem:[#allocation9 + $0x40] sm:$0xff]
    %v1452 = vld [vmem:[#allocation9 + $0x48] sm:$0xff]
    %v1453 = vld [vmem:[#allocation9 + $0x50] sm:$0xff]
    %v1454 = vld [vmem:[#allocation9 + $0x58] sm:$0xff]
    %v1455 = vld [vmem:[#allocation9 + $0x60] sm:$0xff]
    %v1456 = vld [vmem:[#allocation9 + $0x68] sm:$0xff]
    %v1457 = vld [vmem:[#allocation9 + $0x70] sm:$0xff]
    %v1458 = vld [vmem:[#allocation9 + $0x78] sm:$0xff]
    %v1459 = vld [vmem:[#allocation9 + $0x80] sm:$0xff]
    %v1460 = vld [vmem:[#allocation9 + $0x88] sm:$0xff]
    %v1461 = vld [vmem:[#allocation9 + $0x90] sm:$0xff]
    %v1462 = vld [vmem:[#allocation9 + $0x98] sm:$0xff]
    %v1463 = vld [vmem:[#allocation9 + $0xa0] sm:$0xff]
    %v1464 = vld [vmem:[#allocation9 + $0xa8] sm:$0xff]
    %v1465 = vld [vmem:[#allocation9 + $0xb0] sm:$0xff]
    %v1466 = vld [vmem:[#allocation9 + $0xb8] sm:$0xff]
    %v1467 = vld [vmem:[#allocation9 + $0xc0] sm:$0xff]
    %v1468 = vld [vmem:[#allocation9 + $0xc8] sm:$0xff]
    %v1469 = vld [vmem:[#allocation9 + $0xd0] sm:$0xff]
    %v1470 = vld [vmem:[#allocation9 + $0xd8] sm:$0xff]
    %v1471 = vld [vmem:[#allocation9 + $0xe0] sm:$0xff]
    %v1472 = vld [vmem:[#allocation9 + $0xe8] sm:$0xff]
    %v1473 = vld [vmem:[#allocation9 + $0xf0] sm:$0xff]
    %v1474 = vld [vmem:[#allocation9 + $0xf8] sm:$0xff]
    %v1507 = vunpack.c.l.b16 %v1443
    %v1508 = vunpack.c.h.b16 %v1443
    %v1509 = vunpack.c.l.b16 %v1444
    %v1510 = vunpack.c.h.b16 %v1444
    %v1511 = vunpack.c.l.b16 %v1445
    %v1512 = vunpack.c.h.b16 %v1445
    %v1513 = vunpack.c.l.b16 %v1446
    %v1514 = vunpack.c.h.b16 %v1446
    %v1515 = vunpack.c.l.b16 %v1447
    %v1516 = vunpack.c.h.b16 %v1447
    %v1517 = vunpack.c.l.b16 %v1448
    %v1518 = vunpack.c.h.b16 %v1448
    %v1519 = vunpack.c.l.b16 %v1449
    %v1520 = vunpack.c.h.b16 %v1449
    %v1521 = vunpack.c.l.b16 %v1450
    %v1522 = vunpack.c.h.b16 %v1450
    %v1523 = vunpack.c.l.b16 %v1451
    %v1524 = vunpack.c.h.b16 %v1451
    %v1525 = vunpack.c.l.b16 %v1452
    %v1526 = vunpack.c.h.b16 %v1452
    %v1527 = vunpack.c.l.b16 %v1453
    %v1528 = vunpack.c.h.b16 %v1453
    %v1529 = vunpack.c.l.b16 %v1454
    %v1530 = vunpack.c.h.b16 %v1454
    %v1531 = vunpack.c.l.b16 %v1455
    %v1532 = vunpack.c.h.b16 %v1455
    %v1533 = vunpack.c.l.b16 %v1456
    %v1534 = vunpack.c.h.b16 %v1456
    %v1535 = vunpack.c.l.b16 %v1457
    %v1536 = vunpack.c.h.b16 %v1457
    %v1537 = vunpack.c.l.b16 %v1458
    %v1538 = vunpack.c.h.b16 %v1458
    %v1539 = vunpack.c.l.b16 %v1459
    %v1540 = vunpack.c.h.b16 %v1459
    %v1541 = vunpack.c.l.b16 %v1460
    %v1542 = vunpack.c.h.b16 %v1460
    %v1543 = vunpack.c.l.b16 %v1461
    %v1544 = vunpack.c.h.b16 %v1461
    %v1545 = vunpack.c.l.b16 %v1462
    %v1546 = vunpack.c.h.b16 %v1462
    %v1547 = vunpack.c.l.b16 %v1463
    %v1548 = vunpack.c.h.b16 %v1463
    %v1549 = vunpack.c.l.b16 %v1464
    %v1550 = vunpack.c.h.b16 %v1464
    %v1551 = vunpack.c.l.b16 %v1465
    %v1552 = vunpack.c.h.b16 %v1465
    %v1553 = vunpack.c.l.b16 %v1466
    %v1554 = vunpack.c.h.b16 %v1466
    %v1555 = vunpack.c.l.b16 %v1467
    %v1556 = vunpack.c.h.b16 %v1467
    %v1557 = vunpack.c.l.b16 %v1468
    %v1558 = vunpack.c.h.b16 %v1468
    %v1559 = vunpack.c.l.b16 %v1469
    %v1560 = vunpack.c.h.b16 %v1469
    %v1561 = vunpack.c.l.b16 %v1470
    %v1562 = vunpack.c.h.b16 %v1470
    %v1563 = vunpack.c.l.b16 %v1471
    %v1564 = vunpack.c.h.b16 %v1471
    %v1565 = vunpack.c.l.b16 %v1472
    %v1566 = vunpack.c.h.b16 %v1472
    %v1567 = vunpack.c.l.b16 %v1473
    %v1568 = vunpack.c.h.b16 %v1473
    %v1569 = vunpack.c.l.b16 %v1474
    %v1570 = vunpack.c.h.b16 %v1474
    %v1571 = vpack.c.b16 %v1511, %v1507
    %v1572 = vpack.c.b16 %v1512, %v1508
    %v1573 = vpack.c.b16 %v1513, %v1509
    %v1574 = vpack.c.b16 %v1514, %v1510
    %v1575 = vpack.c.b16 %v1519, %v1515
    %v1576 = vpack.c.b16 %v1520, %v1516
    %v1577 = vpack.c.b16 %v1521, %v1517
    %v1578 = vpack.c.b16 %v1522, %v1518
    %v1579 = vpack.c.b16 %v1527, %v1523
    %v1580 = vpack.c.b16 %v1528, %v1524
    %v1581 = vpack.c.b16 %v1529, %v1525
    %v1582 = vpack.c.b16 %v1530, %v1526
    %v1583 = vpack.c.b16 %v1535, %v1531
    %v1584 = vpack.c.b16 %v1536, %v1532
    %v1585 = vpack.c.b16 %v1537, %v1533
    %v1586 = vpack.c.b16 %v1538, %v1534
    %v1587 = vpack.c.b16 %v1543, %v1539
    %v1588 = vpack.c.b16 %v1544, %v1540
    %v1589 = vpack.c.b16 %v1545, %v1541
    %v1590 = vpack.c.b16 %v1546, %v1542
    %v1591 = vpack.c.b16 %v1551, %v1547
    %v1592 = vpack.c.b16 %v1552, %v1548
    %v1593 = vpack.c.b16 %v1553, %v1549
    %v1594 = vpack.c.b16 %v1554, %v1550
    %v1595 = vpack.c.b16 %v1559, %v1555
    %v1596 = vpack.c.b16 %v1560, %v1556
    %v1597 = vpack.c.b16 %v1561, %v1557
    %v1598 = vpack.c.b16 %v1562, %v1558
    %v1599 = vpack.c.b16 %v1567, %v1563
    %v1600 = vpack.c.b16 %v1568, %v1564
    %v1601 = vpack.c.b16 %v1569, %v1565
    %v1602 = vpack.c.b16 %v1570, %v1566
    %1635 = vmatprep.subr.bf16.mxu0 %v1600
    %1636 = vmatpush1.bf16.msra.mxu0 %v1599
    %1637 = vmatprep.subr.bf16.mxu0 %v1596
    %1638 = vmatpush1.bf16.msra.mxu0 %v1595
    %1639 = vmatprep.subr.bf16.mxu0 %v1592
    %1640 = vmatpush1.bf16.msra.mxu0 %v1591
    %1641 = vmatprep.subr.bf16.mxu0 %v1588
    %1642 = vmatpush1.bf16.msra.mxu0 %v1587
    %1643 = vmatprep.subr.bf16.mxu0 %v1584
    %1644 = vmatpush1.bf16.msra.mxu0 %v1583
    %1645 = vmatprep.subr.bf16.mxu0 %v1580
    %1646 = vmatpush1.bf16.msra.mxu0 %v1579
    %1647 = vmatprep.subr.bf16.mxu0 %v1576
    %1648 = vmatpush1.bf16.msra.mxu0 %v1575
    %1649 = vmatprep.subr.bf16.mxu0 %v1572
    %1650 = vmatpush1.bf16.msra.mxu0 %v1571
    %1651 = vmatprep.subr.bf16.mxu0 0
    %1652 = vmatpush2.bf16.msra.mxu0 0
    %1653 = vmatprep.subr.bf16.mxu0 0
    %1654 = vmatpush2.bf16.msra.mxu0 0
    %1655 = vmatprep.subr.bf16.mxu0 0
    %1656 = vmatpush2.bf16.msra.mxu0 0
    %1657 = vmatprep.subr.bf16.mxu0 0
    %1658 = vmatpush2.bf16.msra.mxu0 0
    %1659 = vmatprep.subr.bf16.mxu0 0
    %1660 = vmatpush2.bf16.msra.mxu0 0
    %1661 = vmatprep.subr.bf16.mxu0 0
    %1662 = vmatpush2.bf16.msra.mxu0 0
    %1663 = vmatprep.subr.bf16.mxu0 0
    %1664 = vmatpush2.bf16.msra.mxu0 0
    %1665 = vmatprep.subr.bf16.mxu0 0
    %1666 = vmatpush2.bf16.msra.mxu0 0
    %1667 = vmatprep.mubr.bf16.mxu0 0
    %1668 = vmatmul.mubr.bf16.gmra.mxu0 %v1442
    %v1669 = vpop.f32.mrf.mxu0
    %v1670 = vadd.f32 0.0, %v1669
    %v1671 = vpop.f32.mrf.mxu0
    %v1672 = vadd.f32 0.0, %v1671
    %v1673 = vpop.f32.mrf.mxu0
    %v1674 = vpop.f32.mrf.mxu0
    %1675 = vdwg.mxu0
    %1676 = vmatprep.subr.bf16.mxu0 %v1602
    %1677 = vmatpush1.bf16.msra.mxu0 %v1601
    %1678 = vmatprep.subr.bf16.mxu0 %v1598
    %1679 = vmatpush1.bf16.msra.mxu0 %v1597
    %1680 = vmatprep.subr.bf16.mxu0 %v1594
    %1681 = vmatpush1.bf16.msra.mxu0 %v1593
    %1682 = vmatprep.subr.bf16.mxu0 %v1590
    %1683 = vmatpush1.bf16.msra.mxu0 %v1589
    %1684 = vmatprep.subr.bf16.mxu0 %v1586
    %1685 = vmatpush1.bf16.msra.mxu0 %v1585
    %1686 = vmatprep.subr.bf16.mxu0 %v1582
    %1687 = vmatpush1.bf16.msra.mxu0 %v1581
    %1688 = vmatprep.subr.bf16.mxu0 %v1578
    %1689 = vmatpush1.bf16.msra.mxu0 %v1577
    %1690 = vmatprep.subr.bf16.mxu0 %v1574
    %1691 = vmatpush1.bf16.msra.mxu0 %v1573
    %1692 = vmatprep.subr.bf16.mxu0 0
    %1693 = vmatpush2.bf16.msra.mxu0 0
    %1694 = vmatprep.subr.bf16.mxu0 0
    %1695 = vmatpush2.bf16.msra.mxu0 0
    %1696 = vmatprep.subr.bf16.mxu0 0
    %1697 = vmatpush2.bf16.msra.mxu0 0
    %1698 = vmatprep.subr.bf16.mxu0 0
    %1699 = vmatpush2.bf16.msra.mxu0 0
    %1700 = vmatprep.subr.bf16.mxu0 0
    %1701 = vmatpush2.bf16.msra.mxu0 0
    %1702 = vmatprep.subr.bf16.mxu0 0
    %1703 = vmatpush2.bf16.msra.mxu0 0
    %1704 = vmatprep.subr.bf16.mxu0 0
    %1705 = vmatpush2.bf16.msra.mxu0 0
    %1706 = vmatprep.subr.bf16.mxu0 0
    %1707 = vmatpush2.bf16.msra.mxu0 0
    %1708 = vmatprep.mubr.bf16.mxu0 0
    %1709 = vmatmul.mubr.bf16.gmra.mxu0 %v1442
    %v1710 = vpop.f32.mrf.mxu0
    %v1711 = vadd.f32 0.0, %v1710
    %v1712 = vpop.f32.mrf.mxu0
    %v1713 = vadd.f32 0.0, %v1712
    %v1714 = vpop.f32.mrf.mxu0
    %v1715 = vpop.f32.mrf.mxu0
    %1716 = vdwg.mxu0
    %v1717 = vadd.f32 %v1395, %v1670
    %v1718 = vadd.f32 %v1397, %v1672
    %v1719 = vadd.f32 %v1436, %v1711
    %v1720 = vadd.f32 %v1438, %v1713
    %v1721 = vmul.f32 %v1717, 0.5
    %v1722 = vtanh.pop %v1721
    %v1723 = vmul.f32 %v1722, 0.5
    %v1724 = vadd.f32 %v1723, 0.5
    %v1725 = vmul.f32 %v1718, 0.5
    %v1726 = vtanh.pop %v1725
    %v1727 = vmul.f32 %v1726, 0.5
    %v1728 = vadd.f32 %v1727, 0.5
    %v1729 = vtanh.pop %v1719
    %v1730 = vmul.f32 %v1720, 0.5
    %v1731 = vtanh.pop %v1730
    %v1732 = vmul.f32 %v1731, 0.5
    %v1733 = vadd.f32 %v1732, 0.5
    %v1734 = vmul.f32 %v1728, %v1326
    %v1735 = vmul.f32 %v1724, %v1729
    %v1736 = vadd.f32 %v1734, %v1735
    %v1737 = vtanh.pop %v1736
    %v1738 = vmul.f32 %v1733, %v1737
    %s1739 = scalar_lea.vmem [#allocation10], 6
    %1740 = vst [vmem:[%s1739] sm:$0x3] %v1738
    %s1741 = scalar_lea.vmem [#allocation4], 4
    %v1742 = vld [vmem:[%s1741] sm:$0x1]
    %v1743 = vld [vmem:[#allocation7] sm:$0xff]
    %v1744 = vld [vmem:[#allocation7 + $0x8] sm:$0xff]
    %v1745 = vld [vmem:[#allocation7 + $0x10] sm:$0xff]
    %v1746 = vld [vmem:[#allocation7 + $0x18] sm:$0xff]
    %v1751 = vunpack.c.l.b16 %v1743
    %v1752 = vunpack.c.h.b16 %v1743
    %v1753 = vunpack.c.l.b16 %v1744
    %v1754 = vunpack.c.h.b16 %v1744
    %v1755 = vunpack.c.l.b16 %v1745
    %v1756 = vunpack.c.h.b16 %v1745
    %v1757 = vunpack.c.l.b16 %v1746
    %v1758 = vunpack.c.h.b16 %v1746
    %v1759 = vpack.c.b16 %v1755, %v1751
    %v1760 = vpack.c.b16 %v1756, %v1752
    %v1761 = vpack.c.b16 %v1757, %v1753
    %v1762 = vpack.c.b16 %v1758, %v1754
    %v1768 = vsel %vm127, %v1742, 0
    %1770 = vmatprep.subr.bf16.mxu0 0
    %1771 = vmatpush1.bf16.msra.mxu0 0
    %1772 = vmatprep.subr.bf16.mxu0 0
    %1773 = vmatpush1.bf16.msra.mxu0 0
    %1774 = vmatprep.subr.bf16.mxu0 0
    %1775 = vmatpush1.bf16.msra.mxu0 0
    %1776 = vmatprep.subr.bf16.mxu0 0
    %1777 = vmatpush1.bf16.msra.mxu0 0
    %1778 = vmatprep.subr.bf16.mxu0 0
    %1779 = vmatpush1.bf16.msra.mxu0 0
    %1780 = vmatprep.subr.bf16.mxu0 0
    %1781 = vmatpush1.bf16.msra.mxu0 0
    %1782 = vmatprep.subr.bf16.mxu0 0
    %1783 = vmatpush1.bf16.msra.mxu0 0
    %1784 = vmatprep.subr.bf16.mxu0 %v1760
    %1785 = vmatpush1.bf16.msra.mxu0 %v1759
    %1786 = vmatprep.subr.bf16.mxu0 0
    %1787 = vmatpush2.bf16.msra.mxu0 0
    %1788 = vmatprep.subr.bf16.mxu0 0
    %1789 = vmatpush2.bf16.msra.mxu0 0
    %1790 = vmatprep.subr.bf16.mxu0 0
    %1791 = vmatpush2.bf16.msra.mxu0 0
    %1792 = vmatprep.subr.bf16.mxu0 0
    %1793 = vmatpush2.bf16.msra.mxu0 0
    %1794 = vmatprep.subr.bf16.mxu0 0
    %1795 = vmatpush2.bf16.msra.mxu0 0
    %1796 = vmatprep.subr.bf16.mxu0 0
    %1797 = vmatpush2.bf16.msra.mxu0 0
    %1798 = vmatprep.subr.bf16.mxu0 0
    %1799 = vmatpush2.bf16.msra.mxu0 0
    %1800 = vmatprep.subr.bf16.mxu0 0
    %1801 = vmatpush2.bf16.msra.mxu0 0
    %1802 = vmatprep.mubr.bf16.mxu0 0
    %1803 = vmatmul.mubr.bf16.gmra.mxu0 %v1768
    %v1804 = vpop.f32.mrf.mxu0
    %v1805 = vadd.f32 %v90, %v1804
    %v1806 = vpop.f32.mrf.mxu0
    %v1807 = vadd.f32 %v94, %v1806
    %v1808 = vpop.f32.mrf.mxu0
    %v1809 = vpop.f32.mrf.mxu0
    %1810 = vdwg.mxu0
    %1811 = vmatprep.subr.bf16.mxu0 0
    %1812 = vmatpush1.bf16.msra.mxu0 0
    %1813 = vmatprep.subr.bf16.mxu0 0
    %1814 = vmatpush1.bf16.msra.mxu0 0
    %1815 = vmatprep.subr.bf16.mxu0 0
    %1816 = vmatpush1.bf16.msra.mxu0 0
    %1817 = vmatprep.subr.bf16.mxu0 0
    %1818 = vmatpush1.bf16.msra.mxu0 0
    %1819 = vmatprep.subr.bf16.mxu0 0
    %1820 = vmatpush1.bf16.msra.mxu0 0
    %1821 = vmatprep.subr.bf16.mxu0 0
    %1822 = vmatpush1.bf16.msra.mxu0 0
    %1823 = vmatprep.subr.bf16.mxu0 0
    %1824 = vmatpush1.bf16.msra.mxu0 0
    %1825 = vmatprep.subr.bf16.mxu0 %v1762
    %1826 = vmatpush1.bf16.msra.mxu0 %v1761
    %1827 = vmatprep.subr.bf16.mxu0 0
    %1828 = vmatpush2.bf16.msra.mxu0 0
    %1829 = vmatprep.subr.bf16.mxu0 0
    %1830 = vmatpush2.bf16.msra.mxu0 0
    %1831 = vmatprep.subr.bf16.mxu0 0
    %1832 = vmatpush2.bf16.msra.mxu0 0
    %1833 = vmatprep.subr.bf16.mxu0 0
    %1834 = vmatpush2.bf16.msra.mxu0 0
    %1835 = vmatprep.subr.bf16.mxu0 0
    %1836 = vmatpush2.bf16.msra.mxu0 0
    %1837 = vmatprep.subr.bf16.mxu0 0
    %1838 = vmatpush2.bf16.msra.mxu0 0
    %1839 = vmatprep.subr.bf16.mxu0 0
    %1840 = vmatpush2.bf16.msra.mxu0 0
    %1841 = vmatprep.subr.bf16.mxu0 0
    %1842 = vmatpush2.bf16.msra.mxu0 0
    %1843 = vmatprep.mubr.bf16.mxu0 0
    %1844 = vmatmul.mubr.bf16.gmra.mxu0 %v1768
    %v1845 = vpop.f32.mrf.mxu0
    %v1846 = vadd.f32 %v98, %v1845
    %v1847 = vpop.f32.mrf.mxu0
    %v1848 = vadd.f32 %v102, %v1847
    %v1849 = vpop.f32.mrf.mxu0
    %v1850 = vpop.f32.mrf.mxu0
    %1851 = vdwg.mxu0
    %v1852 = vpack.c.bf16 %v1738, %v1738
    %v1853 = vld [vmem:[#allocation9] sm:$0xff]
    %v1854 = vld [vmem:[#allocation9 + $0x8] sm:$0xff]
    %v1855 = vld [vmem:[#allocation9 + $0x10] sm:$0xff]
    %v1856 = vld [vmem:[#allocation9 + $0x18] sm:$0xff]
    %v1857 = vld [vmem:[#allocation9 + $0x20] sm:$0xff]
    %v1858 = vld [vmem:[#allocation9 + $0x28] sm:$0xff]
    %v1859 = vld [vmem:[#allocation9 + $0x30] sm:$0xff]
    %v1860 = vld [vmem:[#allocation9 + $0x38] sm:$0xff]
    %v1861 = vld [vmem:[#allocation9 + $0x40] sm:$0xff]
    %v1862 = vld [vmem:[#allocation9 + $0x48] sm:$0xff]
    %v1863 = vld [vmem:[#allocation9 + $0x50] sm:$0xff]
    %v1864 = vld [vmem:[#allocation9 + $0x58] sm:$0xff]
    %v1865 = vld [vmem:[#allocation9 + $0x60] sm:$0xff]
    %v1866 = vld [vmem:[#allocation9 + $0x68] sm:$0xff]
    %v1867 = vld [vmem:[#allocation9 + $0x70] sm:$0xff]
    %v1868 = vld [vmem:[#allocation9 + $0x78] sm:$0xff]
    %v1869 = vld [vmem:[#allocation9 + $0x80] sm:$0xff]
    %v1870 = vld [vmem:[#allocation9 + $0x88] sm:$0xff]
    %v1871 = vld [vmem:[#allocation9 + $0x90] sm:$0xff]
    %v1872 = vld [vmem:[#allocation9 + $0x98] sm:$0xff]
    %v1873 = vld [vmem:[#allocation9 + $0xa0] sm:$0xff]
    %v1874 = vld [vmem:[#allocation9 + $0xa8] sm:$0xff]
    %v1875 = vld [vmem:[#allocation9 + $0xb0] sm:$0xff]
    %v1876 = vld [vmem:[#allocation9 + $0xb8] sm:$0xff]
    %v1877 = vld [vmem:[#allocation9 + $0xc0] sm:$0xff]
    %v1878 = vld [vmem:[#allocation9 + $0xc8] sm:$0xff]
    %v1879 = vld [vmem:[#allocation9 + $0xd0] sm:$0xff]
    %v1880 = vld [vmem:[#allocation9 + $0xd8] sm:$0xff]
    %v1881 = vld [vmem:[#allocation9 + $0xe0] sm:$0xff]
    %v1882 = vld [vmem:[#allocation9 + $0xe8] sm:$0xff]
    %v1883 = vld [vmem:[#allocation9 + $0xf0] sm:$0xff]
    %v1884 = vld [vmem:[#allocation9 + $0xf8] sm:$0xff]
    %v1917 = vunpack.c.l.b16 %v1853
    %v1918 = vunpack.c.h.b16 %v1853
    %v1919 = vunpack.c.l.b16 %v1854
    %v1920 = vunpack.c.h.b16 %v1854
    %v1921 = vunpack.c.l.b16 %v1855
    %v1922 = vunpack.c.h.b16 %v1855
    %v1923 = vunpack.c.l.b16 %v1856
    %v1924 = vunpack.c.h.b16 %v1856
    %v1925 = vunpack.c.l.b16 %v1857
    %v1926 = vunpack.c.h.b16 %v1857
    %v1927 = vunpack.c.l.b16 %v1858
    %v1928 = vunpack.c.h.b16 %v1858
    %v1929 = vunpack.c.l.b16 %v1859
    %v1930 = vunpack.c.h.b16 %v1859
    %v1931 = vunpack.c.l.b16 %v1860
    %v1932 = vunpack.c.h.b16 %v1860
    %v1933 = vunpack.c.l.b16 %v1861
    %v1934 = vunpack.c.h.b16 %v1861
    %v1935 = vunpack.c.l.b16 %v1862
    %v1936 = vunpack.c.h.b16 %v1862
    %v1937 = vunpack.c.l.b16 %v1863
    %v1938 = vunpack.c.h.b16 %v1863
    %v1939 = vunpack.c.l.b16 %v1864
    %v1940 = vunpack.c.h.b16 %v1864
    %v1941 = vunpack.c.l.b16 %v1865
    %v1942 = vunpack.c.h.b16 %v1865
    %v1943 = vunpack.c.l.b16 %v1866
    %v1944 = vunpack.c.h.b16 %v1866
    %v1945 = vunpack.c.l.b16 %v1867
    %v1946 = vunpack.c.h.b16 %v1867
    %v1947 = vunpack.c.l.b16 %v1868
    %v1948 = vunpack.c.h.b16 %v1868
    %v1949 = vunpack.c.l.b16 %v1869
    %v1950 = vunpack.c.h.b16 %v1869
    %v1951 = vunpack.c.l.b16 %v1870
    %v1952 = vunpack.c.h.b16 %v1870
    %v1953 = vunpack.c.l.b16 %v1871
    %v1954 = vunpack.c.h.b16 %v1871
    %v1955 = vunpack.c.l.b16 %v1872
    %v1956 = vunpack.c.h.b16 %v1872
    %v1957 = vunpack.c.l.b16 %v1873
    %v1958 = vunpack.c.h.b16 %v1873
    %v1959 = vunpack.c.l.b16 %v1874
    %v1960 = vunpack.c.h.b16 %v1874
    %v1961 = vunpack.c.l.b16 %v1875
    %v1962 = vunpack.c.h.b16 %v1875
    %v1963 = vunpack.c.l.b16 %v1876
    %v1964 = vunpack.c.h.b16 %v1876
    %v1965 = vunpack.c.l.b16 %v1877
    %v1966 = vunpack.c.h.b16 %v1877
    %v1967 = vunpack.c.l.b16 %v1878
    %v1968 = vunpack.c.h.b16 %v1878
    %v1969 = vunpack.c.l.b16 %v1879
    %v1970 = vunpack.c.h.b16 %v1879
    %v1971 = vunpack.c.l.b16 %v1880
    %v1972 = vunpack.c.h.b16 %v1880
    %v1973 = vunpack.c.l.b16 %v1881
    %v1974 = vunpack.c.h.b16 %v1881
    %v1975 = vunpack.c.l.b16 %v1882
    %v1976 = vunpack.c.h.b16 %v1882
    %v1977 = vunpack.c.l.b16 %v1883
    %v1978 = vunpack.c.h.b16 %v1883
    %v1979 = vunpack.c.l.b16 %v1884
    %v1980 = vunpack.c.h.b16 %v1884
    %v1981 = vpack.c.b16 %v1921, %v1917
    %v1982 = vpack.c.b16 %v1922, %v1918
    %v1983 = vpack.c.b16 %v1923, %v1919
    %v1984 = vpack.c.b16 %v1924, %v1920
    %v1985 = vpack.c.b16 %v1929, %v1925
    %v1986 = vpack.c.b16 %v1930, %v1926
    %v1987 = vpack.c.b16 %v1931, %v1927
    %v1988 = vpack.c.b16 %v1932, %v1928
    %v1989 = vpack.c.b16 %v1937, %v1933
    %v1990 = vpack.c.b16 %v1938, %v1934
    %v1991 = vpack.c.b16 %v1939, %v1935
    %v1992 = vpack.c.b16 %v1940, %v1936
    %v1993 = vpack.c.b16 %v1945, %v1941
    %v1994 = vpack.c.b16 %v1946, %v1942
    %v1995 = vpack.c.b16 %v1947, %v1943
    %v1996 = vpack.c.b16 %v1948, %v1944
    %v1997 = vpack.c.b16 %v1953, %v1949
    %v1998 = vpack.c.b16 %v1954, %v1950
    %v1999 = vpack.c.b16 %v1955, %v1951
    %v2000 = vpack.c.b16 %v1956, %v1952
    %v2001 = vpack.c.b16 %v1961, %v1957
    %v2002 = vpack.c.b16 %v1962, %v1958
    %v2003 = vpack.c.b16 %v1963, %v1959
    %v2004 = vpack.c.b16 %v1964, %v1960
    %v2005 = vpack.c.b16 %v1969, %v1965
    %v2006 = vpack.c.b16 %v1970, %v1966
    %v2007 = vpack.c.b16 %v1971, %v1967
    %v2008 = vpack.c.b16 %v1972, %v1968
    %v2009 = vpack.c.b16 %v1977, %v1973
    %v2010 = vpack.c.b16 %v1978, %v1974
    %v2011 = vpack.c.b16 %v1979, %v1975
    %v2012 = vpack.c.b16 %v1980, %v1976
    %2045 = vmatprep.subr.bf16.mxu0 %v2010
    %2046 = vmatpush1.bf16.msra.mxu0 %v2009
    %2047 = vmatprep.subr.bf16.mxu0 %v2006
    %2048 = vmatpush1.bf16.msra.mxu0 %v2005
    %2049 = vmatprep.subr.bf16.mxu0 %v2002
    %2050 = vmatpush1.bf16.msra.mxu0 %v2001
    %2051 = vmatprep.subr.bf16.mxu0 %v1998
    %2052 = vmatpush1.bf16.msra.mxu0 %v1997
    %2053 = vmatprep.subr.bf16.mxu0 %v1994
    %2054 = vmatpush1.bf16.msra.mxu0 %v1993
    %2055 = vmatprep.subr.bf16.mxu0 %v1990
    %2056 = vmatpush1.bf16.msra.mxu0 %v1989
    %2057 = vmatprep.subr.bf16.mxu0 %v1986
    %2058 = vmatpush1.bf16.msra.mxu0 %v1985
    %2059 = vmatprep.subr.bf16.mxu0 %v1982
    %2060 = vmatpush1.bf16.msra.mxu0 %v1981
    %2061 = vmatprep.subr.bf16.mxu0 0
    %2062 = vmatpush2.bf16.msra.mxu0 0
    %2063 = vmatprep.subr.bf16.mxu0 0
    %2064 = vmatpush2.bf16.msra.mxu0 0
    %2065 = vmatprep.subr.bf16.mxu0 0
    %2066 = vmatpush2.bf16.msra.mxu0 0
    %2067 = vmatprep.subr.bf16.mxu0 0
    %2068 = vmatpush2.bf16.msra.mxu0 0
    %2069 = vmatprep.subr.bf16.mxu0 0
    %2070 = vmatpush2.bf16.msra.mxu0 0
    %2071 = vmatprep.subr.bf16.mxu0 0
    %2072 = vmatpush2.bf16.msra.mxu0 0
    %2073 = vmatprep.subr.bf16.mxu0 0
    %2074 = vmatpush2.bf16.msra.mxu0 0
    %2075 = vmatprep.subr.bf16.mxu0 0
    %2076 = vmatpush2.bf16.msra.mxu0 0
    %2077 = vmatprep.mubr.bf16.mxu0 0
    %2078 = vmatmul.mubr.bf16.gmra.mxu0 %v1852
    %v2079 = vpop.f32.mrf.mxu0
    %v2080 = vadd.f32 0.0, %v2079
    %v2081 = vpop.f32.mrf.mxu0
    %v2082 = vadd.f32 0.0, %v2081
    %v2083 = vpop.f32.mrf.mxu0
    %v2084 = vpop.f32.mrf.mxu0
    %2085 = vdwg.mxu0
    %2086 = vmatprep.subr.bf16.mxu0 %v2012
    %2087 = vmatpush1.bf16.msra.mxu0 %v2011
    %2088 = vmatprep.subr.bf16.mxu0 %v2008
    %2089 = vmatpush1.bf16.msra.mxu0 %v2007
    %2090 = vmatprep.subr.bf16.mxu0 %v2004
    %2091 = vmatpush1.bf16.msra.mxu0 %v2003
    %2092 = vmatprep.subr.bf16.mxu0 %v2000
    %2093 = vmatpush1.bf16.msra.mxu0 %v1999
    %2094 = vmatprep.subr.bf16.mxu0 %v1996
    %2095 = vmatpush1.bf16.msra.mxu0 %v1995
    %2096 = vmatprep.subr.bf16.mxu0 %v1992
    %2097 = vmatpush1.bf16.msra.mxu0 %v1991
    %2098 = vmatprep.subr.bf16.mxu0 %v1988
    %2099 = vmatpush1.bf16.msra.mxu0 %v1987
    %2100 = vmatprep.subr.bf16.mxu0 %v1984
    %2101 = vmatpush1.bf16.msra.mxu0 %v1983
    %2102 = vmatprep.subr.bf16.mxu0 0
    %2103 = vmatpush2.bf16.msra.mxu0 0
    %2104 = vmatprep.subr.bf16.mxu0 0
    %2105 = vmatpush2.bf16.msra.mxu0 0
    %2106 = vmatprep.subr.bf16.mxu0 0
    %2107 = vmatpush2.bf16.msra.mxu0 0
    %2108 = vmatprep.subr.bf16.mxu0 0
    %2109 = vmatpush2.bf16.msra.mxu0 0
    %2110 = vmatprep.subr.bf16.mxu0 0
    %2111 = vmatpush2.bf16.msra.mxu0 0
    %2112 = vmatprep.subr.bf16.mxu0 0
    %2113 = vmatpush2.bf16.msra.mxu0 0
    %2114 = vmatprep.subr.bf16.mxu0 0
    %2115 = vmatpush2.bf16.msra.mxu0 0
    %2116 = vmatprep.subr.bf16.mxu0 0
    %2117 = vmatpush2.bf16.msra.mxu0 0
    %2118 = vmatprep.mubr.bf16.mxu0 0
    %2119 = vmatmul.mubr.bf16.gmra.mxu0 %v1852
    %v2120 = vpop.f32.mrf.mxu0
    %v2121 = vadd.f32 0.0, %v2120
    %v2122 = vpop.f32.mrf.mxu0
    %v2123 = vadd.f32 0.0, %v2122
    %v2124 = vpop.f32.mrf.mxu0
    %v2125 = vpop.f32.mrf.mxu0
    %2126 = vdwg.mxu0
    %v2127 = vadd.f32 %v1805, %v2080
    %v2128 = vadd.f32 %v1807, %v2082
    %v2129 = vadd.f32 %v1846, %v2121
    %v2130 = vadd.f32 %v1848, %v2123
    %v2131 = vmul.f32 %v2127, 0.5
    %v2132 = vtanh.pop %v2131
    %v2133 = vmul.f32 %v2132, 0.5
    %v2134 = vadd.f32 %v2133, 0.5
    %v2135 = vmul.f32 %v2128, 0.5
    %v2136 = vtanh.pop %v2135
    %v2137 = vmul.f32 %v2136, 0.5
    %v2138 = vadd.f32 %v2137, 0.5
    %v2139 = vtanh.pop %v2129
    %v2140 = vmul.f32 %v2130, 0.5
    %v2141 = vtanh.pop %v2140
    %v2142 = vmul.f32 %v2141, 0.5
    %v2143 = vadd.f32 %v2142, 0.5
    %v2144 = vmul.f32 %v2138, %v1736
    %v2145 = vmul.f32 %v2134, %v2139
    %v2146 = vadd.f32 %v2144, %v2145
    %v2147 = vtanh.pop %v2146
    %v2148 = vmul.f32 %v2143, %v2147
    %s2149 = scalar_lea.vmem [#allocation10], 8
    %2150 = vst [vmem:[%s2149] sm:$0x3] %v2148
    %s2151 = scalar_lea.vmem [#allocation4], 5
    %v2152 = vld [vmem:[%s2151] sm:$0x1]
    %v2153 = vld [vmem:[#allocation7] sm:$0xff]
    %v2154 = vld [vmem:[#allocation7 + $0x8] sm:$0xff]
    %v2155 = vld [vmem:[#allocation7 + $0x10] sm:$0xff]
    %v2156 = vld [vmem:[#allocation7 + $0x18] sm:$0xff]
    %v2161 = vunpack.c.l.b16 %v2153
    %v2162 = vunpack.c.h.b16 %v2153
    %v2163 = vunpack.c.l.b16 %v2154
    %v2164 = vunpack.c.h.b16 %v2154
    %v2165 = vunpack.c.l.b16 %v2155
    %v2166 = vunpack.c.h.b16 %v2155
    %v2167 = vunpack.c.l.b16 %v2156
    %v2168 = vunpack.c.h.b16 %v2156
    %v2169 = vpack.c.b16 %v2165, %v2161
    %v2170 = vpack.c.b16 %v2166, %v2162
    %v2171 = vpack.c.b16 %v2167, %v2163
    %v2172 = vpack.c.b16 %v2168, %v2164
    %v2178 = vsel %vm127, %v2152, 0
    %2180 = vmatprep.subr.bf16.mxu0 0
    %2181 = vmatpush1.bf16.msra.mxu0 0
    %2182 = vmatprep.subr.bf16.mxu0 0
    %2183 = vmatpush1.bf16.msra.mxu0 0
    %2184 = vmatprep.subr.bf16.mxu0 0
    %2185 = vmatpush1.bf16.msra.mxu0 0
    %2186 = vmatprep.subr.bf16.mxu0 0
    %2187 = vmatpush1.bf16.msra.mxu0 0
    %2188 = vmatprep.subr.bf16.mxu0 0
    %2189 = vmatpush1.bf16.msra.mxu0 0
    %2190 = vmatprep.subr.bf16.mxu0 0
    %2191 = vmatpush1.bf16.msra.mxu0 0
    %2192 = vmatprep.subr.bf16.mxu0 0
    %2193 = vmatpush1.bf16.msra.mxu0 0
    %2194 = vmatprep.subr.bf16.mxu0 %v2170
    %2195 = vmatpush1.bf16.msra.mxu0 %v2169
    %2196 = vmatprep.subr.bf16.mxu0 0
    %2197 = vmatpush2.bf16.msra.mxu0 0
    %2198 = vmatprep.subr.bf16.mxu0 0
    %2199 = vmatpush2.bf16.msra.mxu0 0
    %2200 = vmatprep.subr.bf16.mxu0 0
    %2201 = vmatpush2.bf16.msra.mxu0 0
    %2202 = vmatprep.subr.bf16.mxu0 0
    %2203 = vmatpush2.bf16.msra.mxu0 0
    %2204 = vmatprep.subr.bf16.mxu0 0
    %2205 = vmatpush2.bf16.msra.mxu0 0
    %2206 = vmatprep.subr.bf16.mxu0 0
    %2207 = vmatpush2.bf16.msra.mxu0 0
    %2208 = vmatprep.subr.bf16.mxu0 0
    %2209 = vmatpush2.bf16.msra.mxu0 0
    %2210 = vmatprep.subr.bf16.mxu0 0
    %2211 = vmatpush2.bf16.msra.mxu0 0
    %2212 = vmatprep.mubr.bf16.mxu0 0
    %2213 = vmatmul.mubr.bf16.gmra.mxu0 %v2178
    %v2214 = vpop.f32.mrf.mxu0
    %v2215 = vadd.f32 %v90, %v2214
    %v2216 = vpop.f32.mrf.mxu0
    %v2217 = vadd.f32 %v94, %v2216
    %v2218 = vpop.f32.mrf.mxu0
    %v2219 = vpop.f32.mrf.mxu0
    %2220 = vdwg.mxu0
    %2221 = vmatprep.subr.bf16.mxu0 0
    %2222 = vmatpush1.bf16.msra.mxu0 0
    %2223 = vmatprep.subr.bf16.mxu0 0
    %2224 = vmatpush1.bf16.msra.mxu0 0
    %2225 = vmatprep.subr.bf16.mxu0 0
    %2226 = vmatpush1.bf16.msra.mxu0 0
    %2227 = vmatprep.subr.bf16.mxu0 0
    %2228 = vmatpush1.bf16.msra.mxu0 0
    %2229 = vmatprep.subr.bf16.mxu0 0
    %2230 = vmatpush1.bf16.msra.mxu0 0
    %2231 = vmatprep.subr.bf16.mxu0 0
    %2232 = vmatpush1.bf16.msra.mxu0 0
    %2233 = vmatprep.subr.bf16.mxu0 0
    %2234 = vmatpush1.bf16.msra.mxu0 0
    %2235 = vmatprep.subr.bf16.mxu0 %v2172
    %2236 = vmatpush1.bf16.msra.mxu0 %v2171
    %2237 = vmatprep.subr.bf16.mxu0 0
    %2238 = vmatpush2.bf16.msra.mxu0 0
    %2239 = vmatprep.subr.bf16.mxu0 0
    %2240 = vmatpush2.bf16.msra.mxu0 0
    %2241 = vmatprep.subr.bf16.mxu0 0
    %2242 = vmatpush2.bf16.msra.mxu0 0
    %2243 = vmatprep.subr.bf16.mxu0 0
    %2244 = vmatpush2.bf16.msra.mxu0 0
    %2245 = vmatprep.subr.bf16.mxu0 0
    %2246 = vmatpush2.bf16.msra.mxu0 0
    %2247 = vmatprep.subr.bf16.mxu0 0
    %2248 = vmatpush2.bf16.msra.mxu0 0
    %2249 = vmatprep.subr.bf16.mxu0 0
    %2250 = vmatpush2.bf16.msra.mxu0 0
    %2251 = vmatprep.subr.bf16.mxu0 0
    %2252 = vmatpush2.bf16.msra.mxu0 0
    %2253 = vmatprep.mubr.bf16.mxu0 0
    %2254 = vmatmul.mubr.bf16.gmra.mxu0 %v2178
    %v2255 = vpop.f32.mrf.mxu0
    %v2256 = vadd.f32 %v98, %v2255
    %v2257 = vpop.f32.mrf.mxu0
    %v2258 = vadd.f32 %v102, %v2257
    %v2259 = vpop.f32.mrf.mxu0
    %v2260 = vpop.f32.mrf.mxu0
    %2261 = vdwg.mxu0
    %v2262 = vpack.c.bf16 %v2148, %v2148
    %v2263 = vld [vmem:[#allocation9] sm:$0xff]
    %v2264 = vld [vmem:[#allocation9 + $0x8] sm:$0xff]
    %v2265 = vld [vmem:[#allocation9 + $0x10] sm:$0xff]
    %v2266 = vld [vmem:[#allocation9 + $0x18] sm:$0xff]
    %v2267 = vld [vmem:[#allocation9 + $0x20] sm:$0xff]
    %v2268 = vld [vmem:[#allocation9 + $0x28] sm:$0xff]
    %v2269 = vld [vmem:[#allocation9 + $0x30] sm:$0xff]
    %v2270 = vld [vmem:[#allocation9 + $0x38] sm:$0xff]
    %v2271 = vld [vmem:[#allocation9 + $0x40] sm:$0xff]
    %v2272 = vld [vmem:[#allocation9 + $0x48] sm:$0xff]
    %v2273 = vld [vmem:[#allocation9 + $0x50] sm:$0xff]
    %v2274 = vld [vmem:[#allocation9 + $0x58] sm:$0xff]
    %v2275 = vld [vmem:[#allocation9 + $0x60] sm:$0xff]
    %v2276 = vld [vmem:[#allocation9 + $0x68] sm:$0xff]
    %v2277 = vld [vmem:[#allocation9 + $0x70] sm:$0xff]
    %v2278 = vld [vmem:[#allocation9 + $0x78] sm:$0xff]
    %v2279 = vld [vmem:[#allocation9 + $0x80] sm:$0xff]
    %v2280 = vld [vmem:[#allocation9 + $0x88] sm:$0xff]
    %v2281 = vld [vmem:[#allocation9 + $0x90] sm:$0xff]
    %v2282 = vld [vmem:[#allocation9 + $0x98] sm:$0xff]
    %v2283 = vld [vmem:[#allocation9 + $0xa0] sm:$0xff]
    %v2284 = vld [vmem:[#allocation9 + $0xa8] sm:$0xff]
    %v2285 = vld [vmem:[#allocation9 + $0xb0] sm:$0xff]
    %v2286 = vld [vmem:[#allocation9 + $0xb8] sm:$0xff]
    %v2287 = vld [vmem:[#allocation9 + $0xc0] sm:$0xff]
    %v2288 = vld [vmem:[#allocation9 + $0xc8] sm:$0xff]
    %v2289 = vld [vmem:[#allocation9 + $0xd0] sm:$0xff]
    %v2290 = vld [vmem:[#allocation9 + $0xd8] sm:$0xff]
    %v2291 = vld [vmem:[#allocation9 + $0xe0] sm:$0xff]
    %v2292 = vld [vmem:[#allocation9 + $0xe8] sm:$0xff]
    %v2293 = vld [vmem:[#allocation9 + $0xf0] sm:$0xff]
    %v2294 = vld [vmem:[#allocation9 + $0xf8] sm:$0xff]
    %v2327 = vunpack.c.l.b16 %v2263
    %v2328 = vunpack.c.h.b16 %v2263
    %v2329 = vunpack.c.l.b16 %v2264
    %v2330 = vunpack.c.h.b16 %v2264
    %v2331 = vunpack.c.l.b16 %v2265
    %v2332 = vunpack.c.h.b16 %v2265
    %v2333 = vunpack.c.l.b16 %v2266
    %v2334 = vunpack.c.h.b16 %v2266
    %v2335 = vunpack.c.l.b16 %v2267
    %v2336 = vunpack.c.h.b16 %v2267
    %v2337 = vunpack.c.l.b16 %v2268
    %v2338 = vunpack.c.h.b16 %v2268
    %v2339 = vunpack.c.l.b16 %v2269
    %v2340 = vunpack.c.h.b16 %v2269
    %v2341 = vunpack.c.l.b16 %v2270
    %v2342 = vunpack.c.h.b16 %v2270
    %v2343 = vunpack.c.l.b16 %v2271
    %v2344 = vunpack.c.h.b16 %v2271
    %v2345 = vunpack.c.l.b16 %v2272
    %v2346 = vunpack.c.h.b16 %v2272
    %v2347 = vunpack.c.l.b16 %v2273
    %v2348 = vunpack.c.h.b16 %v2273
    %v2349 = vunpack.c.l.b16 %v2274
    %v2350 = vunpack.c.h.b16 %v2274
    %v2351 = vunpack.c.l.b16 %v2275
    %v2352 = vunpack.c.h.b16 %v2275
    %v2353 = vunpack.c.l.b16 %v2276
    %v2354 = vunpack.c.h.b16 %v2276
    %v2355 = vunpack.c.l.b16 %v2277
    %v2356 = vunpack.c.h.b16 %v2277
    %v2357 = vunpack.c.l.b16 %v2278
    %v2358 = vunpack.c.h.b16 %v2278
    %v2359 = vunpack.c.l.b16 %v2279
    %v2360 = vunpack.c.h.b16 %v2279
    %v2361 = vunpack.c.l.b16 %v2280
    %v2362 = vunpack.c.h.b16 %v2280
    %v2363 = vunpack.c.l.b16 %v2281
    %v2364 = vunpack.c.h.b16 %v2281
    %v2365 = vunpack.c.l.b16 %v2282
    %v2366 = vunpack.c.h.b16 %v2282
    %v2367 = vunpack.c.l.b16 %v2283
    %v2368 = vunpack.c.h.b16 %v2283
    %v2369 = vunpack.c.l.b16 %v2284
    %v2370 = vunpack.c.h.b16 %v2284
    %v2371 = vunpack.c.l.b16 %v2285
    %v2372 = vunpack.c.h.b16 %v2285
    %v2373 = vunpack.c.l.b16 %v2286
    %v2374 = vunpack.c.h.b16 %v2286
    %v2375 = vunpack.c.l.b16 %v2287
    %v2376 = vunpack.c.h.b16 %v2287
    %v2377 = vunpack.c.l.b16 %v2288
    %v2378 = vunpack.c.h.b16 %v2288
    %v2379 = vunpack.c.l.b16 %v2289
    %v2380 = vunpack.c.h.b16 %v2289
    %v2381 = vunpack.c.l.b16 %v2290
    %v2382 = vunpack.c.h.b16 %v2290
    %v2383 = vunpack.c.l.b16 %v2291
    %v2384 = vunpack.c.h.b16 %v2291
    %v2385 = vunpack.c.l.b16 %v2292
    %v2386 = vunpack.c.h.b16 %v2292
    %v2387 = vunpack.c.l.b16 %v2293
    %v2388 = vunpack.c.h.b16 %v2293
    %v2389 = vunpack.c.l.b16 %v2294
    %v2390 = vunpack.c.h.b16 %v2294
    %v2391 = vpack.c.b16 %v2331, %v2327
    %v2392 = vpack.c.b16 %v2332, %v2328
    %v2393 = vpack.c.b16 %v2333, %v2329
    %v2394 = vpack.c.b16 %v2334, %v2330
    %v2395 = vpack.c.b16 %v2339, %v2335
    %v2396 = vpack.c.b16 %v2340, %v2336
    %v2397 = vpack.c.b16 %v2341, %v2337
    %v2398 = vpack.c.b16 %v2342, %v2338
    %v2399 = vpack.c.b16 %v2347, %v2343
    %v2400 = vpack.c.b16 %v2348, %v2344
    %v2401 = vpack.c.b16 %v2349, %v2345
    %v2402 = vpack.c.b16 %v2350, %v2346
    %v2403 = vpack.c.b16 %v2355, %v2351
    %v2404 = vpack.c.b16 %v2356, %v2352
    %v2405 = vpack.c.b16 %v2357, %v2353
    %v2406 = vpack.c.b16 %v2358, %v2354
    %v2407 = vpack.c.b16 %v2363, %v2359
    %v2408 = vpack.c.b16 %v2364, %v2360
    %v2409 = vpack.c.b16 %v2365, %v2361
    %v2410 = vpack.c.b16 %v2366, %v2362
    %v2411 = vpack.c.b16 %v2371, %v2367
    %v2412 = vpack.c.b16 %v2372, %v2368
    %v2413 = vpack.c.b16 %v2373, %v2369
    %v2414 = vpack.c.b16 %v2374, %v2370
    %v2415 = vpack.c.b16 %v2379, %v2375
    %v2416 = vpack.c.b16 %v2380, %v2376
    %v2417 = vpack.c.b16 %v2381, %v2377
    %v2418 = vpack.c.b16 %v2382, %v2378
    %v2419 = vpack.c.b16 %v2387, %v2383
    %v2420 = vpack.c.b16 %v2388, %v2384
    %v2421 = vpack.c.b16 %v2389, %v2385
    %v2422 = vpack.c.b16 %v2390, %v2386
    %2455 = vmatprep.subr.bf16.mxu0 %v2420
    %2456 = vmatpush1.bf16.msra.mxu0 %v2419
    %2457 = vmatprep.subr.bf16.mxu0 %v2416
    %2458 = vmatpush1.bf16.msra.mxu0 %v2415
    %2459 = vmatprep.subr.bf16.mxu0 %v2412
    %2460 = vmatpush1.bf16.msra.mxu0 %v2411
    %2461 = vmatprep.subr.bf16.mxu0 %v2408
    %2462 = vmatpush1.bf16.msra.mxu0 %v2407
    %2463 = vmatprep.subr.bf16.mxu0 %v2404
    %2464 = vmatpush1.bf16.msra.mxu0 %v2403
    %2465 = vmatprep.subr.bf16.mxu0 %v2400
    %2466 = vmatpush1.bf16.msra.mxu0 %v2399
    %2467 = vmatprep.subr.bf16.mxu0 %v2396
    %2468 = vmatpush1.bf16.msra.mxu0 %v2395
    %2469 = vmatprep.subr.bf16.mxu0 %v2392
    %2470 = vmatpush1.bf16.msra.mxu0 %v2391
    %2471 = vmatprep.subr.bf16.mxu0 0
    %2472 = vmatpush2.bf16.msra.mxu0 0
    %2473 = vmatprep.subr.bf16.mxu0 0
    %2474 = vmatpush2.bf16.msra.mxu0 0
    %2475 = vmatprep.subr.bf16.mxu0 0
    %2476 = vmatpush2.bf16.msra.mxu0 0
    %2477 = vmatprep.subr.bf16.mxu0 0
    %2478 = vmatpush2.bf16.msra.mxu0 0
    %2479 = vmatprep.subr.bf16.mxu0 0
    %2480 = vmatpush2.bf16.msra.mxu0 0
    %2481 = vmatprep.subr.bf16.mxu0 0
    %2482 = vmatpush2.bf16.msra.mxu0 0
    %2483 = vmatprep.subr.bf16.mxu0 0
    %2484 = vmatpush2.bf16.msra.mxu0 0
    %2485 = vmatprep.subr.bf16.mxu0 0
    %2486 = vmatpush2.bf16.msra.mxu0 0
    %2487 = vmatprep.mubr.bf16.mxu0 0
    %2488 = vmatmul.mubr.bf16.gmra.mxu0 %v2262
    %v2489 = vpop.f32.mrf.mxu0
    %v2490 = vadd.f32 0.0, %v2489
    %v2491 = vpop.f32.mrf.mxu0
    %v2492 = vadd.f32 0.0, %v2491
    %v2493 = vpop.f32.mrf.mxu0
    %v2494 = vpop.f32.mrf.mxu0
    %2495 = vdwg.mxu0
    %2496 = vmatprep.subr.bf16.mxu0 %v2422
    %2497 = vmatpush1.bf16.msra.mxu0 %v2421
    %2498 = vmatprep.subr.bf16.mxu0 %v2418
    %2499 = vmatpush1.bf16.msra.mxu0 %v2417
    %2500 = vmatprep.subr.bf16.mxu0 %v2414
    %2501 = vmatpush1.bf16.msra.mxu0 %v2413
    %2502 = vmatprep.subr.bf16.mxu0 %v2410
    %2503 = vmatpush1.bf16.msra.mxu0 %v2409
    %2504 = vmatprep.subr.bf16.mxu0 %v2406
    %2505 = vmatpush1.bf16.msra.mxu0 %v2405
    %2506 = vmatprep.subr.bf16.mxu0 %v2402
    %2507 = vmatpush1.bf16.msra.mxu0 %v2401
    %2508 = vmatprep.subr.bf16.mxu0 %v2398
    %2509 = vmatpush1.bf16.msra.mxu0 %v2397
    %2510 = vmatprep.subr.bf16.mxu0 %v2394
    %2511 = vmatpush1.bf16.msra.mxu0 %v2393
    %2512 = vmatprep.subr.bf16.mxu0 0
    %2513 = vmatpush2.bf16.msra.mxu0 0
    %2514 = vmatprep.subr.bf16.mxu0 0
    %2515 = vmatpush2.bf16.msra.mxu0 0
    %2516 = vmatprep.subr.bf16.mxu0 0
    %2517 = vmatpush2.bf16.msra.mxu0 0
    %2518 = vmatprep.subr.bf16.mxu0 0
    %2519 = vmatpush2.bf16.msra.mxu0 0
    %2520 = vmatprep.subr.bf16.mxu0 0
    %2521 = vmatpush2.bf16.msra.mxu0 0
    %2522 = vmatprep.subr.bf16.mxu0 0
    %2523 = vmatpush2.bf16.msra.mxu0 0
    %2524 = vmatprep.subr.bf16.mxu0 0
    %2525 = vmatpush2.bf16.msra.mxu0 0
    %2526 = vmatprep.subr.bf16.mxu0 0
    %2527 = vmatpush2.bf16.msra.mxu0 0
    %2528 = vmatprep.mubr.bf16.mxu0 0
    %2529 = vmatmul.mubr.bf16.gmra.mxu0 %v2262
    %v2530 = vpop.f32.mrf.mxu0
    %v2531 = vadd.f32 0.0, %v2530
    %v2532 = vpop.f32.mrf.mxu0
    %v2533 = vadd.f32 0.0, %v2532
    %v2534 = vpop.f32.mrf.mxu0
    %v2535 = vpop.f32.mrf.mxu0
    %2536 = vdwg.mxu0
    %v2537 = vadd.f32 %v2215, %v2490
    %v2538 = vadd.f32 %v2217, %v2492
    %v2539 = vadd.f32 %v2256, %v2531
    %v2540 = vadd.f32 %v2258, %v2533
    %v2541 = vmul.f32 %v2537, 0.5
    %v2542 = vtanh.pop %v2541
    %v2543 = vmul.f32 %v2542, 0.5
    %v2544 = vadd.f32 %v2543, 0.5
    %v2545 = vmul.f32 %v2538, 0.5
    %v2546 = vtanh.pop %v2545
    %v2547 = vmul.f32 %v2546, 0.5
    %v2548 = vadd.f32 %v2547, 0.5
    %v2549 = vtanh.pop %v2539
    %v2550 = vmul.f32 %v2540, 0.5
    %v2551 = vtanh.pop %v2550
    %v2552 = vmul.f32 %v2551, 0.5
    %v2553 = vadd.f32 %v2552, 0.5
    %v2554 = vmul.f32 %v2548, %v2146
    %v2555 = vmul.f32 %v2544, %v2549
    %v2556 = vadd.f32 %v2554, %v2555
    %v2557 = vtanh.pop %v2556
    %v2558 = vmul.f32 %v2553, %v2557
    %s2559 = scalar_lea.vmem [#allocation10], 10
    %2560 = vst [vmem:[%s2559] sm:$0x3] %v2558
    %s2561 = scalar_lea.vmem [#allocation4], 6
    %v2562 = vld [vmem:[%s2561] sm:$0x1]
    %v2563 = vld [vmem:[#allocation7] sm:$0xff]
    %v2564 = vld [vmem:[#allocation7 + $0x8] sm:$0xff]
    %v2565 = vld [vmem:[#allocation7 + $0x10] sm:$0xff]
    %v2566 = vld [vmem:[#allocation7 + $0x18] sm:$0xff]
    %v2571 = vunpack.c.l.b16 %v2563
    %v2572 = vunpack.c.h.b16 %v2563
    %v2573 = vunpack.c.l.b16 %v2564
    %v2574 = vunpack.c.h.b16 %v2564
    %v2575 = vunpack.c.l.b16 %v2565
    %v2576 = vunpack.c.h.b16 %v2565
    %v2577 = vunpack.c.l.b16 %v2566
    %v2578 = vunpack.c.h.b16 %v2566
    %v2579 = vpack.c.b16 %v2575, %v2571
    %v2580 = vpack.c.b16 %v2576, %v2572
    %v2581 = vpack.c.b16 %v2577, %v2573
    %v2582 = vpack.c.b16 %v2578, %v2574
    %v2588 = vsel %vm127, %v2562, 0
    %2590 = vmatprep.subr.bf16.mxu0 0
    %2591 = vmatpush1.bf16.msra.mxu0 0
    %2592 = vmatprep.subr.bf16.mxu0 0
    %2593 = vmatpush1.bf16.msra.mxu0 0
    %2594 = vmatprep.subr.bf16.mxu0 0
    %2595 = vmatpush1.bf16.msra.mxu0 0
    %2596 = vmatprep.subr.bf16.mxu0 0
    %2597 = vmatpush1.bf16.msra.mxu0 0
    %2598 = vmatprep.subr.bf16.mxu0 0
    %2599 = vmatpush1.bf16.msra.mxu0 0
    %2600 = vmatprep.subr.bf16.mxu0 0
    %2601 = vmatpush1.bf16.msra.mxu0 0
    %2602 = vmatprep.subr.bf16.mxu0 0
    %2603 = vmatpush1.bf16.msra.mxu0 0
    %2604 = vmatprep.subr.bf16.mxu0 %v2580
    %2605 = vmatpush1.bf16.msra.mxu0 %v2579
    %2606 = vmatprep.subr.bf16.mxu0 0
    %2607 = vmatpush2.bf16.msra.mxu0 0
    %2608 = vmatprep.subr.bf16.mxu0 0
    %2609 = vmatpush2.bf16.msra.mxu0 0
    %2610 = vmatprep.subr.bf16.mxu0 0
    %2611 = vmatpush2.bf16.msra.mxu0 0
    %2612 = vmatprep.subr.bf16.mxu0 0
    %2613 = vmatpush2.bf16.msra.mxu0 0
    %2614 = vmatprep.subr.bf16.mxu0 0
    %2615 = vmatpush2.bf16.msra.mxu0 0
    %2616 = vmatprep.subr.bf16.mxu0 0
    %2617 = vmatpush2.bf16.msra.mxu0 0
    %2618 = vmatprep.subr.bf16.mxu0 0
    %2619 = vmatpush2.bf16.msra.mxu0 0
    %2620 = vmatprep.subr.bf16.mxu0 0
    %2621 = vmatpush2.bf16.msra.mxu0 0
    %2622 = vmatprep.mubr.bf16.mxu0 0
    %2623 = vmatmul.mubr.bf16.gmra.mxu0 %v2588
    %v2624 = vpop.f32.mrf.mxu0
    %v2625 = vadd.f32 %v90, %v2624
    %v2626 = vpop.f32.mrf.mxu0
    %v2627 = vadd.f32 %v94, %v2626
    %v2628 = vpop.f32.mrf.mxu0
    %v2629 = vpop.f32.mrf.mxu0
    %2630 = vdwg.mxu0
    %2631 = vmatprep.subr.bf16.mxu0 0
    %2632 = vmatpush1.bf16.msra.mxu0 0
    %2633 = vmatprep.subr.bf16.mxu0 0
    %2634 = vmatpush1.bf16.msra.mxu0 0
    %2635 = vmatprep.subr.bf16.mxu0 0
    %2636 = vmatpush1.bf16.msra.mxu0 0
    %2637 = vmatprep.subr.bf16.mxu0 0
    %2638 = vmatpush1.bf16.msra.mxu0 0
    %2639 = vmatprep.subr.bf16.mxu0 0
    %2640 = vmatpush1.bf16.msra.mxu0 0
    %2641 = vmatprep.subr.bf16.mxu0 0
    %2642 = vmatpush1.bf16.msra.mxu0 0
    %2643 = vmatprep.subr.bf16.mxu0 0
    %2644 = vmatpush1.bf16.msra.mxu0 0
    %2645 = vmatprep.subr.bf16.mxu0 %v2582
    %2646 = vmatpush1.bf16.msra.mxu0 %v2581
    %2647 = vmatprep.subr.bf16.mxu0 0
    %2648 = vmatpush2.bf16.msra.mxu0 0
    %2649 = vmatprep.subr.bf16.mxu0 0
    %2650 = vmatpush2.bf16.msra.mxu0 0
    %2651 = vmatprep.subr.bf16.mxu0 0
    %2652 = vmatpush2.bf16.msra.mxu0 0
    %2653 = vmatprep.subr.bf16.mxu0 0
    %2654 = vmatpush2.bf16.msra.mxu0 0
    %2655 = vmatprep.subr.bf16.mxu0 0
    %2656 = vmatpush2.bf16.msra.mxu0 0
    %2657 = vmatprep.subr.bf16.mxu0 0
    %2658 = vmatpush2.bf16.msra.mxu0 0
    %2659 = vmatprep.subr.bf16.mxu0 0
    %2660 = vmatpush2.bf16.msra.mxu0 0
    %2661 = vmatprep.subr.bf16.mxu0 0
    %2662 = vmatpush2.bf16.msra.mxu0 0
    %2663 = vmatprep.mubr.bf16.mxu0 0
    %2664 = vmatmul.mubr.bf16.gmra.mxu0 %v2588
    %v2665 = vpop.f32.mrf.mxu0
    %v2666 = vadd.f32 %v98, %v2665
    %v2667 = vpop.f32.mrf.mxu0
    %v2668 = vadd.f32 %v102, %v2667
    %v2669 = vpop.f32.mrf.mxu0
    %v2670 = vpop.f32.mrf.mxu0
    %2671 = vdwg.mxu0
    %v2672 = vpack.c.bf16 %v2558, %v2558
    %v2673 = vld [vmem:[#allocation9] sm:$0xff]
    %v2674 = vld [vmem:[#allocation9 + $0x8] sm:$0xff]
    %v2675 = vld [vmem:[#allocation9 + $0x10] sm:$0xff]
    %v2676 = vld [vmem:[#allocation9 + $0x18] sm:$0xff]
    %v2677 = vld [vmem:[#allocation9 + $0x20] sm:$0xff]
    %v2678 = vld [vmem:[#allocation9 + $0x28] sm:$0xff]
    %v2679 = vld [vmem:[#allocation9 + $0x30] sm:$0xff]
    %v2680 = vld [vmem:[#allocation9 + $0x38] sm:$0xff]
    %v2681 = vld [vmem:[#allocation9 + $0x40] sm:$0xff]
    %v2682 = vld [vmem:[#allocation9 + $0x48] sm:$0xff]
    %v2683 = vld [vmem:[#allocation9 + $0x50] sm:$0xff]
    %v2684 = vld [vmem:[#allocation9 + $0x58] sm:$0xff]
    %v2685 = vld [vmem:[#allocation9 + $0x60] sm:$0xff]
    %v2686 = vld [vmem:[#allocation9 + $0x68] sm:$0xff]
    %v2687 = vld [vmem:[#allocation9 + $0x70] sm:$0xff]
    %v2688 = vld [vmem:[#allocation9 + $0x78] sm:$0xff]
    %v2689 = vld [vmem:[#allocation9 + $0x80] sm:$0xff]
    %v2690 = vld [vmem:[#allocation9 + $0x88] sm:$0xff]
    %v2691 = vld [vmem:[#allocation9 + $0x90] sm:$0xff]
    %v2692 = vld [vmem:[#allocation9 + $0x98] sm:$0xff]
    %v2693 = vld [vmem:[#allocation9 + $0xa0] sm:$0xff]
    %v2694 = vld [vmem:[#allocation9 + $0xa8] sm:$0xff]
    %v2695 = vld [vmem:[#allocation9 + $0xb0] sm:$0xff]
    %v2696 = vld [vmem:[#allocation9 + $0xb8] sm:$0xff]
    %v2697 = vld [vmem:[#allocation9 + $0xc0] sm:$0xff]
    %v2698 = vld [vmem:[#allocation9 + $0xc8] sm:$0xff]
    %v2699 = vld [vmem:[#allocation9 + $0xd0] sm:$0xff]
    %v2700 = vld [vmem:[#allocation9 + $0xd8] sm:$0xff]
    %v2701 = vld [vmem:[#allocation9 + $0xe0] sm:$0xff]
    %v2702 = vld [vmem:[#allocation9 + $0xe8] sm:$0xff]
    %v2703 = vld [vmem:[#allocation9 + $0xf0] sm:$0xff]
    %v2704 = vld [vmem:[#allocation9 + $0xf8] sm:$0xff]
    %v2737 = vunpack.c.l.b16 %v2673
    %v2738 = vunpack.c.h.b16 %v2673
    %v2739 = vunpack.c.l.b16 %v2674
    %v2740 = vunpack.c.h.b16 %v2674
    %v2741 = vunpack.c.l.b16 %v2675
    %v2742 = vunpack.c.h.b16 %v2675
    %v2743 = vunpack.c.l.b16 %v2676
    %v2744 = vunpack.c.h.b16 %v2676
    %v2745 = vunpack.c.l.b16 %v2677
    %v2746 = vunpack.c.h.b16 %v2677
    %v2747 = vunpack.c.l.b16 %v2678
    %v2748 = vunpack.c.h.b16 %v2678
    %v2749 = vunpack.c.l.b16 %v2679
    %v2750 = vunpack.c.h.b16 %v2679
    %v2751 = vunpack.c.l.b16 %v2680
    %v2752 = vunpack.c.h.b16 %v2680
    %v2753 = vunpack.c.l.b16 %v2681
    %v2754 = vunpack.c.h.b16 %v2681
    %v2755 = vunpack.c.l.b16 %v2682
    %v2756 = vunpack.c.h.b16 %v2682
    %v2757 = vunpack.c.l.b16 %v2683
    %v2758 = vunpack.c.h.b16 %v2683
    %v2759 = vunpack.c.l.b16 %v2684
    %v2760 = vunpack.c.h.b16 %v2684
    %v2761 = vunpack.c.l.b16 %v2685
    %v2762 = vunpack.c.h.b16 %v2685
    %v2763 = vunpack.c.l.b16 %v2686
    %v2764 = vunpack.c.h.b16 %v2686
    %v2765 = vunpack.c.l.b16 %v2687
    %v2766 = vunpack.c.h.b16 %v2687
    %v2767 = vunpack.c.l.b16 %v2688
    %v2768 = vunpack.c.h.b16 %v2688
    %v2769 = vunpack.c.l.b16 %v2689
    %v2770 = vunpack.c.h.b16 %v2689
    %v2771 = vunpack.c.l.b16 %v2690
    %v2772 = vunpack.c.h.b16 %v2690
    %v2773 = vunpack.c.l.b16 %v2691
    %v2774 = vunpack.c.h.b16 %v2691
    %v2775 = vunpack.c.l.b16 %v2692
    %v2776 = vunpack.c.h.b16 %v2692
    %v2777 = vunpack.c.l.b16 %v2693
    %v2778 = vunpack.c.h.b16 %v2693
    %v2779 = vunpack.c.l.b16 %v2694
    %v2780 = vunpack.c.h.b16 %v2694
    %v2781 = vunpack.c.l.b16 %v2695
    %v2782 = vunpack.c.h.b16 %v2695
    %v2783 = vunpack.c.l.b16 %v2696
    %v2784 = vunpack.c.h.b16 %v2696
    %v2785 = vunpack.c.l.b16 %v2697
    %v2786 = vunpack.c.h.b16 %v2697
    %v2787 = vunpack.c.l.b16 %v2698
    %v2788 = vunpack.c.h.b16 %v2698
    %v2789 = vunpack.c.l.b16 %v2699
    %v2790 = vunpack.c.h.b16 %v2699
    %v2791 = vunpack.c.l.b16 %v2700
    %v2792 = vunpack.c.h.b16 %v2700
    %v2793 = vunpack.c.l.b16 %v2701
    %v2794 = vunpack.c.h.b16 %v2701
    %v2795 = vunpack.c.l.b16 %v2702
    %v2796 = vunpack.c.h.b16 %v2702
    %v2797 = vunpack.c.l.b16 %v2703
    %v2798 = vunpack.c.h.b16 %v2703
    %v2799 = vunpack.c.l.b16 %v2704
    %v2800 = vunpack.c.h.b16 %v2704
    %v2801 = vpack.c.b16 %v2741, %v2737
    %v2802 = vpack.c.b16 %v2742, %v2738
    %v2803 = vpack.c.b16 %v2743, %v2739
    %v2804 = vpack.c.b16 %v2744, %v2740
    %v2805 = vpack.c.b16 %v2749, %v2745
    %v2806 = vpack.c.b16 %v2750, %v2746
    %v2807 = vpack.c.b16 %v2751, %v2747
    %v2808 = vpack.c.b16 %v2752, %v2748
    %v2809 = vpack.c.b16 %v2757, %v2753
    %v2810 = vpack.c.b16 %v2758, %v2754
    %v2811 = vpack.c.b16 %v2759, %v2755
    %v2812 = vpack.c.b16 %v2760, %v2756
    %v2813 = vpack.c.b16 %v2765, %v2761
    %v2814 = vpack.c.b16 %v2766, %v2762
    %v2815 = vpack.c.b16 %v2767, %v2763
    %v2816 = vpack.c.b16 %v2768, %v2764
    %v2817 = vpack.c.b16 %v2773, %v2769
    %v2818 = vpack.c.b16 %v2774, %v2770
    %v2819 = vpack.c.b16 %v2775, %v2771
    %v2820 = vpack.c.b16 %v2776, %v2772
    %v2821 = vpack.c.b16 %v2781, %v2777
    %v2822 = vpack.c.b16 %v2782, %v2778
    %v2823 = vpack.c.b16 %v2783, %v2779
    %v2824 = vpack.c.b16 %v2784, %v2780
    %v2825 = vpack.c.b16 %v2789, %v2785
    %v2826 = vpack.c.b16 %v2790, %v2786
    %v2827 = vpack.c.b16 %v2791, %v2787
    %v2828 = vpack.c.b16 %v2792, %v2788
    %v2829 = vpack.c.b16 %v2797, %v2793
    %v2830 = vpack.c.b16 %v2798, %v2794
    %v2831 = vpack.c.b16 %v2799, %v2795
    %v2832 = vpack.c.b16 %v2800, %v2796
    %2865 = vmatprep.subr.bf16.mxu0 %v2830
    %2866 = vmatpush1.bf16.msra.mxu0 %v2829
    %2867 = vmatprep.subr.bf16.mxu0 %v2826
    %2868 = vmatpush1.bf16.msra.mxu0 %v2825
    %2869 = vmatprep.subr.bf16.mxu0 %v2822
    %2870 = vmatpush1.bf16.msra.mxu0 %v2821
    %2871 = vmatprep.subr.bf16.mxu0 %v2818
    %2872 = vmatpush1.bf16.msra.mxu0 %v2817
    %2873 = vmatprep.subr.bf16.mxu0 %v2814
    %2874 = vmatpush1.bf16.msra.mxu0 %v2813
    %2875 = vmatprep.subr.bf16.mxu0 %v2810
    %2876 = vmatpush1.bf16.msra.mxu0 %v2809
    %2877 = vmatprep.subr.bf16.mxu0 %v2806
    %2878 = vmatpush1.bf16.msra.mxu0 %v2805
    %2879 = vmatprep.subr.bf16.mxu0 %v2802
    %2880 = vmatpush1.bf16.msra.mxu0 %v2801
    %2881 = vmatprep.subr.bf16.mxu0 0
    %2882 = vmatpush2.bf16.msra.mxu0 0
    %2883 = vmatprep.subr.bf16.mxu0 0
    %2884 = vmatpush2.bf16.msra.mxu0 0
    %2885 = vmatprep.subr.bf16.mxu0 0
    %2886 = vmatpush2.bf16.msra.mxu0 0
    %2887 = vmatprep.subr.bf16.mxu0 0
    %2888 = vmatpush2.bf16.msra.mxu0 0
    %2889 = vmatprep.subr.bf16.mxu0 0
    %2890 = vmatpush2.bf16.msra.mxu0 0
    %2891 = vmatprep.subr.bf16.mxu0 0
    %2892 = vmatpush2.bf16.msra.mxu0 0
    %2893 = vmatprep.subr.bf16.mxu0 0
    %2894 = vmatpush2.bf16.msra.mxu0 0
    %2895 = vmatprep.subr.bf16.mxu0 0
    %2896 = vmatpush2.bf16.msra.mxu0 0
    %2897 = vmatprep.mubr.bf16.mxu0 0
    %2898 = vmatmul.mubr.bf16.gmra.mxu0 %v2672
    %v2899 = vpop.f32.mrf.mxu0
    %v2900 = vadd.f32 0.0, %v2899
    %v2901 = vpop.f32.mrf.mxu0
    %v2902 = vadd.f32 0.0, %v2901
    %v2903 = vpop.f32.mrf.mxu0
    %v2904 = vpop.f32.mrf.mxu0
    %2905 = vdwg.mxu0
    %2906 = vmatprep.subr.bf16.mxu0 %v2832
    %2907 = vmatpush1.bf16.msra.mxu0 %v2831
    %2908 = vmatprep.subr.bf16.mxu0 %v2828
    %2909 = vmatpush1.bf16.msra.mxu0 %v2827
    %2910 = vmatprep.subr.bf16.mxu0 %v2824
    %2911 = vmatpush1.bf16.msra.mxu0 %v2823
    %2912 = vmatprep.subr.bf16.mxu0 %v2820
    %2913 = vmatpush1.bf16.msra.mxu0 %v2819
    %2914 = vmatprep.subr.bf16.mxu0 %v2816
    %2915 = vmatpush1.bf16.msra.mxu0 %v2815
    %2916 = vmatprep.subr.bf16.mxu0 %v2812
    %2917 = vmatpush1.bf16.msra.mxu0 %v2811
    %2918 = vmatprep.subr.bf16.mxu0 %v2808
    %2919 = vmatpush1.bf16.msra.mxu0 %v2807
    %2920 = vmatprep.subr.bf16.mxu0 %v2804
    %2921 = vmatpush1.bf16.msra.mxu0 %v2803
    %2922 = vmatprep.subr.bf16.mxu0 0
    %2923 = vmatpush2.bf16.msra.mxu0 0
    %2924 = vmatprep.subr.bf16.mxu0 0
    %2925 = vmatpush2.bf16.msra.mxu0 0
    %2926 = vmatprep.subr.bf16.mxu0 0
    %2927 = vmatpush2.bf16.msra.mxu0 0
    %2928 = vmatprep.subr.bf16.mxu0 0
    %2929 = vmatpush2.bf16.msra.mxu0 0
    %2930 = vmatprep.subr.bf16.mxu0 0
    %2931 = vmatpush2.bf16.msra.mxu0 0
    %2932 = vmatprep.subr.bf16.mxu0 0
    %2933 = vmatpush2.bf16.msra.mxu0 0
    %2934 = vmatprep.subr.bf16.mxu0 0
    %2935 = vmatpush2.bf16.msra.mxu0 0
    %2936 = vmatprep.subr.bf16.mxu0 0
    %2937 = vmatpush2.bf16.msra.mxu0 0
    %2938 = vmatprep.mubr.bf16.mxu0 0
    %2939 = vmatmul.mubr.bf16.gmra.mxu0 %v2672
    %v2940 = vpop.f32.mrf.mxu0
    %v2941 = vadd.f32 0.0, %v2940
    %v2942 = vpop.f32.mrf.mxu0
    %v2943 = vadd.f32 0.0, %v2942
    %v2944 = vpop.f32.mrf.mxu0
    %v2945 = vpop.f32.mrf.mxu0
    %2946 = vdwg.mxu0
    %v2947 = vadd.f32 %v2625, %v2900
    %v2948 = vadd.f32 %v2627, %v2902
    %v2949 = vadd.f32 %v2666, %v2941
    %v2950 = vadd.f32 %v2668, %v2943
    %v2951 = vmul.f32 %v2947, 0.5
    %v2952 = vtanh.pop %v2951
    %v2953 = vmul.f32 %v2952, 0.5
    %v2954 = vadd.f32 %v2953, 0.5
    %v2955 = vmul.f32 %v2948, 0.5
    %v2956 = vtanh.pop %v2955
    %v2957 = vmul.f32 %v2956, 0.5
    %v2958 = vadd.f32 %v2957, 0.5
    %v2959 = vtanh.pop %v2949
    %v2960 = vmul.f32 %v2950, 0.5
    %v2961 = vtanh.pop %v2960
    %v2962 = vmul.f32 %v2961, 0.5
    %v2963 = vadd.f32 %v2962, 0.5
    %v2964 = vmul.f32 %v2958, %v2556
    %v2965 = vmul.f32 %v2954, %v2959
    %v2966 = vadd.f32 %v2964, %v2965
    %v2967 = vtanh.pop %v2966
    %v2968 = vmul.f32 %v2963, %v2967
    %s2969 = scalar_lea.vmem [#allocation10], 12
    %2970 = vst [vmem:[%s2969] sm:$0x3] %v2968
    %s2971 = scalar_lea.vmem [#allocation4], 7
    %v2972 = vld [vmem:[%s2971] sm:$0x1]
    %v2973 = vld [vmem:[#allocation7] sm:$0xff]
    %v2974 = vld [vmem:[#allocation7 + $0x8] sm:$0xff]
    %v2975 = vld [vmem:[#allocation7 + $0x10] sm:$0xff]
    %v2976 = vld [vmem:[#allocation7 + $0x18] sm:$0xff]
    %v2981 = vunpack.c.l.b16 %v2973
    %v2982 = vunpack.c.h.b16 %v2973
    %v2983 = vunpack.c.l.b16 %v2974
    %v2984 = vunpack.c.h.b16 %v2974
    %v2985 = vunpack.c.l.b16 %v2975
    %v2986 = vunpack.c.h.b16 %v2975
    %v2987 = vunpack.c.l.b16 %v2976
    %v2988 = vunpack.c.h.b16 %v2976
    %v2989 = vpack.c.b16 %v2985, %v2981
    %v2990 = vpack.c.b16 %v2986, %v2982
    %v2991 = vpack.c.b16 %v2987, %v2983
    %v2992 = vpack.c.b16 %v2988, %v2984
    %v2998 = vsel %vm127, %v2972, 0
    %3000 = vmatprep.subr.bf16.mxu0 0
    %3001 = vmatpush1.bf16.msra.mxu0 0
    %3002 = vmatprep.subr.bf16.mxu0 0
    %3003 = vmatpush1.bf16.msra.mxu0 0
    %3004 = vmatprep.subr.bf16.mxu0 0
    %3005 = vmatpush1.bf16.msra.mxu0 0
    %3006 = vmatprep.subr.bf16.mxu0 0
    %3007 = vmatpush1.bf16.msra.mxu0 0
    %3008 = vmatprep.subr.bf16.mxu0 0
    %3009 = vmatpush1.bf16.msra.mxu0 0
    %3010 = vmatprep.subr.bf16.mxu0 0
    %3011 = vmatpush1.bf16.msra.mxu0 0
    %3012 = vmatprep.subr.bf16.mxu0 0
    %3013 = vmatpush1.bf16.msra.mxu0 0
    %3014 = vmatprep.subr.bf16.mxu0 %v2990
    %3015 = vmatpush1.bf16.msra.mxu0 %v2989
    %3016 = vmatprep.subr.bf16.mxu0 0
    %3017 = vmatpush2.bf16.msra.mxu0 0
    %3018 = vmatprep.subr.bf16.mxu0 0
    %3019 = vmatpush2.bf16.msra.mxu0 0
    %3020 = vmatprep.subr.bf16.mxu0 0
    %3021 = vmatpush2.bf16.msra.mxu0 0
    %3022 = vmatprep.subr.bf16.mxu0 0
    %3023 = vmatpush2.bf16.msra.mxu0 0
    %3024 = vmatprep.subr.bf16.mxu0 0
    %3025 = vmatpush2.bf16.msra.mxu0 0
    %3026 = vmatprep.subr.bf16.mxu0 0
    %3027 = vmatpush2.bf16.msra.mxu0 0
    %3028 = vmatprep.subr.bf16.mxu0 0
    %3029 = vmatpush2.bf16.msra.mxu0 0
    %3030 = vmatprep.subr.bf16.mxu0 0
    %3031 = vmatpush2.bf16.msra.mxu0 0
    %3032 = vmatprep.mubr.bf16.mxu0 0
    %3033 = vmatmul.mubr.bf16.gmra.mxu0 %v2998
    %v3034 = vpop.f32.mrf.mxu0
    %v3035 = vadd.f32 %v90, %v3034
    %v3036 = vpop.f32.mrf.mxu0
    %v3037 = vadd.f32 %v94, %v3036
    %v3038 = vpop.f32.mrf.mxu0
    %v3039 = vpop.f32.mrf.mxu0
    %3040 = vdwg.mxu0
    %3041 = vmatprep.subr.bf16.mxu0 0
    %3042 = vmatpush1.bf16.msra.mxu0 0
    %3043 = vmatprep.subr.bf16.mxu0 0
    %3044 = vmatpush1.bf16.msra.mxu0 0
    %3045 = vmatprep.subr.bf16.mxu0 0
    %3046 = vmatpush1.bf16.msra.mxu0 0
    %3047 = vmatprep.subr.bf16.mxu0 0
    %3048 = vmatpush1.bf16.msra.mxu0 0
    %3049 = vmatprep.subr.bf16.mxu0 0
    %3050 = vmatpush1.bf16.msra.mxu0 0
    %3051 = vmatprep.subr.bf16.mxu0 0
    %3052 = vmatpush1.bf16.msra.mxu0 0
    %3053 = vmatprep.subr.bf16.mxu0 0
    %3054 = vmatpush1.bf16.msra.mxu0 0
    %3055 = vmatprep.subr.bf16.mxu0 %v2992
    %3056 = vmatpush1.bf16.msra.mxu0 %v2991
    %3057 = vmatprep.subr.bf16.mxu0 0
    %3058 = vmatpush2.bf16.msra.mxu0 0
    %3059 = vmatprep.subr.bf16.mxu0 0
    %3060 = vmatpush2.bf16.msra.mxu0 0
    %3061 = vmatprep.subr.bf16.mxu0 0
    %3062 = vmatpush2.bf16.msra.mxu0 0
    %3063 = vmatprep.subr.bf16.mxu0 0
    %3064 = vmatpush2.bf16.msra.mxu0 0
    %3065 = vmatprep.subr.bf16.mxu0 0
    %3066 = vmatpush2.bf16.msra.mxu0 0
    %3067 = vmatprep.subr.bf16.mxu0 0
    %3068 = vmatpush2.bf16.msra.mxu0 0
    %3069 = vmatprep.subr.bf16.mxu0 0
    %3070 = vmatpush2.bf16.msra.mxu0 0
    %3071 = vmatprep.subr.bf16.mxu0 0
    %3072 = vmatpush2.bf16.msra.mxu0 0
    %3073 = vmatprep.mubr.bf16.mxu0 0
    %3074 = vmatmul.mubr.bf16.gmra.mxu0 %v2998
    %v3075 = vpop.f32.mrf.mxu0
    %v3076 = vadd.f32 %v98, %v3075
    %v3077 = vpop.f32.mrf.mxu0
    %v3078 = vadd.f32 %v102, %v3077
    %v3079 = vpop.f32.mrf.mxu0
    %v3080 = vpop.f32.mrf.mxu0
    %3081 = vdwg.mxu0
    %v3082 = vpack.c.bf16 %v2968, %v2968
    %v3083 = vld [vmem:[#allocation9] sm:$0xff]
    %v3084 = vld [vmem:[#allocation9 + $0x8] sm:$0xff]
    %v3085 = vld [vmem:[#allocation9 + $0x10] sm:$0xff]
    %v3086 = vld [vmem:[#allocation9 + $0x18] sm:$0xff]
    %v3087 = vld [vmem:[#allocation9 + $0x20] sm:$0xff]
    %v3088 = vld [vmem:[#allocation9 + $0x28] sm:$0xff]
    %v3089 = vld [vmem:[#allocation9 + $0x30] sm:$0xff]
    %v3090 = vld [vmem:[#allocation9 + $0x38] sm:$0xff]
    %v3091 = vld [vmem:[#allocation9 + $0x40] sm:$0xff]
    %v3092 = vld [vmem:[#allocation9 + $0x48] sm:$0xff]
    %v3093 = vld [vmem:[#allocation9 + $0x50] sm:$0xff]
    %v3094 = vld [vmem:[#allocation9 + $0x58] sm:$0xff]
    %v3095 = vld [vmem:[#allocation9 + $0x60] sm:$0xff]
    %v3096 = vld [vmem:[#allocation9 + $0x68] sm:$0xff]
    %v3097 = vld [vmem:[#allocation9 + $0x70] sm:$0xff]
    %v3098 = vld [vmem:[#allocation9 + $0x78] sm:$0xff]
    %v3099 = vld [vmem:[#allocation9 + $0x80] sm:$0xff]
    %v3100 = vld [vmem:[#allocation9 + $0x88] sm:$0xff]
    %v3101 = vld [vmem:[#allocation9 + $0x90] sm:$0xff]
    %v3102 = vld [vmem:[#allocation9 + $0x98] sm:$0xff]
    %v3103 = vld [vmem:[#allocation9 + $0xa0] sm:$0xff]
    %v3104 = vld [vmem:[#allocation9 + $0xa8] sm:$0xff]
    %v3105 = vld [vmem:[#allocation9 + $0xb0] sm:$0xff]
    %v3106 = vld [vmem:[#allocation9 + $0xb8] sm:$0xff]
    %v3107 = vld [vmem:[#allocation9 + $0xc0] sm:$0xff]
    %v3108 = vld [vmem:[#allocation9 + $0xc8] sm:$0xff]
    %v3109 = vld [vmem:[#allocation9 + $0xd0] sm:$0xff]
    %v3110 = vld [vmem:[#allocation9 + $0xd8] sm:$0xff]
    %v3111 = vld [vmem:[#allocation9 + $0xe0] sm:$0xff]
    %v3112 = vld [vmem:[#allocation9 + $0xe8] sm:$0xff]
    %v3113 = vld [vmem:[#allocation9 + $0xf0] sm:$0xff]
    %v3114 = vld [vmem:[#allocation9 + $0xf8] sm:$0xff]
    %v3147 = vunpack.c.l.b16 %v3083
    %v3148 = vunpack.c.h.b16 %v3083
    %v3149 = vunpack.c.l.b16 %v3084
    %v3150 = vunpack.c.h.b16 %v3084
    %v3151 = vunpack.c.l.b16 %v3085
    %v3152 = vunpack.c.h.b16 %v3085
    %v3153 = vunpack.c.l.b16 %v3086
    %v3154 = vunpack.c.h.b16 %v3086
    %v3155 = vunpack.c.l.b16 %v3087
    %v3156 = vunpack.c.h.b16 %v3087
    %v3157 = vunpack.c.l.b16 %v3088
    %v3158 = vunpack.c.h.b16 %v3088
    %v3159 = vunpack.c.l.b16 %v3089
    %v3160 = vunpack.c.h.b16 %v3089
    %v3161 = vunpack.c.l.b16 %v3090
    %v3162 = vunpack.c.h.b16 %v3090
    %v3163 = vunpack.c.l.b16 %v3091
    %v3164 = vunpack.c.h.b16 %v3091
    %v3165 = vunpack.c.l.b16 %v3092
    %v3166 = vunpack.c.h.b16 %v3092
    %v3167 = vunpack.c.l.b16 %v3093
    %v3168 = vunpack.c.h.b16 %v3093
    %v3169 = vunpack.c.l.b16 %v3094
    %v3170 = vunpack.c.h.b16 %v3094
    %v3171 = vunpack.c.l.b16 %v3095
    %v3172 = vunpack.c.h.b16 %v3095
    %v3173 = vunpack.c.l.b16 %v3096
    %v3174 = vunpack.c.h.b16 %v3096
    %v3175 = vunpack.c.l.b16 %v3097
    %v3176 = vunpack.c.h.b16 %v3097
    %v3177 = vunpack.c.l.b16 %v3098
    %v3178 = vunpack.c.h.b16 %v3098
    %v3179 = vunpack.c.l.b16 %v3099
    %v3180 = vunpack.c.h.b16 %v3099
    %v3181 = vunpack.c.l.b16 %v3100
    %v3182 = vunpack.c.h.b16 %v3100
    %v3183 = vunpack.c.l.b16 %v3101
    %v3184 = vunpack.c.h.b16 %v3101
    %v3185 = vunpack.c.l.b16 %v3102
    %v3186 = vunpack.c.h.b16 %v3102
    %v3187 = vunpack.c.l.b16 %v3103
    %v3188 = vunpack.c.h.b16 %v3103
    %v3189 = vunpack.c.l.b16 %v3104
    %v3190 = vunpack.c.h.b16 %v3104
    %v3191 = vunpack.c.l.b16 %v3105
    %v3192 = vunpack.c.h.b16 %v3105
    %v3193 = vunpack.c.l.b16 %v3106
    %v3194 = vunpack.c.h.b16 %v3106
    %v3195 = vunpack.c.l.b16 %v3107
    %v3196 = vunpack.c.h.b16 %v3107
    %v3197 = vunpack.c.l.b16 %v3108
    %v3198 = vunpack.c.h.b16 %v3108
    %v3199 = vunpack.c.l.b16 %v3109
    %v3200 = vunpack.c.h.b16 %v3109
    %v3201 = vunpack.c.l.b16 %v3110
    %v3202 = vunpack.c.h.b16 %v3110
    %v3203 = vunpack.c.l.b16 %v3111
    %v3204 = vunpack.c.h.b16 %v3111
    %v3205 = vunpack.c.l.b16 %v3112
    %v3206 = vunpack.c.h.b16 %v3112
    %v3207 = vunpack.c.l.b16 %v3113
    %v3208 = vunpack.c.h.b16 %v3113
    %v3209 = vunpack.c.l.b16 %v3114
    %v3210 = vunpack.c.h.b16 %v3114
    %v3211 = vpack.c.b16 %v3151, %v3147
    %v3212 = vpack.c.b16 %v3152, %v3148
    %v3213 = vpack.c.b16 %v3153, %v3149
    %v3214 = vpack.c.b16 %v3154, %v3150
    %v3215 = vpack.c.b16 %v3159, %v3155
    %v3216 = vpack.c.b16 %v3160, %v3156
    %v3217 = vpack.c.b16 %v3161, %v3157
    %v3218 = vpack.c.b16 %v3162, %v3158
    %v3219 = vpack.c.b16 %v3167, %v3163
    %v3220 = vpack.c.b16 %v3168, %v3164
    %v3221 = vpack.c.b16 %v3169, %v3165
    %v3222 = vpack.c.b16 %v3170, %v3166
    %v3223 = vpack.c.b16 %v3175, %v3171
    %v3224 = vpack.c.b16 %v3176, %v3172
    %v3225 = vpack.c.b16 %v3177, %v3173
    %v3226 = vpack.c.b16 %v3178, %v3174
    %v3227 = vpack.c.b16 %v3183, %v3179
    %v3228 = vpack.c.b16 %v3184, %v3180
    %v3229 = vpack.c.b16 %v3185, %v3181
    %v3230 = vpack.c.b16 %v3186, %v3182
    %v3231 = vpack.c.b16 %v3191, %v3187
    %v3232 = vpack.c.b16 %v3192, %v3188
    %v3233 = vpack.c.b16 %v3193, %v3189
    %v3234 = vpack.c.b16 %v3194, %v3190
    %v3235 = vpack.c.b16 %v3199, %v3195
    %v3236 = vpack.c.b16 %v3200, %v3196
    %v3237 = vpack.c.b16 %v3201, %v3197
    %v3238 = vpack.c.b16 %v3202, %v3198
    %v3239 = vpack.c.b16 %v3207, %v3203
    %v3240 = vpack.c.b16 %v3208, %v3204
    %v3241 = vpack.c.b16 %v3209, %v3205
    %v3242 = vpack.c.b16 %v3210, %v3206
    %3275 = vmatprep.subr.bf16.mxu0 %v3240
    %3276 = vmatpush1.bf16.msra.mxu0 %v3239
    %3277 = vmatprep.subr.bf16.mxu0 %v3236
    %3278 = vmatpush1.bf16.msra.mxu0 %v3235
    %3279 = vmatprep.subr.bf16.mxu0 %v3232
    %3280 = vmatpush1.bf16.msra.mxu0 %v3231
    %3281 = vmatprep.subr.bf16.mxu0 %v3228
    %3282 = vmatpush1.bf16.msra.mxu0 %v3227
    %3283 = vmatprep.subr.bf16.mxu0 %v3224
    %3284 = vmatpush1.bf16.msra.mxu0 %v3223
    %3285 = vmatprep.subr.bf16.mxu0 %v3220
    %3286 = vmatpush1.bf16.msra.mxu0 %v3219
    %3287 = vmatprep.subr.bf16.mxu0 %v3216
    %3288 = vmatpush1.bf16.msra.mxu0 %v3215
    %3289 = vmatprep.subr.bf16.mxu0 %v3212
    %3290 = vmatpush1.bf16.msra.mxu0 %v3211
    %3291 = vmatprep.subr.bf16.mxu0 0
    %3292 = vmatpush2.bf16.msra.mxu0 0
    %3293 = vmatprep.subr.bf16.mxu0 0
    %3294 = vmatpush2.bf16.msra.mxu0 0
    %3295 = vmatprep.subr.bf16.mxu0 0
    %3296 = vmatpush2.bf16.msra.mxu0 0
    %3297 = vmatprep.subr.bf16.mxu0 0
    %3298 = vmatpush2.bf16.msra.mxu0 0
    %3299 = vmatprep.subr.bf16.mxu0 0
    %3300 = vmatpush2.bf16.msra.mxu0 0
    %3301 = vmatprep.subr.bf16.mxu0 0
    %3302 = vmatpush2.bf16.msra.mxu0 0
    %3303 = vmatprep.subr.bf16.mxu0 0
    %3304 = vmatpush2.bf16.msra.mxu0 0
    %3305 = vmatprep.subr.bf16.mxu0 0
    %3306 = vmatpush2.bf16.msra.mxu0 0
    %3307 = vmatprep.mubr.bf16.mxu0 0
    %3308 = vmatmul.mubr.bf16.gmra.mxu0 %v3082
    %v3309 = vpop.f32.mrf.mxu0
    %v3310 = vadd.f32 0.0, %v3309
    %v3311 = vpop.f32.mrf.mxu0
    %v3312 = vadd.f32 0.0, %v3311
    %v3313 = vpop.f32.mrf.mxu0
    %v3314 = vpop.f32.mrf.mxu0
    %3315 = vdwg.mxu0
    %3316 = vmatprep.subr.bf16.mxu0 %v3242
    %3317 = vmatpush1.bf16.msra.mxu0 %v3241
    %3318 = vmatprep.subr.bf16.mxu0 %v3238
    %3319 = vmatpush1.bf16.msra.mxu0 %v3237
    %3320 = vmatprep.subr.bf16.mxu0 %v3234
    %3321 = vmatpush1.bf16.msra.mxu0 %v3233
    %3322 = vmatprep.subr.bf16.mxu0 %v3230
    %3323 = vmatpush1.bf16.msra.mxu0 %v3229
    %3324 = vmatprep.subr.bf16.mxu0 %v3226
    %3325 = vmatpush1.bf16.msra.mxu0 %v3225
    %3326 = vmatprep.subr.bf16.mxu0 %v3222
    %3327 = vmatpush1.bf16.msra.mxu0 %v3221
    %3328 = vmatprep.subr.bf16.mxu0 %v3218
    %3329 = vmatpush1.bf16.msra.mxu0 %v3217
    %3330 = vmatprep.subr.bf16.mxu0 %v3214
    %3331 = vmatpush1.bf16.msra.mxu0 %v3213
    %3332 = vmatprep.subr.bf16.mxu0 0
    %3333 = vmatpush2.bf16.msra.mxu0 0
    %3334 = vmatprep.subr.bf16.mxu0 0
    %3335 = vmatpush2.bf16.msra.mxu0 0
    %3336 = vmatprep.subr.bf16.mxu0 0
    %3337 = vmatpush2.bf16.msra.mxu0 0
    %3338 = vmatprep.subr.bf16.mxu0 0
    %3339 = vmatpush2.bf16.msra.mxu0 0
    %3340 = vmatprep.subr.bf16.mxu0 0
    %3341 = vmatpush2.bf16.msra.mxu0 0
    %3342 = vmatprep.subr.bf16.mxu0 0
    %3343 = vmatpush2.bf16.msra.mxu0 0
    %3344 = vmatprep.subr.bf16.mxu0 0
    %3345 = vmatpush2.bf16.msra.mxu0 0
    %3346 = vmatprep.subr.bf16.mxu0 0
    %3347 = vmatpush2.bf16.msra.mxu0 0
    %3348 = vmatprep.mubr.bf16.mxu0 0
    %3349 = vmatmul.mubr.bf16.gmra.mxu0 %v3082
    %v3350 = vpop.f32.mrf.mxu0
    %v3351 = vadd.f32 0.0, %v3350
    %v3352 = vpop.f32.mrf.mxu0
    %v3353 = vadd.f32 0.0, %v3352
    %v3354 = vpop.f32.mrf.mxu0
    %v3355 = vpop.f32.mrf.mxu0
    %3356 = vdwg.mxu0
    %v3357 = vadd.f32 %v3035, %v3310
    %v3358 = vadd.f32 %v3037, %v3312
    %v3359 = vadd.f32 %v3076, %v3351
    %v3360 = vadd.f32 %v3078, %v3353
    %v3361 = vmul.f32 %v3357, 0.5
    %v3362 = vtanh.pop %v3361
    %v3363 = vmul.f32 %v3362, 0.5
    %v3364 = vadd.f32 %v3363, 0.5
    %v3365 = vmul.f32 %v3358, 0.5
    %v3366 = vtanh.pop %v3365
    %v3367 = vmul.f32 %v3366, 0.5
    %v3368 = vadd.f32 %v3367, 0.5
    %v3369 = vtanh.pop %v3359
    %v3370 = vmul.f32 %v3360, 0.5
    %v3371 = vtanh.pop %v3370
    %v3372 = vmul.f32 %v3371, 0.5
    %v3373 = vadd.f32 %v3372, 0.5
    %v3374 = vmul.f32 %v3368, %v2966
    %v3375 = vmul.f32 %v3364, %v3369
    %v3376 = vadd.f32 %v3374, %v3375
    %v3377 = vtanh.pop %v3376
    %v3378 = vmul.f32 %v3373, %v3377
    %s3379 = scalar_lea.vmem [#allocation10], 14
    %3380 = vst [vmem:[%s3379] sm:$0x3] %v3378
    // Predicated region
    $region42: #{tpu_custom_call.1} parent=1 // pred_check
      %p3381 = pneg %p70
    $region43: #{tpu_custom_call.1} parent=1 // pred_check_branch
      %3383 = sbr.rel (%p3381) target = $region45
    $region44: #{tpu_custom_call.1} parent=1 // pred_region
      %3384 = vst [vmem:[#allocation13] sm:$0x3] %v3364
      %3385 = vst [vmem:[#allocation13 + $0x2] sm:$0x3] %v3368
      %3386 = vst [vmem:[#allocation13 + $0x4] sm:$0x3] %v3369
      %3387 = vst [vmem:[#allocation13 + $0x6] sm:$0x3] %v3373
    $region45: #{tpu_custom_call.1} parent=1 // pred_fallthru
      _
    %3388 = vst [vmem:[#allocation2] sm:$0x3] %v3378
    %3389 = vst [vmem:[#allocation3] sm:$0x3] %v3376
    // Predicated region
    $region46: #{tpu_custom_call.1} parent=1 // pred_check
      %p3390 = pneg %p70
    $region47: #{tpu_custom_call.1} parent=1 // pred_check_branch
      %3392 = sbr.rel (%p3390) target = $region49
    $region48: #{tpu_custom_call.1} parent=1 // pred_region
      %3393 = vst [vmem:[#allocation11] sm:$0x3] %v3376
    $region49: #{tpu_custom_call.1} parent=1 // pred_fallthru
      _
    // Predicated region
    $region50: #{tpu_custom_call.1} parent=1 // pred_check
      _
    $region51: #{tpu_custom_call.1} parent=1 // pred_check_branch
      %3395 = sbr.rel (0) target = $region53
    $region52: #{tpu_custom_call.1} parent=1 // pred_region
      %s3397 = ssub.s32 256, 256
      %3398 = vsyncadd [#allocation6], %s3397
      %s3399 = sshll.u32 [#allocation10], 4
      %s3400 = int_to_ptr.vmem [resolvable:$true] %s3399
      %3405 = dma.vmem_to_hbm [thread:$0]  %s3400, 256, %s6, [#allocation6], 32, 32, 2
    $region53: #{tpu_custom_call.1} parent=1 // pred_fallthru
      _
    // Predicated region
    $region54: #{tpu_custom_call.1} parent=1 // pred_check
      _
    $region55: #{tpu_custom_call.1} parent=1 // pred_check_branch
      %3407 = sbr.rel (0) target = $region57
    $region56: #{tpu_custom_call.1} parent=1 // pred_region
      %s3409 = ssub.s32 32, 32
      %3410 = vsyncadd [#allocation12], %s3409
      %s3412 = sshll.u32 [#allocation11], 4
      %s3413 = int_to_ptr.vmem [resolvable:$true] %s3412
      %3415 = dma.vmem_to_hbm [thread:$0]  %s3413, 32, %s7, [#allocation12]
    $region57: #{tpu_custom_call.1} parent=1 // pred_fallthru
      _
    // Predicated region
    $region58: #{tpu_custom_call.1} parent=1 // pred_check
      _
    $region59: #{tpu_custom_call.1} parent=1 // pred_check_branch
      %3417 = sbr.rel (0) target = $region61
    $region60: #{tpu_custom_call.1} parent=1 // pred_region
      %s3419 = ssub.s32 128, 128
      %3420 = vsyncadd [#allocation12], %s3419
      %s3422 = sshll.u32 [#allocation13], 4
      %s3423 = int_to_ptr.vmem [resolvable:$true] %s3422
      %3425 = dma.vmem_to_hbm [thread:$0]  %s3423, 128, %s8, [#allocation12]
    $region61: #{tpu_custom_call.1} parent=1 // pred_fallthru
      _
    // Predicated region
    $region62: #{tpu_custom_call.1} parent=1 // pred_check
      _
    $region63: #{tpu_custom_call.1} parent=1 // pred_check_branch
      %3427 = sbr.rel (0) target = $region65
    $region64: #{tpu_custom_call.1} parent=1 // pred_region
      %3428 = dma.done [#allocation6], 256
    $region65: #{tpu_custom_call.1} parent=1 // pred_fallthru
      _
    // Predicated region
    $region66: #{tpu_custom_call.1} parent=1 // pred_check
      _
    $region67: #{tpu_custom_call.1} parent=1 // pred_check_branch
      %3430 = sbr.rel (0) target = $region69
    $region68: #{tpu_custom_call.1} parent=1 // pred_region
      %3431 = dma.done [#allocation12], 32
    $region69: #{tpu_custom_call.1} parent=1 // pred_fallthru
      _
    // Predicated region
    $region70: #{tpu_custom_call.1} parent=1 // pred_check
      _
    $region71: #{tpu_custom_call.1} parent=1 // pred_check_branch
      %3433 = sbr.rel (0) target = $region73
    $region72: #{tpu_custom_call.1} parent=1 // pred_region
      %3434 = dma.done [#allocation12], 128
    $region73: #{tpu_custom_call.1} parent=1 // pred_fallthru
      _
    %3435 = vsyncpa [#allocation5], 1
    %3436 = vsyncpa [#allocation8], 1
    %3437 = vsyncpa [#allocation6], 1
    %3438 = vsyncpa [#allocation12], 1

</llo_original>
